<compile_context>
chip_gen: v7x
topology: tpu7x:2x2x1
jax: 0.10.0
libtpu: 0.0.40
codegen_flags: <defaults>
</compile_context>

<pallas_src>
import functools

import jax
import jax.numpy as jnp
from jax.experimental import pallas as pl
from jax.experimental.pallas import tpu as pltpu

LANE = 128
SUB = 8
WGT_DTYPE = jnp.bfloat16          # storage dtype for weights / activations
ACC_DTYPE = jnp.float32           # MXU accumulation dtype

# (cout, kernel, stride) per conv layer -- fixed by the nn.Module definition.
ARCH = ((32, 8, 4), (64, 4, 2), (64, 3, 1))


def _round_up(x, m):
    return (x + m - 1) // m * m


def _conv_out(size, k, s):
    return (size - k) // s + 1


# ---------------------------------------------------------------------------
# Pallas kernels
# ---------------------------------------------------------------------------
def _gemm_bias_relu_kernel(a_ref, w_ref, b_ref, o_ref):
    """o = relu(a @ w + b); a/w are bf16 tiles, accumulation in f32."""
    acc = jnp.dot(a_ref[...], w_ref[...], preferred_element_type=ACC_DTYPE)
    acc = jnp.maximum(acc + b_ref[...], 0.0)
    o_ref[...] = acc.astype(o_ref.dtype)


def _heads_kernel(f_ref, wh1_ref, bh1_ref, wh2_ref, bh2_ref, o_ref):
    """Fused [actor1|critic1] -> ReLU -> block-diagonal [actor2|critic2]."""
    h = jnp.dot(f_ref[...], wh1_ref[...], preferred_element_type=ACC_DTYPE)
    h = jnp.maximum(h + bh1_ref[...], 0.0).astype(wh2_ref.dtype)
    o = jnp.dot(h, wh2_ref[...], preferred_element_type=ACC_DTYPE) + bh2_ref[...]
    o_ref[...] = o.astype(o_ref.dtype)


def _fused_tail_kernel(x_ref, w2_ref, b2_ref, w3_ref, b3_ref,
                       wh1_ref, bh1_ref, wh2_ref, bh2_ref, o_ref,
                       *, c1, k2, s2, c2, h2, w2, c3):
    """conv2 (+ReLU) + conv3 (+ReLU) + both heads for one tile of images.

    x_ref holds the conv1 activations of `tm` images as (tm, h1, w1*c1);
    conv2 patches are read with static ref/value slices (in-kernel im2col), so
    only the conv1 activations and the final logits/value round-trip HBM.
    Valid whenever conv3's output is 1x1 (conv2 output == conv3 window).
    """
    tm = x_ref.shape[0]
    kc = k2 * c1                                     # lanes of one conv2 kernel row
    n_rows = s2 * (h2 - 1) + k2                      # input rows conv2 reads
    rows = [x_ref[:, r, :] for r in range(n_rows)]   # each (tm, w1*c1), bf16

    a3 = jnp.zeros((tm, c3), ACC_DTYPE)              # conv3 accumulator
    for oy in range(h2):
        for ox in range(w2):
            lo = s2 * ox * c1
            acc = jnp.zeros((tm, c2), ACC_DTYPE)
            for ky in range(k2):                     # conv2 patch GEMM, row by row
                a = rows[s2 * oy + ky][:, lo:lo + kc]              # (tm, k2*c1)
                acc = acc + jnp.dot(a, w2_ref[ky * kc:(ky + 1) * kc, :],
                                    preferred_element_type=ACC_DTYPE)
            hpos = jnp.maximum(acc + b2_ref[...], 0.0).astype(w3_ref.dtype)
            p = oy * w2 + ox                         # conv3 rows are (oy, ox, c) order
            a3 = a3 + jnp.dot(hpos, w3_ref[p * c2:(p + 1) * c2, :],
                              preferred_element_type=ACC_DTYPE)
    a3 = jnp.maximum(a3 + b3_ref[...], 0.0).astype(wh1_ref.dtype)

    h = jnp.dot(a3, wh1_ref[...], preferred_element_type=ACC_DTYPE)
    h = jnp.maximum(h + bh1_ref[...], 0.0).astype(wh2_ref.dtype)
    o = jnp.dot(h, wh2_ref[...], preferred_element_type=ACC_DTYPE) + bh2_ref[...]
    o_ref[...] = o.astype(o_ref.dtype)


# ---------------------------------------------------------------------------
# Row-tiled launcher: the first operand is tiled over rows, all other operands
# (weights / biases) are full blocks with constant index maps -> VMEM-resident.
# ---------------------------------------------------------------------------
def _pick_tm(m, cap):
    """Row-tile size: multiple of 8, capped, >=2 grid steps when M permits."""
    if m <= SUB:
        return m                                    # one block == full dim (legal)
    half = _round_up((m + 1) // 2, SUB)
    return max(SUB, min(cap, half))


def _run_row_tiled(kernel_fn, a, consts, n_out, out_dtype, tm_cap,
                   vmem_limit=None):
    m = a.shape[0]
    tm = _pick_tm(m, tm_cap)
    lead_zeros = (0,) * (a.ndim - 1)
    in_specs = [pl.BlockSpec((tm,) + a.shape[1:], lambda i: (i,) + lead_zeros)]
    for c in consts:
        assert c.ndim == 2
        in_specs.append(pl.BlockSpec(c.shape, lambda i: (0, 0)))

    params = dict(dimension_semantics=("parallel",))
    if vmem_limit is not None:
        params["vmem_limit_bytes"] = vmem_limit

    return pl.pallas_call(
        kernel_fn,
        out_shape=jax.ShapeDtypeStruct((m, n_out), out_dtype),
        grid=(pl.cdiv(m, tm),),
        in_specs=in_specs,
        out_specs=pl.BlockSpec((tm, n_out), lambda i: (i, 0)),
        compiler_params=pltpu.CompilerParams(**params),
    )(a, *consts)


# ---------------------------------------------------------------------------
# im2col (XLA glue; column order matches the packed weight rows)
# ---------------------------------------------------------------------------
def _im2col_nchw(x, kh, kw, stride):
    """Patch matrix from NCHW input; columns ordered (c, ky, kx)."""
    n, c, h, w = x.shape
    ho, wo = _conv_out(h, kh, stride), _conv_out(w, kw, stride)
    r = (jnp.arange(ho) * stride)[:, None] + jnp.arange(kh)[None, :]
    q = (jnp.arange(wo) * stride)[:, None] + jnp.arange(kw)[None, :]
    p = x[:, :, r]                                  # (n, c, ho, kh, w)
    p = p[:, :, :, :, q]                            # (n, c, ho, kh, wo, kw)
    p = jnp.transpose(p, (0, 2, 4, 1, 3, 5))        # (n, ho, wo, c, ky, kx)
    return p.reshape(n * ho * wo, c * kh * kw)


def _im2col_nhwc(x, kh, kw, stride):
    """Patch matrix from NHWC input; columns ordered (ky, kx, c)."""
    n, h, w, c = x.shape
    ho, wo = _conv_out(h, kh, stride), _conv_out(w, kw, stride)
    r = (jnp.arange(ho) * stride)[:, None] + jnp.arange(kh)[None, :]
    q = (jnp.arange(wo) * stride)[:, None] + jnp.arange(kw)[None, :]
    p = x[:, r]                                     # (n, ho, kh, w, c)
    p = p[:, :, :, q]                               # (n, ho, kh, wo, kw, c)
    p = jnp.transpose(p, (0, 1, 3, 2, 4, 5))        # (n, ho, wo, ky, kx, c)
    return p.reshape(n * ho * wo, kh * kw * c)


# ---------------------------------------------------------------------------
# One-time parameter packing (off the hot path)
# ---------------------------------------------------------------------------
def prepare_params(params, obs_shape):
    c_in, h_in, w_in = obs_shape
    (c1o, k1, s1), (c2o, k2, s2), (c3o, k3, s3) = ARCH
    h1, w1 = _conv_out(h_in, k1, s1), _conv_out(w_in, k1, s1)
    h2, w2 = _conv_out(h1, k2, s2), _conv_out(w1, k2, s2)
    h3, w3 = _conv_out(h2, k3, s3), _conv_out(w2, k3, s3)
    p3 = h3 * w3

    def conv_mat(w_oihw, bias, col_order):
        # "chw": rows in (cin, ky, kx) order (conv1, NCHW patches)
        # "hwc": rows in (ky, kx, cin) order (conv2/3, NHWC patches)
        cout = w_oihw.shape[0]
        perm = (1, 2, 3, 0) if col_order == "chw" else (2, 3, 1, 0)
        w = jnp.transpose(w_oihw.astype(jnp.float32), perm).reshape(-1, cout)
        return w.astype(WGT_DTYPE), bias.astype(jnp.float32).reshape(1, cout)

    w1m, b1m = conv_mat(params["conv1_w"], params["conv1_b"], "chw")
    w2m, b2m = conv_mat(params["conv2_w"], params["conv2_b"], "hwc")
    w3m, b3m = conv_mat(params["conv3_w"], params["conv3_b"], "hwc")

    hidden = params["actor1_w"].shape[1]

    def head1_rows(w):
        # PyTorch flattens conv3's output NCHW -> (c, h, w); our feats are
        # (h, w, c), so the permutation is baked into the weight rows here.
        w = w.astype(jnp.float32).reshape(c3o, h3, w3, hidden)
        return jnp.transpose(w, (1, 2, 0, 3)).reshape(p3 * c3o, hidden)

    wh1 = jnp.concatenate([head1_rows(params["actor1_w"]),
                           head1_rows(params["critic1_w"])], axis=1)
    bh1 = jnp.concatenate([params["actor1_b"], params["critic1_b"]]
                          ).astype(jnp.float32).reshape(1, 2 * hidden)

    act_dim = params["actor2_w"].shape[1]
    n_out = _round_up(act_dim + 1, LANE)
    wh2 = jnp.zeros((2 * hidden, n_out), jnp.float32)
    wh2 = wh2.at[:hidden, :act_dim].set(params["actor2_w"].astype(jnp.float32))
    wh2 = wh2.at[hidden:, act_dim].set(params["critic2_w"].astype(jnp.float32)[:, 0])
    bh2 = jnp.zeros((1, n_out), jnp.float32)
    bh2 = bh2.at[0, :act_dim].set(params["actor2_b"].astype(jnp.float32))
    bh2 = bh2.at[0, act_dim].set(params["critic2_b"].astype(jnp.float32)[0])

    return {"w1m": w1m, "b1m": b1m, "w2m": w2m, "b2m": b2m,
            "w3m": w3m, "b3m": b3m,
            "wh1": wh1.astype(WGT_DTYPE), "bh1": bh1,
            "wh2": wh2.astype(WGT_DTYPE), "bh2": bh2}


# ---------------------------------------------------------------------------
# Forward pass (jitted; action_dim static)
# ---------------------------------------------------------------------------
@functools.partial(jax.jit, static_argnums=(2,))
def actor_critic_cnn_forward(x_nchw, packed, action_dim):
    (c1o, k1, s1), (c2o, k2, s2), (c3o, k3, s3) = ARCH
    b, _, h_in, w_in = x_nchw.shape
    h1, w1 = _conv_out(h_in, k1, s1), _conv_out(w_in, k1, s1)
    h2, w2 = _conv_out(h1, k2, s2), _conv_out(w1, k2, s2)
    h3, w3 = _conv_out(h2, k3, s3), _conv_out(w2, k3, s3)

    x = x_nchw.astype(WGT_DTYPE)

    # ---- conv1: XLA im2col straight from NCHW + one GEMM+bias+ReLU kernel
    patches = _im2col_nchw(x, k1, k1, s1)            # (b*h1*w1, c_in*k1*k1) bf16
    y1 = _run_row_tiled(_gemm_bias_relu_kernel, patches,
                        [packed["w1m"], packed["b1m"]],
                        c1o, WGT_DTYPE, tm_cap=1024)

    if h3 == 1 and w3 == 1:
        # conv2 + conv3 + both heads in ONE kernel; conv2 im2col done in-kernel.
        assert h2 == k3 and w2 == k3 and s3 == 1     # conv2 output == conv3 window
        xa = y1.reshape(b, h1, w1 * c1o)
        kern = functools.partial(_fused_tail_kernel, c1=c1o, k2=k2, s2=s2,
                                 c2=c2o, h2=h2, w2=w2, c3=c3o)
        out = _run_row_tiled(kern, xa,
                             [packed["w2m"], packed["b2m"],
                              packed["w3m"], packed["b3m"],
                              packed["wh1"], packed["bh1"],
                              packed["wh2"], packed["bh2"]],
                             packed["wh2"].shape[1], jnp.float32,
                             tm_cap=256, vmem_limit=64 * 1024 * 1024)
    else:
        # General fallback: conv2/conv3 via XLA im2col, both heads in one kernel.
        p2 = _im2col_nhwc(y1.reshape(b, h1, w1, c1o), k2, k2, s2)
        y2 = _run_row_tiled(_gemm_bias_relu_kernel, p2,
                            [packed["w2m"], packed["b2m"]],
                            c2o, WGT_DTYPE, tm_cap=512)
        p3m = _im2col_nhwc(y2.reshape(b, h2, w2, c2o), k3, k3, s3)
        y3 = _run_row_tiled(_gemm_bias_relu_kernel, p3m,
                            [packed["w3m"], packed["b3m"]],
                            c3o, WGT_DTYPE, tm_cap=512)
        feats = y3.reshape(b, h3 * w3 * c3o)
        out = _run_row_tiled(_heads_kernel, feats,
                             [packed["wh1"], packed["bh1"],
                              packed["wh2"], packed["bh2"]],
                             packed["wh2"].shape[1], jnp.float32,
                             tm_cap=256, vmem_limit=64 * 1024 * 1024)

    logits = out[:, :action_dim]
    value = out[:, action_dim:action_dim + 1]
    return logits, value


# ---------------------------------------------------------------------------
# Pure-JAX f32 reference (uses raw PyTorch-layout params)
# ---------------------------------------------------------------------------
def reference_forward(x_nchw, params):
    def conv(x, w, b, s):
        y = jax.lax.conv_general_dilated(
            x, w, (s, s), "VALID", dimension_numbers=("NCHW", "OIHW", "NCHW"))
        return jnp.maximum(y + b[None, :, None, None], 0.0)

    x = conv(x_nchw, params["conv1_w"], params["conv1_b"], 4)
    x = conv(x, params["conv2_w"], params["conv2_b"], 2)
    x = conv(x, params["conv3_w"], params["conv3_b"], 1)
    feats = x.reshape(x.shape[0], -1)
    h_a = jnp.maximum(feats @ params["actor1_w"] + params["actor1_b"], 0.0)
    logits = h_a @ params["actor2_w"] + params["actor2_b"]
    h_c = jnp.maximum(feats @ params["critic1_w"] + params["critic1_b"], 0.0)
    value = h_c @ params["critic2_w"] + params["critic2_b"]
    return logits, value


# ---------------------------------------------------------------------------
# Deterministic parameter construction (shapes from ActorCriticCNN.__init__)
# ---------------------------------------------------------------------------
def make_params(obs_channels, feat_size, action_dim, key):
    keys = jax.random.split(key, 14)

    def w(k, shape, scale=0.05):
        return (scale * jax.random.normal(k, shape)).astype(jnp.float32)

    return {
        "conv1_w": w(keys[0], (32, obs_channels, 8, 8)),
        "conv1_b": w(keys[1], (32,)),
        "conv2_w": w(keys[2], (64, 32, 4, 4)),
        "conv2_b": w(keys[3], (64,)),
        "conv3_w": w(keys[4], (64, 64, 3, 3)),
        "conv3_b": w(keys[5], (64,)),
        "actor1_w": w(keys[6], (feat_size, 512)),
        "actor1_b": w(keys[7], (512,)),
        "actor2_w": w(keys[8], (512, action_dim)),
        "actor2_b": w(keys[9], (action_dim,)),
        "critic1_w": w(keys[10], (feat_size, 512)),
        "critic1_b": w(keys[11], (512,)),
        "critic2_w": w(keys[12], (512, 1)),
        "critic2_b": w(keys[13], (1,)),
    }


if __name__ == "__main__":
    # Smallest spatial size the conv stack supports: 36 -> 8 -> 3 -> 1, feat = 64.
    batch, obs_shape, action_dim = 2, (4, 36, 36), 6
    feat_size = 64 * 1 * 1

    key = jax.random.PRNGKey(0)
    k_x, k_p = jax.random.split(key)
    x = jax.random.normal(k_x, (batch, *obs_shape), dtype=jnp.float32)
    params = make_params(obs_shape[0], feat_size, action_dim, k_p)

    packed = prepare_params(params, obs_shape)   # one-time packing, off the hot path

    logits, value = actor_critic_cnn_forward(x, packed, action_dim)
    logits = jax.block_until_ready(logits)
    value = jax.block_until_ready(value)

    ref_logits, ref_value = reference_forward(x, params)
    assert logits.shape == (batch, action_dim) and value.shape == (batch, 1)
    # bf16 weights/activations with f32 accumulation -> loose tolerance vs f32 ref.
    assert jnp.allclose(logits, ref_logits, atol=5e-2, rtol=5e-2), "logits mismatch"
    assert jnp.allclose(value, ref_value, atol=5e-2, rtol=5e-2), "value mismatch"

    print("KERNEL_OK")
</pallas_src>

<mosaic_0001>
module attributes {stable_mosaic.version = 11 : i64} {
  func.func @_gemm_bias_relu_kernel(%arg0: i32, %arg1: memref<64x256xbf16, #tpu.memory_space<vmem>>, %arg2: memref<256x32xbf16, #tpu.memory_space<vmem>>, %arg3: memref<1x32xf32, #tpu.memory_space<vmem>>, %arg4: memref<64x32xbf16, #tpu.memory_space<vmem>>) attributes {dimension_semantics = [#tpu.dimension_semantics<parallel>], iteration_bounds = array<i64: 2>, scalar_prefetch = 0 : i64, scratch_operands = 0 : i64, tpu.core_type = #tpu.core_type<tc>, window_params = [{transform_indices = @transform_0, window_bounds = array<i64: 64, 256>}, {pipeline_mode = #tpu.pipeline_mode<synchronous>, transform_indices = @transform_1, window_bounds = array<i64: 256, 32>}, {pipeline_mode = #tpu.pipeline_mode<synchronous>, transform_indices = @transform_2, window_bounds = array<i64: 1, 32>}, {transform_indices = @transform_3, window_bounds = array<i64: 64, 32>}]} {
    %c0 = arith.constant 0 : index
    %c0_0 = arith.constant 0 : index
    %0 = vector.load %arg1[%c0, %c0_0] : memref<64x256xbf16, #tpu.memory_space<vmem>>, vector<64x256xbf16>
    %c0_1 = arith.constant 0 : index
    %c0_2 = arith.constant 0 : index
    %1 = vector.load %arg2[%c0_1, %c0_2] : memref<256x32xbf16, #tpu.memory_space<vmem>>, vector<256x32xbf16>
    %cst = arith.constant dense<0.000000e+00> : vector<64x32xf32>
    %2 = tpu.matmul %0, %1, %cst {dimension_numbers = #tpu.dot_dimension_numbers<[1], [0], [0], [1], [0, 0, 1, 1], [], []>} : vector<64x256xbf16>, vector<256x32xbf16>, vector<64x32xf32> -> vector<64x32xf32>
    %c0_3 = arith.constant 0 : index
    %c0_4 = arith.constant 0 : index
    %3 = vector.load %arg3[%c0_3, %c0_4] : memref<1x32xf32, #tpu.memory_space<vmem>>, vector<1x32xf32>
    %4 = vector.broadcast %3 : vector<1x32xf32> to vector<64x32xf32>
    %5 = arith.addf %2, %4 : vector<64x32xf32>
    %cst_5 = arith.constant 0.000000e+00 : f32
    %6 = vector.broadcast %cst_5 : f32 to vector<64x32xf32>
    %7 = arith.maximumf %5, %6 : vector<64x32xf32>
    %8 = arith.truncf %7 : vector<64x32xf32> to vector<64x32xbf16>
    %c0_6 = arith.constant 0 : index
    %c0_7 = arith.constant 0 : index
    %9 = vector.load %arg4[%c0_6, %c0_7] : memref<64x32xbf16, #tpu.memory_space<vmem>>, vector<64x32xbf16>
    tpu.vector_store %arg4[%c0_6, %c0_7], %8 {strides = array<i32>} : memref<64x32xbf16, #tpu.memory_space<vmem>>, vector<64x32xbf16>,
    return
  }
  func.func @transform_0(%arg0: i32) -> (i32, i32) {
    %c0_i32 = arith.constant 0 : i32
    %c0_i32_0 = arith.constant 0 : i32
    return %arg0, %c0_i32 : i32, i32
  }
  func.func @transform_1(%arg0: i32) -> (i32, i32) {
    %c0_i32 = arith.constant 0 : i32
    %c0_i32_0 = arith.constant 0 : i32
    %c0_i32_1 = arith.constant 0 : i32
    return %c0_i32, %c0_i32_0 : i32, i32
  }
  func.func @transform_2(%arg0: i32) -> (i32, i32) {
    %c0_i32 = arith.constant 0 : i32
    %c0_i32_0 = arith.constant 0 : i32
    %c0_i32_1 = arith.constant 0 : i32
    return %c0_i32, %c0_i32_0 : i32, i32
  }
  func.func @transform_3(%arg0: i32) -> (i32, i32) {
    %c0_i32 = arith.constant 0 : i32
    %c0_i32_0 = arith.constant 0 : i32
    return %arg0, %c0_i32 : i32, i32
  }
}

module attributes {stable_mosaic.version = 11 : i64} {
  func.func @_fused_tail_kernel(%arg0: i32, %arg1: memref<2x8x256xbf16, #tpu.memory_space<vmem>>, %arg2: memref<512x64xbf16, #tpu.memory_space<vmem>>, %arg3: memref<1x64xf32, #tpu.memory_space<vmem>>, %arg4: memref<576x64xbf16, #tpu.memory_space<vmem>>, %arg5: memref<1x64xf32, #tpu.memory_space<vmem>>, %arg6: memref<64x1024xbf16, #tpu.memory_space<vmem>>, %arg7: memref<1x1024xf32, #tpu.memory_space<vmem>>, %arg8: memref<1024x128xbf16, #tpu.memory_space<vmem>>, %arg9: memref<1x128xf32, #tpu.memory_space<vmem>>, %arg10: memref<2x128xf32, #tpu.memory_space<vmem>>) attributes {dimension_semantics = [#tpu.dimension_semantics<parallel>], iteration_bounds = array<i64: 1>, scalar_prefetch = 0 : i64, scratch_operands = 0 : i64, tpu.core_type = #tpu.core_type<tc>, window_params = [{transform_indices = @transform_0, window_bounds = array<i64: 2, 8, 256>}, {pipeline_mode = #tpu.pipeline_mode<synchronous>, transform_indices = @transform_1, window_bounds = array<i64: 512, 64>}, {pipeline_mode = #tpu.pipeline_mode<synchronous>, transform_indices = @transform_2, window_bounds = array<i64: 1, 64>}, {pipeline_mode = #tpu.pipeline_mode<synchronous>, transform_indices = @transform_3, window_bounds = array<i64: 576, 64>}, {pipeline_mode = #tpu.pipeline_mode<synchronous>, transform_indices = @transform_4, window_bounds = array<i64: 1, 64>}, {pipeline_mode = #tpu.pipeline_mode<synchronous>, transform_indices = @transform_5, window_bounds = array<i64: 64, 1024>}, {pipeline_mode = #tpu.pipeline_mode<synchronous>, transform_indices = @transform_6, window_bounds = array<i64: 1, 1024>}, {pipeline_mode = #tpu.pipeline_mode<synchronous>, transform_indices = @transform_7, window_bounds = array<i64: 1024, 128>}, {pipeline_mode = #tpu.pipeline_mode<synchronous>, transform_indices = @transform_8, window_bounds = array<i64: 1, 128>}, {transform_indices = @transform_9, window_bounds = array<i64: 2, 128>}]} {
    %c0 = arith.constant 0 : index
    %c0_0 = arith.constant 0 : index
    %c0_1 = arith.constant 0 : index
    %0 = vector.load %arg1[%c0, %c0_0, %c0_1] : memref<2x8x256xbf16, #tpu.memory_space<vmem>>, vector<2x1x256xbf16>
    %1 = vector.shape_cast %0 : vector<2x1x256xbf16> to vector<2x256xbf16>
    %c0_2 = arith.constant 0 : index
    %c1 = arith.constant 1 : index
    %c0_3 = arith.constant 0 : index
    %2 = vector.load %arg1[%c0_2, %c1, %c0_3] : memref<2x8x256xbf16, #tpu.memory_space<vmem>>, vector<2x1x256xbf16>
    %3 = vector.shape_cast %2 : vector<2x1x256xbf16> to vector<2x256xbf16>
    %c0_4 = arith.constant 0 : index
    %c2 = arith.constant 2 : index
    %c0_5 = arith.constant 0 : index
    %4 = vector.load %arg1[%c0_4, %c2, %c0_5] : memref<2x8x256xbf16, #tpu.memory_space<vmem>>, vector<2x1x256xbf16>
    %5 = vector.shape_cast %4 : vector<2x1x256xbf16> to vector<2x256xbf16>
    %c0_6 = arith.constant 0 : index
    %c3 = arith.constant 3 : index
    %c0_7 = arith.constant 0 : index
    %6 = vector.load %arg1[%c0_6, %c3, %c0_7] : memref<2x8x256xbf16, #tpu.memory_space<vmem>>, vector<2x1x256xbf16>
    %7 = vector.shape_cast %6 : vector<2x1x256xbf16> to vector<2x256xbf16>
    %c0_8 = arith.constant 0 : index
    %c4 = arith.constant 4 : index
    %c0_9 = arith.constant 0 : index
    %8 = vector.load %arg1[%c0_8, %c4, %c0_9] : memref<2x8x256xbf16, #tpu.memory_space<vmem>>, vector<2x1x256xbf16>
    %9 = vector.shape_cast %8 : vector<2x1x256xbf16> to vector<2x256xbf16>
    %c0_10 = arith.constant 0 : index
    %c5 = arith.constant 5 : index
    %c0_11 = arith.constant 0 : index
    %10 = vector.load %arg1[%c0_10, %c5, %c0_11] : memref<2x8x256xbf16, #tpu.memory_space<vmem>>, vector<2x1x256xbf16>
    %11 = vector.shape_cast %10 : vector<2x1x256xbf16> to vector<2x256xbf16>
    %c0_12 = arith.constant 0 : index
    %c6 = arith.constant 6 : index
    %c0_13 = arith.constant 0 : index
    %12 = vector.load %arg1[%c0_12, %c6, %c0_13] : memref<2x8x256xbf16, #tpu.memory_space<vmem>>, vector<2x1x256xbf16>
    %13 = vector.shape_cast %12 : vector<2x1x256xbf16> to vector<2x256xbf16>
    %c0_14 = arith.constant 0 : index
    %c7 = arith.constant 7 : index
    %c0_15 = arith.constant 0 : index
    %14 = vector.load %arg1[%c0_14, %c7, %c0_15] : memref<2x8x256xbf16, #tpu.memory_space<vmem>>, vector<2x1x256xbf16>
    %15 = vector.shape_cast %14 : vector<2x1x256xbf16> to vector<2x256xbf16>
    %cst = arith.constant 0.000000e+00 : f32
    %16 = vector.broadcast %cst : f32 to vector<2x64xf32>
    %cst_16 = arith.constant 0.000000e+00 : f32
    %17 = vector.broadcast %cst_16 : f32 to vector<2x64xf32>
    %18 = vector.extract_strided_slice %1 {offsets = [0, 0], sizes = [2, 128], strides = [1, 1]} : vector<2x256xbf16> to vector<2x128xbf16>
    %c0_17 = arith.constant 0 : index
    %c0_18 = arith.constant 0 : index
    %19 = vector.load %arg2[%c0_17, %c0_18] : memref<512x64xbf16, #tpu.memory_space<vmem>>, vector<128x64xbf16>
    %cst_19 = arith.constant dense<0.000000e+00> : vector<2x64xf32>
    %20 = tpu.matmul %18, %19, %cst_19 {dimension_numbers = #tpu.dot_dimension_numbers<[1], [0], [0], [1], [0, 0, 1, 1], [], []>} : vector<2x128xbf16>, vector<128x64xbf16>, vector<2x64xf32> -> vector<2x64xf32>
    %21 = arith.addf %17, %20 : vector<2x64xf32>
    %22 = vector.extract_strided_slice %3 {offsets = [0, 0], sizes = [2, 128], strides = [1, 1]} : vector<2x256xbf16> to vector<2x128xbf16>
    %c128 = arith.constant 128 : index
    %c0_20 = arith.constant 0 : index
    %23 = vector.load %arg2[%c128, %c0_20] : memref<512x64xbf16, #tpu.memory_space<vmem>>, vector<128x64xbf16>
    %cst_21 = arith.constant dense<0.000000e+00> : vector<2x64xf32>
    %24 = tpu.matmul %22, %23, %cst_21 {dimension_numbers = #tpu.dot_dimension_numbers<[1], [0], [0], [1], [0, 0, 1, 1], [], []>} : vector<2x128xbf16>, vector<128x64xbf16>, vector<2x64xf32> -> vector<2x64xf32>
    %25 = arith.addf %21, %24 : vector<2x64xf32>
    %26 = vector.extract_strided_slice %5 {offsets = [0, 0], sizes = [2, 128], strides = [1, 1]} : vector<2x256xbf16> to vector<2x128xbf16>
    %c256 = arith.constant 256 : index
    %c0_22 = arith.constant 0 : index
    %27 = vector.load %arg2[%c256, %c0_22] : memref<512x64xbf16, #tpu.memory_space<vmem>>, vector<128x64xbf16>
    %cst_23 = arith.constant dense<0.000000e+00> : vector<2x64xf32>
    %28 = tpu.matmul %26, %27, %cst_23 {dimension_numbers = #tpu.dot_dimension_numbers<[1], [0], [0], [1], [0, 0, 1, 1], [], []>} : vector<2x128xbf16>, vector<128x64xbf16>, vector<2x64xf32> -> vector<2x64xf32>
    %29 = arith.addf %25, %28 : vector<2x64xf32>
    %30 = vector.extract_strided_slice %7 {offsets = [0, 0], sizes = [2, 128], strides = [1, 1]} : vector<2x256xbf16> to vector<2x128xbf16>
    %c384 = arith.constant 384 : index
    %c0_24 = arith.constant 0 : index
    %31 = vector.load %arg2[%c384, %c0_24] : memref<512x64xbf16, #tpu.memory_space<vmem>>, vector<128x64xbf16>
    %cst_25 = arith.constant dense<0.000000e+00> : vector<2x64xf32>
    %32 = tpu.matmul %30, %31, %cst_25 {dimension_numbers = #tpu.dot_dimension_numbers<[1], [0], [0], [1], [0, 0, 1, 1], [], []>} : vector<2x128xbf16>, vector<128x64xbf16>, vector<2x64xf32> -> vector<2x64xf32>
    %33 = arith.addf %29, %32 : vector<2x64xf32>
    %c0_26 = arith.constant 0 : index
    %c0_27 = arith.constant 0 : index
    %34 = vector.load %arg3[%c0_26, %c0_27] : memref<1x64xf32, #tpu.memory_space<vmem>>, vector<1x64xf32>
    %35 = vector.broadcast %34 : vector<1x64xf32> to vector<2x64xf32>
    %36 = arith.addf %33, %35 : vector<2x64xf32>
    %cst_28 = arith.constant 0.000000e+00 : f32
    %37 = vector.broadcast %cst_28 : f32 to vector<2x64xf32>
    %38 = arith.maximumf %36, %37 : vector<2x64xf32>
    %39 = arith.truncf %38 : vector<2x64xf32> to vector<2x64xbf16>
    %c0_29 = arith.constant 0 : index
    %c0_30 = arith.constant 0 : index
    %40 = vector.load %arg4[%c0_29, %c0_30] : memref<576x64xbf16, #tpu.memory_space<vmem>>, vector<64x64xbf16>
    %cst_31 = arith.constant dense<0.000000e+00> : vector<2x64xf32>
    %41 = tpu.matmul %39, %40, %cst_31 {dimension_numbers = #tpu.dot_dimension_numbers<[1], [0], [0], [1], [0, 0, 1, 1], [], []>} : vector<2x64xbf16>, vector<64x64xbf16>, vector<2x64xf32> -> vector<2x64xf32>
    %42 = arith.addf %16, %41 : vector<2x64xf32>
    %cst_32 = arith.constant 0.000000e+00 : f32
    %43 = vector.broadcast %cst_32 : f32 to vector<2x64xf32>
    %44 = vector.extract_strided_slice %1 {offsets = [0, 64], sizes = [2, 128], strides = [1, 1]} : vector<2x256xbf16> to vector<2x128xbf16>
    %c0_33 = arith.constant 0 : index
    %c0_34 = arith.constant 0 : index
    %45 = vector.load %arg2[%c0_33, %c0_34] : memref<512x64xbf16, #tpu.memory_space<vmem>>, vector<128x64xbf16>
    %cst_35 = arith.constant dense<0.000000e+00> : vector<2x64xf32>
    %46 = tpu.matmul %44, %45, %cst_35 {dimension_numbers = #tpu.dot_dimension_numbers<[1], [0], [0], [1], [0, 0, 1, 1], [], []>} : vector<2x128xbf16>, vector<128x64xbf16>, vector<2x64xf32> -> vector<2x64xf32>
    %47 = arith.addf %43, %46 : vector<2x64xf32>
    %48 = vector.extract_strided_slice %3 {offsets = [0, 64], sizes = [2, 128], strides = [1, 1]} : vector<2x256xbf16> to vector<2x128xbf16>
    %c128_36 = arith.constant 128 : index
    %c0_37 = arith.constant 0 : index
    %49 = vector.load %arg2[%c128_36, %c0_37] : memref<512x64xbf16, #tpu.memory_space<vmem>>, vector<128x64xbf16>
    %cst_38 = arith.constant dense<0.000000e+00> : vector<2x64xf32>
    %50 = tpu.matmul %48, %49, %cst_38 {dimension_numbers = #tpu.dot_dimension_numbers<[1], [0], [0], [1], [0, 0, 1, 1], [], []>} : vector<2x128xbf16>, vector<128x64xbf16>, vector<2x64xf32> -> vector<2x64xf32>
    %51 = arith.addf %47, %50 : vector<2x64xf32>
    %52 = vector.extract_strided_slice %5 {offsets = [0, 64], sizes = [2, 128], strides = [1, 1]} : vector<2x256xbf16> to vector<2x128xbf16>
    %c256_39 = arith.constant 256 : index
    %c0_40 = arith.constant 0 : index
    %53 = vector.load %arg2[%c256_39, %c0_40] : memref<512x64xbf16, #tpu.memory_space<vmem>>, vector<128x64xbf16>
    %cst_41 = arith.constant dense<0.000000e+00> : vector<2x64xf32>
    %54 = tpu.matmul %52, %53, %cst_41 {dimension_numbers = #tpu.dot_dimension_numbers<[1], [0], [0], [1], [0, 0, 1, 1], [], []>} : vector<2x128xbf16>, vector<128x64xbf16>, vector<2x64xf32> -> vector<2x64xf32>
    %55 = arith.addf %51, %54 : vector<2x64xf32>
    %56 = vector.extract_strided_slice %7 {offsets = [0, 64], sizes = [2, 128], strides = [1, 1]} : vector<2x256xbf16> to vector<2x128xbf16>
    %c384_42 = arith.constant 384 : index
    %c0_43 = arith.constant 0 : index
    %57 = vector.load %arg2[%c384_42, %c0_43] : memref<512x64xbf16, #tpu.memory_space<vmem>>, vector<128x64xbf16>
    %cst_44 = arith.constant dense<0.000000e+00> : vector<2x64xf32>
    %58 = tpu.matmul %56, %57, %cst_44 {dimension_numbers = #tpu.dot_dimension_numbers<[1], [0], [0], [1], [0, 0, 1, 1], [], []>} : vector<2x128xbf16>, vector<128x64xbf16>, vector<2x64xf32> -> vector<2x64xf32>
    %59 = arith.addf %55, %58 : vector<2x64xf32>
    %c0_45 = arith.constant 0 : index
    %c0_46 = arith.constant 0 : index
    %60 = vector.load %arg3[%c0_45, %c0_46] : memref<1x64xf32, #tpu.memory_space<vmem>>, vector<1x64xf32>
    %61 = vector.broadcast %60 : vector<1x64xf32> to vector<2x64xf32>
    %62 = arith.addf %59, %61 : vector<2x64xf32>
    %cst_47 = arith.constant 0.000000e+00 : f32
    %63 = vector.broadcast %cst_47 : f32 to vector<2x64xf32>
    %64 = arith.maximumf %62, %63 : vector<2x64xf32>
    %65 = arith.truncf %64 : vector<2x64xf32> to vector<2x64xbf16>
    %c64 = arith.constant 64 : index
    %c0_48 = arith.constant 0 : index
    %66 = vector.load %arg4[%c64, %c0_48] : memref<576x64xbf16, #tpu.memory_space<vmem>>, vector<64x64xbf16>
    %cst_49 = arith.constant dense<0.000000e+00> : vector<2x64xf32>
    %67 = tpu.matmul %65, %66, %cst_49 {dimension_numbers = #tpu.dot_dimension_numbers<[1], [0], [0], [1], [0, 0, 1, 1], [], []>} : vector<2x64xbf16>, vector<64x64xbf16>, vector<2x64xf32> -> vector<2x64xf32>
    %68 = arith.addf %42, %67 : vector<2x64xf32>
    %cst_50 = arith.constant 0.000000e+00 : f32
    %69 = vector.broadcast %cst_50 : f32 to vector<2x64xf32>
    %70 = vector.extract_strided_slice %1 {offsets = [0, 128], sizes = [2, 128], strides = [1, 1]} : vector<2x256xbf16> to vector<2x128xbf16>
    %c0_51 = arith.constant 0 : index
    %c0_52 = arith.constant 0 : index
    %71 = vector.load %arg2[%c0_51, %c0_52] : memref<512x64xbf16, #tpu.memory_space<vmem>>, vector<128x64xbf16>
    %cst_53 = arith.constant dense<0.000000e+00> : vector<2x64xf32>
    %72 = tpu.matmul %70, %71, %cst_53 {dimension_numbers = #tpu.dot_dimension_numbers<[1], [0], [0], [1], [0, 0, 1, 1], [], []>} : vector<2x128xbf16>, vector<128x64xbf16>, vector<2x64xf32> -> vector<2x64xf32>
    %73 = arith.addf %69, %72 : vector<2x64xf32>
    %74 = vector.extract_strided_slice %3 {offsets = [0, 128], sizes = [2, 128], strides = [1, 1]} : vector<2x256xbf16> to vector<2x128xbf16>
    %c128_54 = arith.constant 128 : index
    %c0_55 = arith.constant 0 : index
    %75 = vector.load %arg2[%c128_54, %c0_55] : memref<512x64xbf16, #tpu.memory_space<vmem>>, vector<128x64xbf16>
    %cst_56 = arith.constant dense<0.000000e+00> : vector<2x64xf32>
    %76 = tpu.matmul %74, %75, %cst_56 {dimension_numbers = #tpu.dot_dimension_numbers<[1], [0], [0], [1], [0, 0, 1, 1], [], []>} : vector<2x128xbf16>, vector<128x64xbf16>, vector<2x64xf32> -> vector<2x64xf32>
    %77 = arith.addf %73, %76 : vector<2x64xf32>
    %78 = vector.extract_strided_slice %5 {offsets = [0, 128], sizes = [2, 128], strides = [1, 1]} : vector<2x256xbf16> to vector<2x128xbf16>
    %c256_57 = arith.constant 256 : index
    %c0_58 = arith.constant 0 : index
    %79 = vector.load %arg2[%c256_57, %c0_58] : memref<512x64xbf16, #tpu.memory_space<vmem>>, vector<128x64xbf16>
    %cst_59 = arith.constant dense<0.000000e+00> : vector<2x64xf32>
    %80 = tpu.matmul %78, %79, %cst_59 {dimension_numbers = #tpu.dot_dimension_numbers<[1], [0], [0], [1], [0, 0, 1, 1], [], []>} : vector<2x128xbf16>, vector<128x64xbf16>, vector<2x64xf32> -> vector<2x64xf32>
    %81 = arith.addf %77, %80 : vector<2x64xf32>
    %82 = vector.extract_strided_slice %7 {offsets = [0, 128], sizes = [2, 128], strides = [1, 1]} : vector<2x256xbf16> to vector<2x128xbf16>
    %c384_60 = arith.constant 384 : index
    %c0_61 = arith.constant 0 : index
    %83 = vector.load %arg2[%c384_60, %c0_61] : memref<512x64xbf16, #tpu.memory_space<vmem>>, vector<128x64xbf16>
    %cst_62 = arith.constant dense<0.000000e+00> : vector<2x64xf32>
    %84 = tpu.matmul %82, %83, %cst_62 {dimension_numbers = #tpu.dot_dimension_numbers<[1], [0], [0], [1], [0, 0, 1, 1], [], []>} : vector<2x128xbf16>, vector<128x64xbf16>, vector<2x64xf32> -> vector<2x64xf32>
    %85 = arith.addf %81, %84 : vector<2x64xf32>
    %c0_63 = arith.constant 0 : index
    %c0_64 = arith.constant 0 : index
    %86 = vector.load %arg3[%c0_63, %c0_64] : memref<1x64xf32, #tpu.memory_space<vmem>>, vector<1x64xf32>
    %87 = vector.broadcast %86 : vector<1x64xf32> to vector<2x64xf32>
    %88 = arith.addf %85, %87 : vector<2x64xf32>
    %cst_65 = arith.constant 0.000000e+00 : f32
    %89 = vector.broadcast %cst_65 : f32 to vector<2x64xf32>
    %90 = arith.maximumf %88, %89 : vector<2x64xf32>
    %91 = arith.truncf %90 : vector<2x64xf32> to vector<2x64xbf16>
    %c128_66 = arith.constant 128 : index
    %c0_67 = arith.constant 0 : index
    %92 = vector.load %arg4[%c128_66, %c0_67] : memref<576x64xbf16, #tpu.memory_space<vmem>>, vector<64x64xbf16>
    %cst_68 = arith.constant dense<0.000000e+00> : vector<2x64xf32>
    %93 = tpu.matmul %91, %92, %cst_68 {dimension_numbers = #tpu.dot_dimension_numbers<[1], [0], [0], [1], [0, 0, 1, 1], [], []>} : vector<2x64xbf16>, vector<64x64xbf16>, vector<2x64xf32> -> vector<2x64xf32>
    %94 = arith.addf %68, %93 : vector<2x64xf32>
    %cst_69 = arith.constant 0.000000e+00 : f32
    %95 = vector.broadcast %cst_69 : f32 to vector<2x64xf32>
    %96 = vector.extract_strided_slice %5 {offsets = [0, 0], sizes = [2, 128], strides = [1, 1]} : vector<2x256xbf16> to vector<2x128xbf16>
    %c0_70 = arith.constant 0 : index
    %c0_71 = arith.constant 0 : index
    %97 = vector.load %arg2[%c0_70, %c0_71] : memref<512x64xbf16, #tpu.memory_space<vmem>>, vector<128x64xbf16>
    %cst_72 = arith.constant dense<0.000000e+00> : vector<2x64xf32>
    %98 = tpu.matmul %96, %97, %cst_72 {dimension_numbers = #tpu.dot_dimension_numbers<[1], [0], [0], [1], [0, 0, 1, 1], [], []>} : vector<2x128xbf16>, vector<128x64xbf16>, vector<2x64xf32> -> vector<2x64xf32>
    %99 = arith.addf %95, %98 : vector<2x64xf32>
    %100 = vector.extract_strided_slice %7 {offsets = [0, 0], sizes = [2, 128], strides = [1, 1]} : vector<2x256xbf16> to vector<2x128xbf16>
    %c128_73 = arith.constant 128 : index
    %c0_74 = arith.constant 0 : index
    %101 = vector.load %arg2[%c128_73, %c0_74] : memref<512x64xbf16, #tpu.memory_space<vmem>>, vector<128x64xbf16>
    %cst_75 = arith.constant dense<0.000000e+00> : vector<2x64xf32>
    %102 = tpu.matmul %100, %101, %cst_75 {dimension_numbers = #tpu.dot_dimension_numbers<[1], [0], [0], [1], [0, 0, 1, 1], [], []>} : vector<2x128xbf16>, vector<128x64xbf16>, vector<2x64xf32> -> vector<2x64xf32>
    %103 = arith.addf %99, %102 : vector<2x64xf32>
    %104 = vector.extract_strided_slice %9 {offsets = [0, 0], sizes = [2, 128], strides = [1, 1]} : vector<2x256xbf16> to vector<2x128xbf16>
    %c256_76 = arith.constant 256 : index
    %c0_77 = arith.constant 0 : index
    %105 = vector.load %arg2[%c256_76, %c0_77] : memref<512x64xbf16, #tpu.memory_space<vmem>>, vector<128x64xbf16>
    %cst_78 = arith.constant dense<0.000000e+00> : vector<2x64xf32>
    %106 = tpu.matmul %104, %105, %cst_78 {dimension_numbers = #tpu.dot_dimension_numbers<[1], [0], [0], [1], [0, 0, 1, 1], [], []>} : vector<2x128xbf16>, vector<128x64xbf16>, vector<2x64xf32> -> vector<2x64xf32>
    %107 = arith.addf %103, %106 : vector<2x64xf32>
    %108 = vector.extract_strided_slice %11 {offsets = [0, 0], sizes = [2, 128], strides = [1, 1]} : vector<2x256xbf16> to vector<2x128xbf16>
    %c384_79 = arith.constant 384 : index
    %c0_80 = arith.constant 0 : index
    %109 = vector.load %arg2[%c384_79, %c0_80] : memref<512x64xbf16, #tpu.memory_space<vmem>>, vector<128x64xbf16>
    %cst_81 = arith.constant dense<0.000000e+00> : vector<2x64xf32>
    %110 = tpu.matmul %108, %109, %cst_81 {dimension_numbers = #tpu.dot_dimension_numbers<[1], [0], [0], [1], [0, 0, 1, 1], [], []>} : vector<2x128xbf16>, vector<128x64xbf16>, vector<2x64xf32> -> vector<2x64xf32>
    %111 = arith.addf %107, %110 : vector<2x64xf32>
    %c0_82 = arith.constant 0 : index
    %c0_83 = arith.constant 0 : index
    %112 = vector.load %arg3[%c0_82, %c0_83] : memref<1x64xf32, #tpu.memory_space<vmem>>, vector<1x64xf32>
    %113 = vector.broadcast %112 : vector<1x64xf32> to vector<2x64xf32>
    %114 = arith.addf %111, %113 : vector<2x64xf32>
    %cst_84 = arith.constant 0.000000e+00 : f32
    %115 = vector.broadcast %cst_84 : f32 to vector<2x64xf32>
    %116 = arith.maximumf %114, %115 : vector<2x64xf32>
    %117 = arith.truncf %116 : vector<2x64xf32> to vector<2x64xbf16>
    %c192 = arith.constant 192 : index
    %c0_85 = arith.constant 0 : index
    %118 = vector.load %arg4[%c192, %c0_85] : memref<576x64xbf16, #tpu.memory_space<vmem>>, vector<64x64xbf16>
    %cst_86 = arith.constant dense<0.000000e+00> : vector<2x64xf32>
    %119 = tpu.matmul %117, %118, %cst_86 {dimension_numbers = #tpu.dot_dimension_numbers<[1], [0], [0], [1], [0, 0, 1, 1], [], []>} : vector<2x64xbf16>, vector<64x64xbf16>, vector<2x64xf32> -> vector<2x64xf32>
    %120 = arith.addf %94, %119 : vector<2x64xf32>
    %cst_87 = arith.constant 0.000000e+00 : f32
    %121 = vector.broadcast %cst_87 : f32 to vector<2x64xf32>
    %122 = vector.extract_strided_slice %5 {offsets = [0, 64], sizes = [2, 128], strides = [1, 1]} : vector<2x256xbf16> to vector<2x128xbf16>
    %c0_88 = arith.constant 0 : index
    %c0_89 = arith.constant 0 : index
    %123 = vector.load %arg2[%c0_88, %c0_89] : memref<512x64xbf16, #tpu.memory_space<vmem>>, vector<128x64xbf16>
    %cst_90 = arith.constant dense<0.000000e+00> : vector<2x64xf32>
    %124 = tpu.matmul %122, %123, %cst_90 {dimension_numbers = #tpu.dot_dimension_numbers<[1], [0], [0], [1], [0, 0, 1, 1], [], []>} : vector<2x128xbf16>, vector<128x64xbf16>, vector<2x64xf32> -> vector<2x64xf32>
    %125 = arith.addf %121, %124 : vector<2x64xf32>
    %126 = vector.extract_strided_slice %7 {offsets = [0, 64], sizes = [2, 128], strides = [1, 1]} : vector<2x256xbf16> to vector<2x128xbf16>
    %c128_91 = arith.constant 128 : index
    %c0_92 = arith.constant 0 : index
    %127 = vector.load %arg2[%c128_91, %c0_92] : memref<512x64xbf16, #tpu.memory_space<vmem>>, vector<128x64xbf16>
    %cst_93 = arith.constant dense<0.000000e+00> : vector<2x64xf32>
    %128 = tpu.matmul %126, %127, %cst_93 {dimension_numbers = #tpu.dot_dimension_numbers<[1], [0], [0], [1], [0, 0, 1, 1], [], []>} : vector<2x128xbf16>, vector<128x64xbf16>, vector<2x64xf32> -> vector<2x64xf32>
    %129 = arith.addf %125, %128 : vector<2x64xf32>
    %130 = vector.extract_strided_slice %9 {offsets = [0, 64], sizes = [2, 128], strides = [1, 1]} : vector<2x256xbf16> to vector<2x128xbf16>
    %c256_94 = arith.constant 256 : index
    %c0_95 = arith.constant 0 : index
    %131 = vector.load %arg2[%c256_94, %c0_95] : memref<512x64xbf16, #tpu.memory_space<vmem>>, vector<128x64xbf16>
    %cst_96 = arith.constant dense<0.000000e+00> : vector<2x64xf32>
    %132 = tpu.matmul %130, %131, %cst_96 {dimension_numbers = #tpu.dot_dimension_numbers<[1], [0], [0], [1], [0, 0, 1, 1], [], []>} : vector<2x128xbf16>, vector<128x64xbf16>, vector<2x64xf32> -> vector<2x64xf32>
    %133 = arith.addf %129, %132 : vector<2x64xf32>
    %134 = vector.extract_strided_slice %11 {offsets = [0, 64], sizes = [2, 128], strides = [1, 1]} : vector<2x256xbf16> to vector<2x128xbf16>
    %c384_97 = arith.constant 384 : index
    %c0_98 = arith.constant 0 : index
    %135 = vector.load %arg2[%c384_97, %c0_98] : memref<512x64xbf16, #tpu.memory_space<vmem>>, vector<128x64xbf16>
    %cst_99 = arith.constant dense<0.000000e+00> : vector<2x64xf32>
    %136 = tpu.matmul %134, %135, %cst_99 {dimension_numbers = #tpu.dot_dimension_numbers<[1], [0], [0], [1], [0, 0, 1, 1], [], []>} : vector<2x128xbf16>, vector<128x64xbf16>, vector<2x64xf32> -> vector<2x64xf32>
    %137 = arith.addf %133, %136 : vector<2x64xf32>
    %c0_100 = arith.constant 0 : index
    %c0_101 = arith.constant 0 : index
    %138 = vector.load %arg3[%c0_100, %c0_101] : memref<1x64xf32, #tpu.memory_space<vmem>>, vector<1x64xf32>
    %139 = vector.broadcast %138 : vector<1x64xf32> to vector<2x64xf32>
    %140 = arith.addf %137, %139 : vector<2x64xf32>
    %cst_102 = arith.constant 0.000000e+00 : f32
    %141 = vector.broadcast %cst_102 : f32 to vector<2x64xf32>
    %142 = arith.maximumf %140, %141 : vector<2x64xf32>
    %143 = arith.truncf %142 : vector<2x64xf32> to vector<2x64xbf16>
    %c256_103 = arith.constant 256 : index
    %c0_104 = arith.constant 0 : index
    %144 = vector.load %arg4[%c256_103, %c0_104] : memref<576x64xbf16, #tpu.memory_space<vmem>>, vector<64x64xbf16>
    %cst_105 = arith.constant dense<0.000000e+00> : vector<2x64xf32>
    %145 = tpu.matmul %143, %144, %cst_105 {dimension_numbers = #tpu.dot_dimension_numbers<[1], [0], [0], [1], [0, 0, 1, 1], [], []>} : vector<2x64xbf16>, vector<64x64xbf16>, vector<2x64xf32> -> vector<2x64xf32>
    %146 = arith.addf %120, %145 : vector<2x64xf32>
    %cst_106 = arith.constant 0.000000e+00 : f32
    %147 = vector.broadcast %cst_106 : f32 to vector<2x64xf32>
    %148 = vector.extract_strided_slice %5 {offsets = [0, 128], sizes = [2, 128], strides = [1, 1]} : vector<2x256xbf16> to vector<2x128xbf16>
    %c0_107 = arith.constant 0 : index
    %c0_108 = arith.constant 0 : index
    %149 = vector.load %arg2[%c0_107, %c0_108] : memref<512x64xbf16, #tpu.memory_space<vmem>>, vector<128x64xbf16>
    %cst_109 = arith.constant dense<0.000000e+00> : vector<2x64xf32>
    %150 = tpu.matmul %148, %149, %cst_109 {dimension_numbers = #tpu.dot_dimension_numbers<[1], [0], [0], [1], [0, 0, 1, 1], [], []>} : vector<2x128xbf16>, vector<128x64xbf16>, vector<2x64xf32> -> vector<2x64xf32>
    %151 = arith.addf %147, %150 : vector<2x64xf32>
    %152 = vector.extract_strided_slice %7 {offsets = [0, 128], sizes = [2, 128], strides = [1, 1]} : vector<2x256xbf16> to vector<2x128xbf16>
    %c128_110 = arith.constant 128 : index
    %c0_111 = arith.constant 0 : index
    %153 = vector.load %arg2[%c128_110, %c0_111] : memref<512x64xbf16, #tpu.memory_space<vmem>>, vector<128x64xbf16>
    %cst_112 = arith.constant dense<0.000000e+00> : vector<2x64xf32>
    %154 = tpu.matmul %152, %153, %cst_112 {dimension_numbers = #tpu.dot_dimension_numbers<[1], [0], [0], [1], [0, 0, 1, 1], [], []>} : vector<2x128xbf16>, vector<128x64xbf16>, vector<2x64xf32> -> vector<2x64xf32>
    %155 = arith.addf %151, %154 : vector<2x64xf32>
    %156 = vector.extract_strided_slice %9 {offsets = [0, 128], sizes = [2, 128], strides = [1, 1]} : vector<2x256xbf16> to vector<2x128xbf16>
    %c256_113 = arith.constant 256 : index
    %c0_114 = arith.constant 0 : index
    %157 = vector.load %arg2[%c256_113, %c0_114] : memref<512x64xbf16, #tpu.memory_space<vmem>>, vector<128x64xbf16>
    %cst_115 = arith.constant dense<0.000000e+00> : vector<2x64xf32>
    %158 = tpu.matmul %156, %157, %cst_115 {dimension_numbers = #tpu.dot_dimension_numbers<[1], [0], [0], [1], [0, 0, 1, 1], [], []>} : vector<2x128xbf16>, vector<128x64xbf16>, vector<2x64xf32> -> vector<2x64xf32>
    %159 = arith.addf %155, %158 : vector<2x64xf32>
    %160 = vector.extract_strided_slice %11 {offsets = [0, 128], sizes = [2, 128], strides = [1, 1]} : vector<2x256xbf16> to vector<2x128xbf16>
    %c384_116 = arith.constant 384 : index
    %c0_117 = arith.constant 0 : index
    %161 = vector.load %arg2[%c384_116, %c0_117] : memref<512x64xbf16, #tpu.memory_space<vmem>>, vector<128x64xbf16>
    %cst_118 = arith.constant dense<0.000000e+00> : vector<2x64xf32>
    %162 = tpu.matmul %160, %161, %cst_118 {dimension_numbers = #tpu.dot_dimension_numbers<[1], [0], [0], [1], [0, 0, 1, 1], [], []>} : vector<2x128xbf16>, vector<128x64xbf16>, vector<2x64xf32> -> vector<2x64xf32>
    %163 = arith.addf %159, %162 : vector<2x64xf32>
    %c0_119 = arith.constant 0 : index
    %c0_120 = arith.constant 0 : index
    %164 = vector.load %arg3[%c0_119, %c0_120] : memref<1x64xf32, #tpu.memory_space<vmem>>, vector<1x64xf32>
    %165 = vector.broadcast %164 : vector<1x64xf32> to vector<2x64xf32>
    %166 = arith.addf %163, %165 : vector<2x64xf32>
    %cst_121 = arith.constant 0.000000e+00 : f32
    %167 = vector.broadcast %cst_121 : f32 to vector<2x64xf32>
    %168 = arith.maximumf %166, %167 : vector<2x64xf32>
    %169 = arith.truncf %168 : vector<2x64xf32> to vector<2x64xbf16>
    %c320 = arith.constant 320 : index
    %c0_122 = arith.constant 0 : index
    %170 = vector.load %arg4[%c320, %c0_122] : memref<576x64xbf16, #tpu.memory_space<vmem>>, vector<64x64xbf16>
    %cst_123 = arith.constant dense<0.000000e+00> : vector<2x64xf32>
    %171 = tpu.matmul %169, %170, %cst_123 {dimension_numbers = #tpu.dot_dimension_numbers<[1], [0], [0], [1], [0, 0, 1, 1], [], []>} : vector<2x64xbf16>, vector<64x64xbf16>, vector<2x64xf32> -> vector<2x64xf32>
    %172 = arith.addf %146, %171 : vector<2x64xf32>
    %cst_124 = arith.constant 0.000000e+00 : f32
    %173 = vector.broadcast %cst_124 : f32 to vector<2x64xf32>
    %174 = vector.extract_strided_slice %9 {offsets = [0, 0], sizes = [2, 128], strides = [1, 1]} : vector<2x256xbf16> to vector<2x128xbf16>
    %c0_125 = arith.constant 0 : index
    %c0_126 = arith.constant 0 : index
    %175 = vector.load %arg2[%c0_125, %c0_126] : memref<512x64xbf16, #tpu.memory_space<vmem>>, vector<128x64xbf16>
    %cst_127 = arith.constant dense<0.000000e+00> : vector<2x64xf32>
    %176 = tpu.matmul %174, %175, %cst_127 {dimension_numbers = #tpu.dot_dimension_numbers<[1], [0], [0], [1], [0, 0, 1, 1], [], []>} : vector<2x128xbf16>, vector<128x64xbf16>, vector<2x64xf32> -> vector<2x64xf32>
    %177 = arith.addf %173, %176 : vector<2x64xf32>
    %178 = vector.extract_strided_slice %11 {offsets = [0, 0], sizes = [2, 128], strides = [1, 1]} : vector<2x256xbf16> to vector<2x128xbf16>
    %c128_128 = arith.constant 128 : index
    %c0_129 = arith.constant 0 : index
    %179 = vector.load %arg2[%c128_128, %c0_129] : memref<512x64xbf16, #tpu.memory_space<vmem>>, vector<128x64xbf16>
    %cst_130 = arith.constant dense<0.000000e+00> : vector<2x64xf32>
    %180 = tpu.matmul %178, %179, %cst_130 {dimension_numbers = #tpu.dot_dimension_numbers<[1], [0], [0], [1], [0, 0, 1, 1], [], []>} : vector<2x128xbf16>, vector<128x64xbf16>, vector<2x64xf32> -> vector<2x64xf32>
    %181 = arith.addf %177, %180 : vector<2x64xf32>
    %182 = vector.extract_strided_slice %13 {offsets = [0, 0], sizes = [2, 128], strides = [1, 1]} : vector<2x256xbf16> to vector<2x128xbf16>
    %c256_131 = arith.constant 256 : index
    %c0_132 = arith.constant 0 : index
    %183 = vector.load %arg2[%c256_131, %c0_132] : memref<512x64xbf16, #tpu.memory_space<vmem>>, vector<128x64xbf16>
    %cst_133 = arith.constant dense<0.000000e+00> : vector<2x64xf32>
    %184 = tpu.matmul %182, %183, %cst_133 {dimension_numbers = #tpu.dot_dimension_numbers<[1], [0], [0], [1], [0, 0, 1, 1], [], []>} : vector<2x128xbf16>, vector<128x64xbf16>, vector<2x64xf32> -> vector<2x64xf32>
    %185 = arith.addf %181, %184 : vector<2x64xf32>
    %186 = vector.extract_strided_slice %15 {offsets = [0, 0], sizes = [2, 128], strides = [1, 1]} : vector<2x256xbf16> to vector<2x128xbf16>
    %c384_134 = arith.constant 384 : index
    %c0_135 = arith.constant 0 : index
    %187 = vector.load %arg2[%c384_134, %c0_135] : memref<512x64xbf16, #tpu.memory_space<vmem>>, vector<128x64xbf16>
    %cst_136 = arith.constant dense<0.000000e+00> : vector<2x64xf32>
    %188 = tpu.matmul %186, %187, %cst_136 {dimension_numbers = #tpu.dot_dimension_numbers<[1], [0], [0], [1], [0, 0, 1, 1], [], []>} : vector<2x128xbf16>, vector<128x64xbf16>, vector<2x64xf32> -> vector<2x64xf32>
    %189 = arith.addf %185, %188 : vector<2x64xf32>
    %c0_137 = arith.constant 0 : index
    %c0_138 = arith.constant 0 : index
    %190 = vector.load %arg3[%c0_137, %c0_138] : memref<1x64xf32, #tpu.memory_space<vmem>>, vector<1x64xf32>
    %191 = vector.broadcast %190 : vector<1x64xf32> to vector<2x64xf32>
    %192 = arith.addf %189, %191 : vector<2x64xf32>
    %cst_139 = arith.constant 0.000000e+00 : f32
    %193 = vector.broadcast %cst_139 : f32 to vector<2x64xf32>
    %194 = arith.maximumf %192, %193 : vector<2x64xf32>
    %195 = arith.truncf %194 : vector<2x64xf32> to vector<2x64xbf16>
    %c384_140 = arith.constant 384 : index
    %c0_141 = arith.constant 0 : index
    %196 = vector.load %arg4[%c384_140, %c0_141] : memref<576x64xbf16, #tpu.memory_space<vmem>>, vector<64x64xbf16>
    %cst_142 = arith.constant dense<0.000000e+00> : vector<2x64xf32>
    %197 = tpu.matmul %195, %196, %cst_142 {dimension_numbers = #tpu.dot_dimension_numbers<[1], [0], [0], [1], [0, 0, 1, 1], [], []>} : vector<2x64xbf16>, vector<64x64xbf16>, vector<2x64xf32> -> vector<2x64xf32>
    %198 = arith.addf %172, %197 : vector<2x64xf32>
    %cst_143 = arith.constant 0.000000e+00 : f32
    %199 = vector.broadcast %cst_143 : f32 to vector<2x64xf32>
    %200 = vector.extract_strided_slice %9 {offsets = [0, 64], sizes = [2, 128], strides = [1, 1]} : vector<2x256xbf16> to vector<2x128xbf16>
    %c0_144 = arith.constant 0 : index
    %c0_145 = arith.constant 0 : index
    %201 = vector.load %arg2[%c0_144, %c0_145] : memref<512x64xbf16, #tpu.memory_space<vmem>>, vector<128x64xbf16>
    %cst_146 = arith.constant dense<0.000000e+00> : vector<2x64xf32>
    %202 = tpu.matmul %200, %201, %cst_146 {dimension_numbers = #tpu.dot_dimension_numbers<[1], [0], [0], [1], [0, 0, 1, 1], [], []>} : vector<2x128xbf16>, vector<128x64xbf16>, vector<2x64xf32> -> vector<2x64xf32>
    %203 = arith.addf %199, %202 : vector<2x64xf32>
    %204 = vector.extract_strided_slice %11 {offsets = [0, 64], sizes = [2, 128], strides = [1, 1]} : vector<2x256xbf16> to vector<2x128xbf16>
    %c128_147 = arith.constant 128 : index
    %c0_148 = arith.constant 0 : index
    %205 = vector.load %arg2[%c128_147, %c0_148] : memref<512x64xbf16, #tpu.memory_space<vmem>>, vector<128x64xbf16>
    %cst_149 = arith.constant dense<0.000000e+00> : vector<2x64xf32>
    %206 = tpu.matmul %204, %205, %cst_149 {dimension_numbers = #tpu.dot_dimension_numbers<[1], [0], [0], [1], [0, 0, 1, 1], [], []>} : vector<2x128xbf16>, vector<128x64xbf16>, vector<2x64xf32> -> vector<2x64xf32>
    %207 = arith.addf %203, %206 : vector<2x64xf32>
    %208 = vector.extract_strided_slice %13 {offsets = [0, 64], sizes = [2, 128], strides = [1, 1]} : vector<2x256xbf16> to vector<2x128xbf16>
    %c256_150 = arith.constant 256 : index
    %c0_151 = arith.constant 0 : index
    %209 = vector.load %arg2[%c256_150, %c0_151] : memref<512x64xbf16, #tpu.memory_space<vmem>>, vector<128x64xbf16>
    %cst_152 = arith.constant dense<0.000000e+00> : vector<2x64xf32>
    %210 = tpu.matmul %208, %209, %cst_152 {dimension_numbers = #tpu.dot_dimension_numbers<[1], [0], [0], [1], [0, 0, 1, 1], [], []>} : vector<2x128xbf16>, vector<128x64xbf16>, vector<2x64xf32> -> vector<2x64xf32>
    %211 = arith.addf %207, %210 : vector<2x64xf32>
    %212 = vector.extract_strided_slice %15 {offsets = [0, 64], sizes = [2, 128], strides = [1, 1]} : vector<2x256xbf16> to vector<2x128xbf16>
    %c384_153 = arith.constant 384 : index
    %c0_154 = arith.constant 0 : index
    %213 = vector.load %arg2[%c384_153, %c0_154] : memref<512x64xbf16, #tpu.memory_space<vmem>>, vector<128x64xbf16>
    %cst_155 = arith.constant dense<0.000000e+00> : vector<2x64xf32>
    %214 = tpu.matmul %212, %213, %cst_155 {dimension_numbers = #tpu.dot_dimension_numbers<[1], [0], [0], [1], [0, 0, 1, 1], [], []>} : vector<2x128xbf16>, vector<128x64xbf16>, vector<2x64xf32> -> vector<2x64xf32>
    %215 = arith.addf %211, %214 : vector<2x64xf32>
    %c0_156 = arith.constant 0 : index
    %c0_157 = arith.constant 0 : index
    %216 = vector.load %arg3[%c0_156, %c0_157] : memref<1x64xf32, #tpu.memory_space<vmem>>, vector<1x64xf32>
    %217 = vector.broadcast %216 : vector<1x64xf32> to vector<2x64xf32>
    %218 = arith.addf %215, %217 : vector<2x64xf32>
    %cst_158 = arith.constant 0.000000e+00 : f32
    %219 = vector.broadcast %cst_158 : f32 to vector<2x64xf32>
    %220 = arith.maximumf %218, %219 : vector<2x64xf32>
    %221 = arith.truncf %220 : vector<2x64xf32> to vector<2x64xbf16>
    %c448 = arith.constant 448 : index
    %c0_159 = arith.constant 0 : index
    %222 = vector.load %arg4[%c448, %c0_159] : memref<576x64xbf16, #tpu.memory_space<vmem>>, vector<64x64xbf16>
    %cst_160 = arith.constant dense<0.000000e+00> : vector<2x64xf32>
    %223 = tpu.matmul %221, %222, %cst_160 {dimension_numbers = #tpu.dot_dimension_numbers<[1], [0], [0], [1], [0, 0, 1, 1], [], []>} : vector<2x64xbf16>, vector<64x64xbf16>, vector<2x64xf32> -> vector<2x64xf32>
    %224 = arith.addf %198, %223 : vector<2x64xf32>
    %cst_161 = arith.constant 0.000000e+00 : f32
    %225 = vector.broadcast %cst_161 : f32 to vector<2x64xf32>
    %226 = vector.extract_strided_slice %9 {offsets = [0, 128], sizes = [2, 128], strides = [1, 1]} : vector<2x256xbf16> to vector<2x128xbf16>
    %c0_162 = arith.constant 0 : index
    %c0_163 = arith.constant 0 : index
    %227 = vector.load %arg2[%c0_162, %c0_163] : memref<512x64xbf16, #tpu.memory_space<vmem>>, vector<128x64xbf16>
    %cst_164 = arith.constant dense<0.000000e+00> : vector<2x64xf32>
    %228 = tpu.matmul %226, %227, %cst_164 {dimension_numbers = #tpu.dot_dimension_numbers<[1], [0], [0], [1], [0, 0, 1, 1], [], []>} : vector<2x128xbf16>, vector<128x64xbf16>, vector<2x64xf32> -> vector<2x64xf32>
    %229 = arith.addf %225, %228 : vector<2x64xf32>
    %230 = vector.extract_strided_slice %11 {offsets = [0, 128], sizes = [2, 128], strides = [1, 1]} : vector<2x256xbf16> to vector<2x128xbf16>
    %c128_165 = arith.constant 128 : index
    %c0_166 = arith.constant 0 : index
    %231 = vector.load %arg2[%c128_165, %c0_166] : memref<512x64xbf16, #tpu.memory_space<vmem>>, vector<128x64xbf16>
    %cst_167 = arith.constant dense<0.000000e+00> : vector<2x64xf32>
    %232 = tpu.matmul %230, %231, %cst_167 {dimension_numbers = #tpu.dot_dimension_numbers<[1], [0], [0], [1], [0, 0, 1, 1], [], []>} : vector<2x128xbf16>, vector<128x64xbf16>, vector<2x64xf32> -> vector<2x64xf32>
    %233 = arith.addf %229, %232 : vector<2x64xf32>
    %234 = vector.extract_strided_slice %13 {offsets = [0, 128], sizes = [2, 128], strides = [1, 1]} : vector<2x256xbf16> to vector<2x128xbf16>
    %c256_168 = arith.constant 256 : index
    %c0_169 = arith.constant 0 : index
    %235 = vector.load %arg2[%c256_168, %c0_169] : memref<512x64xbf16, #tpu.memory_space<vmem>>, vector<128x64xbf16>
    %cst_170 = arith.constant dense<0.000000e+00> : vector<2x64xf32>
    %236 = tpu.matmul %234, %235, %cst_170 {dimension_numbers = #tpu.dot_dimension_numbers<[1], [0], [0], [1], [0, 0, 1, 1], [], []>} : vector<2x128xbf16>, vector<128x64xbf16>, vector<2x64xf32> -> vector<2x64xf32>
    %237 = arith.addf %233, %236 : vector<2x64xf32>
    %238 = vector.extract_strided_slice %15 {offsets = [0, 128], sizes = [2, 128], strides = [1, 1]} : vector<2x256xbf16> to vector<2x128xbf16>
    %c384_171 = arith.constant 384 : index
    %c0_172 = arith.constant 0 : index
    %239 = vector.load %arg2[%c384_171, %c0_172] : memref<512x64xbf16, #tpu.memory_space<vmem>>, vector<128x64xbf16>
    %cst_173 = arith.constant dense<0.000000e+00> : vector<2x64xf32>
    %240 = tpu.matmul %238, %239, %cst_173 {dimension_numbers = #tpu.dot_dimension_numbers<[1], [0], [0], [1], [0, 0, 1, 1], [], []>} : vector<2x128xbf16>, vector<128x64xbf16>, vector<2x64xf32> -> vector<2x64xf32>
    %241 = arith.addf %237, %240 : vector<2x64xf32>
    %c0_174 = arith.constant 0 : index
    %c0_175 = arith.constant 0 : index
    %242 = vector.load %arg3[%c0_174, %c0_175] : memref<1x64xf32, #tpu.memory_space<vmem>>, vector<1x64xf32>
    %243 = vector.broadcast %242 : vector<1x64xf32> to vector<2x64xf32>
    %244 = arith.addf %241, %243 : vector<2x64xf32>
    %cst_176 = arith.constant 0.000000e+00 : f32
    %245 = vector.broadcast %cst_176 : f32 to vector<2x64xf32>
    %246 = arith.maximumf %244, %245 : vector<2x64xf32>
    %247 = arith.truncf %246 : vector<2x64xf32> to vector<2x64xbf16>
    %c512 = arith.constant 512 : index
    %c0_177 = arith.constant 0 : index
    %248 = vector.load %arg4[%c512, %c0_177] : memref<576x64xbf16, #tpu.memory_space<vmem>>, vector<64x64xbf16>
    %cst_178 = arith.constant dense<0.000000e+00> : vector<2x64xf32>
    %249 = tpu.matmul %247, %248, %cst_178 {dimension_numbers = #tpu.dot_dimension_numbers<[1], [0], [0], [1], [0, 0, 1, 1], [], []>} : vector<2x64xbf16>, vector<64x64xbf16>, vector<2x64xf32> -> vector<2x64xf32>
    %250 = arith.addf %224, %249 : vector<2x64xf32>
    %c0_179 = arith.constant 0 : index
    %c0_180 = arith.constant 0 : index
    %251 = vector.load %arg5[%c0_179, %c0_180] : memref<1x64xf32, #tpu.memory_space<vmem>>, vector<1x64xf32>
    %252 = vector.broadcast %251 : vector<1x64xf32> to vector<2x64xf32>
    %253 = arith.addf %250, %252 : vector<2x64xf32>
    %cst_181 = arith.constant 0.000000e+00 : f32
    %254 = vector.broadcast %cst_181 : f32 to vector<2x64xf32>
    %255 = arith.maximumf %253, %254 : vector<2x64xf32>
    %256 = arith.truncf %255 : vector<2x64xf32> to vector<2x64xbf16>
    %c0_182 = arith.constant 0 : index
    %c0_183 = arith.constant 0 : index
    %257 = vector.load %arg6[%c0_182, %c0_183] : memref<64x1024xbf16, #tpu.memory_space<vmem>>, vector<64x1024xbf16>
    %cst_184 = arith.constant dense<0.000000e+00> : vector<2x1024xf32>
    %258 = tpu.matmul %256, %257, %cst_184 {dimension_numbers = #tpu.dot_dimension_numbers<[1], [0], [0], [1], [0, 0, 1, 1], [], []>} : vector<2x64xbf16>, vector<64x1024xbf16>, vector<2x1024xf32> -> vector<2x1024xf32>
    %c0_185 = arith.constant 0 : index
    %c0_186 = arith.constant 0 : index
    %259 = vector.load %arg7[%c0_185, %c0_186] : memref<1x1024xf32, #tpu.memory_space<vmem>>, vector<1x1024xf32>
    %260 = vector.broadcast %259 : vector<1x1024xf32> to vector<2x1024xf32>
    %261 = arith.addf %258, %260 : vector<2x1024xf32>
    %cst_187 = arith.constant 0.000000e+00 : f32
    %262 = vector.broadcast %cst_187 : f32 to vector<2x1024xf32>
    %263 = arith.maximumf %261, %262 : vector<2x1024xf32>
    %264 = arith.truncf %263 : vector<2x1024xf32> to vector<2x1024xbf16>
    %c0_188 = arith.constant 0 : index
    %c0_189 = arith.constant 0 : index
    %265 = vector.load %arg8[%c0_188, %c0_189] : memref<1024x128xbf16, #tpu.memory_space<vmem>>, vector<1024x128xbf16>
    %cst_190 = arith.constant dense<0.000000e+00> : vector<2x128xf32>
    %266 = tpu.matmul %264, %265, %cst_190 {dimension_numbers = #tpu.dot_dimension_numbers<[1], [0], [0], [1], [0, 0, 1, 1], [], []>} : vector<2x1024xbf16>, vector<1024x128xbf16>, vector<2x128xf32> -> vector<2x128xf32>
    %c0_191 = arith.constant 0 : index
    %c0_192 = arith.constant 0 : index
    %267 = vector.load %arg9[%c0_191, %c0_192] : memref<1x128xf32, #tpu.memory_space<vmem>>, vector<1x128xf32>
    %268 = vector.broadcast %267 : vector<1x128xf32> to vector<2x128xf32>
    %269 = arith.addf %266, %268 : vector<2x128xf32>
    %c0_193 = arith.constant 0 : index
    %c0_194 = arith.constant 0 : index
    %270 = vector.load %arg10[%c0_193, %c0_194] : memref<2x128xf32, #tpu.memory_space<vmem>>, vector<2x128xf32>
    tpu.vector_store %arg10[%c0_193, %c0_194], %269 {strides = array<i32>} : memref<2x128xf32, #tpu.memory_space<vmem>>, vector<2x128xf32>,
    return
  }
  func.func @transform_0(%arg0: i32) -> (i32, i32, i32) {
    %c0_i32 = arith.constant 0 : i32
    %c0_i32_0 = arith.constant 0 : i32
    %c0_i32_1 = arith.constant 0 : i32
    return %arg0, %c0_i32, %c0_i32_0 : i32, i32, i32
  }
  func.func @transform_1(%arg0: i32) -> (i32, i32) {
    %c0_i32 = arith.constant 0 : i32
    %c0_i32_0 = arith.constant 0 : i32
    %c0_i32_1 = arith.constant 0 : i32
    return %c0_i32, %c0_i32_0 : i32, i32
  }
  func.func @transform_2(%arg0: i32) -> (i32, i32) {
    %c0_i32 = arith.constant 0 : i32
    %c0_i32_0 = arith.constant 0 : i32
    %c0_i32_1 = arith.constant 0 : i32
    return %c0_i32, %c0_i32_0 : i32, i32
  }
  func.func @transform_3(%arg0: i32) -> (i32, i32) {
    %c0_i32 = arith.constant 0 : i32
    %c0_i32_0 = arith.constant 0 : i32
    %c0_i32_1 = arith.constant 0 : i32
    return %c0_i32, %c0_i32_0 : i32, i32
  }
  func.func @transform_4(%arg0: i32) -> (i32, i32) {
    %c0_i32 = arith.constant 0 : i32
    %c0_i32_0 = arith.constant 0 : i32
    %c0_i32_1 = arith.constant 0 : i32
    return %c0_i32, %c0_i32_0 : i32, i32
  }
  func.func @transform_5(%arg0: i32) -> (i32, i32) {
    %c0_i32 = arith.constant 0 : i32
    %c0_i32_0 = arith.constant 0 : i32
    %c0_i32_1 = arith.constant 0 : i32
    return %c0_i32, %c0_i32_0 : i32, i32
  }
  func.func @transform_6(%arg0: i32) -> (i32, i32) {
    %c0_i32 = arith.constant 0 : i32
    %c0_i32_0 = arith.constant 0 : i32
    %c0_i32_1 = arith.constant 0 : i32
    return %c0_i32, %c0_i32_0 : i32, i32
  }
  func.func @transform_7(%arg0: i32) -> (i32, i32) {
    %c0_i32 = arith.constant 0 : i32
    %c0_i32_0 = arith.constant 0 : i32
    %c0_i32_1 = arith.constant 0 : i32
    return %c0_i32, %c0_i32_0 : i32, i32
  }
  func.func @transform_8(%arg0: i32) -> (i32, i32) {
    %c0_i32 = arith.constant 0 : i32
    %c0_i32_0 = arith.constant 0 : i32
    %c0_i32_1 = arith.constant 0 : i32
    return %c0_i32, %c0_i32_0 : i32, i32
  }
  func.func @transform_9(%arg0: i32) -> (i32, i32) {
    %c0_i32 = arith.constant 0 : i32
    %c0_i32_0 = arith.constant 0 : i32
    return %arg0, %c0_i32 : i32, i32
  }
}

</mosaic_0001>

<llo_original>
// kernel: actor_critic_cnn_forward.2
$region0: #{actor_critic_cnn_forward.2}
  #allocation0 [shape = 'u32[]', space=smem, size = 0x4, offset = 0x4, fixed_abs, tag = 'smem constant byte address 0x4 - core index']
  #allocation1 [shape = 'u32[144,128]{1,0:T(1,128)}', space=vmem, size = 0x12000, scoped, tag = 'internal scratch']
  %s0 = inlined_call_operand.vmem [shape: bf16[128,256], index: 0, kind: input, shape index: {}]
  %s1 = inlined_call_operand.vmem [shape: bf16[256,32], index: 1, kind: input, shape index: {}]
  %s2 = inlined_call_operand.vmem [shape: f32[1,32], index: 2, kind: input, shape index: {}]
  %s3 = inlined_call_operand.vmem [shape: bf16[128,32], index: 3, kind: output, shape index: {}]
  %s4 = sld [smem:[#allocation0]]
  $region45: #{actor_critic_cnn_forward.2} parent=0
    _
  %s6 = ssub.s32 1, %s4
  %s7 = scalar_select 0, %s6, %s4
  loop: start=0, step=1, limit=4
  $region2: #{actor_critic_cnn_forward.2} parent=0 // loop_pre_header
    _
  $region3: #{actor_critic_cnn_forward.2} parent=0 // loop_header
    %s9 = sphi 0, %s13
    %p10 = scmp.ge.s32.totalorder %s9, 4
    %s19 = sphi 0, %s21
    %s22 = sphi 0, %s19
    %s23 = sphi 0, %s22
    %s39 = sphi 0, %s23
    %s43 = sphi 0, %s43
    %s45 = sphi 0, %s43
    %s46 = sphi 0, %s45
    %s60 = sphi 0, %s46
    %s64 = sphi 0, %s64
    %s66 = sphi 0, %s64
    %s67 = sphi 0, %s66
    %s81 = sphi 0, %s67
    %s87 = sphi 0, %s89
    %s90 = sphi 0, %s87
    %s91 = sphi 0, %s90
    %s107 = sphi 0, %s91
  $region4: #{actor_critic_cnn_forward.2} parent=0 // loop_header_branch
    %12 = sbr.rel (%p10) target = $region8
  $region5: #{actor_critic_cnn_forward.2} parent=0 // loop_body
    %s14 = ssub.s32 %s9, 1
    %s15 = ssub.s32 %s9, 2
    %s16 = sadd.s32 %s9, 1
    %s17 = ssub.s32 %s9, %s16
    %p18 = scmp.eq.s32.totalorder %s17, 0
    %s20 = sadd.s32 %s19, 1
    %s21 = scalar_select %p18, %s19, %s20
    %p24 = pneg %p18
    %p25 = scmp.eq.s32.totalorder %s9, 1
    %p26 = por %p24, %p25
    %p27 = scmp.ne.s32.totalorder %s19, %s22
    %p28 = scmp.eq.s32.totalorder %s9, 0
    %p29 = por %p27, %p28
    %p30 = scmp.ne.s32.totalorder %s19, %s22
    %p31 = scmp.eq.s32.totalorder %s14, 1
    %p32 = por %p30, %p31
    %p33 = scmp.ne.s32.totalorder %s22, %s23
    %p34 = scmp.eq.s32.totalorder %s14, 0
    %p35 = por %p33, %p34
    %p36 = scmp.ne.s32.totalorder %s22, %s23
    %p37 = scmp.eq.s32.totalorder %s15, 1
    %p38 = por %p36, %p37
    %p40 = scmp.ne.s32.totalorder %s23, %s39
    %p41 = scmp.eq.s32.totalorder %s15, 0
    %p42 = por %p40, %p41
    %s44 = sadd.s32 %s43, 1
    %p47 = scmp.eq.s32.totalorder %s9, 1
    %p48 = scmp.ne.s32.totalorder %s43, %s45
    %p49 = scmp.eq.s32.totalorder %s9, 0
    %p50 = por %p48, %p49
    %p51 = scmp.ne.s32.totalorder %s43, %s45
    %p52 = scmp.eq.s32.totalorder %s14, 1
    %p53 = por %p51, %p52
    %p54 = scmp.ne.s32.totalorder %s45, %s46
    %p55 = scmp.eq.s32.totalorder %s14, 0
    %p56 = por %p54, %p55
    %p57 = scmp.ne.s32.totalorder %s45, %s46
    %p58 = scmp.eq.s32.totalorder %s15, 1
    %p59 = por %p57, %p58
    %p61 = scmp.ne.s32.totalorder %s46, %s60
    %p62 = scmp.eq.s32.totalorder %s15, 0
    %p63 = por %p61, %p62
    %s65 = sadd.s32 %s64, 1
    %p68 = scmp.eq.s32.totalorder %s9, 1
    %p69 = scmp.ne.s32.totalorder %s64, %s66
    %p70 = scmp.eq.s32.totalorder %s9, 0
    %p71 = por %p69, %p70
    %p72 = scmp.ne.s32.totalorder %s64, %s66
    %p73 = scmp.eq.s32.totalorder %s14, 1
    %p74 = por %p72, %p73
    %p75 = scmp.ne.s32.totalorder %s66, %s67
    %p76 = scmp.eq.s32.totalorder %s14, 0
    %p77 = por %p75, %p76
    %p78 = scmp.ne.s32.totalorder %s66, %s67
    %p79 = scmp.eq.s32.totalorder %s15, 1
    %p80 = por %p78, %p79
    %p82 = scmp.ne.s32.totalorder %s67, %s81
    %p83 = scmp.eq.s32.totalorder %s15, 0
    %p84 = por %p82, %p83
    %s85 = ssub.s32 %s9, %s16
    %p86 = scmp.eq.s32.totalorder %s85, 0
    %s88 = sadd.s32 %s87, 1
    %s89 = scalar_select %p86, %s87, %s88
    %p92 = pneg %p86
    %p93 = scmp.eq.s32.totalorder %s9, 1
    %p94 = por %p92, %p93
    %p95 = scmp.ne.s32.totalorder %s87, %s90
    %p96 = scmp.eq.s32.totalorder %s9, 0
    %p97 = por %p95, %p96
    %p98 = scmp.ne.s32.totalorder %s87, %s90
    %p99 = scmp.eq.s32.totalorder %s14, 1
    %p100 = por %p98, %p99
    %p101 = scmp.ne.s32.totalorder %s90, %s91
    %p102 = scmp.eq.s32.totalorder %s14, 0
    %p103 = por %p101, %p102
    %p104 = scmp.ne.s32.totalorder %s90, %s91
    %p105 = scmp.eq.s32.totalorder %s15, 1
    %p106 = por %p104, %p105
    %p108 = scmp.ne.s32.totalorder %s91, %s107
    %p109 = scmp.eq.s32.totalorder %s15, 0
    %p110 = por %p108, %p109
    %p111 = scmp.le.s32.totalorder 1, %s9
    %p112 = scmp.lt.s32.totalorder %s9, 3
    %p113 = pnand %p111, %p112
    %p114 = pneg %p113
    // Predicated region
    $region9: #{actor_critic_cnn_forward.2} parent=5 // pred_check
      _
    $region10: #{actor_critic_cnn_forward.2} parent=5 // pred_check_branch
      %116 = sbr.rel (%p113) target = $region12
    $region11: #{actor_critic_cnn_forward.2} parent=5 // pred_region
      %s117 = ssub.s32 %s9, 1
      // Predicated region
      $region13: #{actor_critic_cnn_forward.2} parent=11 // pred_check
        %p118 = pneg %p56
      $region14: #{actor_critic_cnn_forward.2} parent=11 // pred_check_branch
        %120 = sbr.rel (%p118) target = $region16
      $region15: #{actor_critic_cnn_forward.2} parent=11 // pred_region
        _
      $region16: #{actor_critic_cnn_forward.2} parent=11 // pred_fallthru
        _
      // Predicated region
      $region17: #{actor_critic_cnn_forward.2} parent=11 // pred_check
        %p121 = pneg %p77
      $region18: #{actor_critic_cnn_forward.2} parent=11 // pred_check_branch
        %123 = sbr.rel (%p121) target = $region20
      $region19: #{actor_critic_cnn_forward.2} parent=11 // pred_region
        _
      $region20: #{actor_critic_cnn_forward.2} parent=11 // pred_fallthru
        _
    $region12: #{actor_critic_cnn_forward.2} parent=5 // pred_fallthru
      _
    %p124 = scmp.lt.s32.totalorder %s9, 2
    // Predicated region
    $region21: #{actor_critic_cnn_forward.2} parent=5 // pred_check
      %p125 = pneg %p124
    $region22: #{actor_critic_cnn_forward.2} parent=5 // pred_check_branch
      %127 = sbr.rel (%p125) target = $region24
    $region23: #{actor_critic_cnn_forward.2} parent=5 // pred_region
      // Predicated region
      $region25: #{actor_critic_cnn_forward.2} parent=23 // pred_check
        %p128 = pneg %p29
      $region26: #{actor_critic_cnn_forward.2} parent=23 // pred_check_branch
        %130 = sbr.rel (%p128) target = $region28
      $region27: #{actor_critic_cnn_forward.2} parent=23 // pred_region
        %s131 = smul.u32 8, %s9
        %p132 = scmp.lt.s32.totalorder %s131, 15
        %s133 = scalar_select %p132, %s131, 15
        %s134 = smul.addr %s133, 2
        %s135 = smul.addr %s134, 4
        %s136 = scalar_lea.vmem %s0, %s135
        %s137 = smul.u32 8, %s9
      $region28: #{actor_critic_cnn_forward.2} parent=23 // pred_fallthru
        _
    $region24: #{actor_critic_cnn_forward.2} parent=5 // pred_fallthru
      _
    %p138 = scmp.le.s32.totalorder 1, %s9
    %p139 = scmp.lt.s32.totalorder %s9, 3
    %p140 = pnand %p138, %p139
    %p141 = pneg %p140
    // Predicated region
    $region29: #{actor_critic_cnn_forward.2} parent=5 // pred_check
      _
    $region30: #{actor_critic_cnn_forward.2} parent=5 // pred_check_branch
      %143 = sbr.rel (%p140) target = $region32
    $region31: #{actor_critic_cnn_forward.2} parent=5 // pred_region
      %s144 = ssub.s32 %s9, 1
      %s145 = smul.u32 8, %s14
      %p146 = scmp.lt.s32.totalorder %s145, 15
      %s147 = scalar_select %p146, %s145, 15
      %s148 = smul.addr %s147, 2
      %s149 = smul.addr %s148, 4
      %s150 = scalar_lea.vmem %s0, %s149
      %p151 = pneg %p35
      %p152 = pneg %p32
      %p153 = pneg %p56
      %p154 = pneg %p53
      %p155 = pneg %p77
      %p156 = pneg %p74
      %p157 = pneg %p103
      %p158 = pneg %p100
      %s159 = smul.u32 8, %s14
      %p160 = scmp.lt.s32.totalorder %s159, 15
      %s161 = scalar_select %p160, %s159, 15
      %s162 = smul.addr %s161, 4
      %s163 = scalar_lea.vmem %s3, %s162
      %s164 = smul.u32 8, %s14
      %p165 = scmp.lt.s32.totalorder %s164, 15
      %s166 = scalar_select %p165, %s164, 15
      %s167 = smul.addr %s166, 2
      %s168 = smul.addr %s167, 4
      %s169 = scalar_lea.vmem %s0, %s168
      %s170 = smul.u32 8, %s14
      %s171 = smul.u32 8, %s14
      %p172 = scmp.lt.s32.totalorder %s171, 15
      %s173 = scalar_select %p172, %s171, 15
      %s174 = smul.addr %s173, 4
      %s175 = scalar_lea.vmem %s3, %s174
      %s176 = smul.u32 8, %s14
      %v178 = vld [vmem:[%s169] sm:$0xff]
      %v179 = vld [vmem:[%s169 + $0x8] sm:$0xff]
      %v180 = vld [vmem:[%s169 + $0x10] sm:$0xff]
      %v181 = vld [vmem:[%s169 + $0x18] sm:$0xff]
      %v182 = vld [vmem:[%s169 + $0x20] sm:$0xff]
      %v183 = vld [vmem:[%s169 + $0x28] sm:$0xff]
      %v184 = vld [vmem:[%s169 + $0x30] sm:$0xff]
      %v185 = vld [vmem:[%s169 + $0x38] sm:$0xff]
      %v186 = vld [vmem:[%s1] sm:$0xf]
      %v187 = vld [vmem:[%s1 + $0x4] sm:$0xf]
      %v188 = vld [vmem:[%s1 + $0x8] sm:$0xf]
      %v189 = vld [vmem:[%s1 + $0xc] sm:$0xf]
      %v190 = vld [vmem:[%s1 + $0x10] sm:$0xf]
      %v191 = vld [vmem:[%s1 + $0x14] sm:$0xf]
      %v192 = vld [vmem:[%s1 + $0x18] sm:$0xf]
      %v193 = vld [vmem:[%s1 + $0x1c] sm:$0xf]
      %v194 = vld [vmem:[%s1 + $0x20] sm:$0xf]
      %v195 = vld [vmem:[%s1 + $0x24] sm:$0xf]
      %v196 = vld [vmem:[%s1 + $0x28] sm:$0xf]
      %v197 = vld [vmem:[%s1 + $0x2c] sm:$0xf]
      %v198 = vld [vmem:[%s1 + $0x30] sm:$0xf]
      %v199 = vld [vmem:[%s1 + $0x34] sm:$0xf]
      %v200 = vld [vmem:[%s1 + $0x38] sm:$0xf]
      %v201 = vld [vmem:[%s1 + $0x3c] sm:$0xf]
      %v202 = vld [vmem:[%s1 + $0x40] sm:$0xf]
      %v203 = vld [vmem:[%s1 + $0x44] sm:$0xf]
      %v204 = vld [vmem:[%s1 + $0x48] sm:$0xf]
      %v205 = vld [vmem:[%s1 + $0x4c] sm:$0xf]
      %v206 = vld [vmem:[%s1 + $0x50] sm:$0xf]
      %v207 = vld [vmem:[%s1 + $0x54] sm:$0xf]
      %v208 = vld [vmem:[%s1 + $0x58] sm:$0xf]
      %v209 = vld [vmem:[%s1 + $0x5c] sm:$0xf]
      %v210 = vld [vmem:[%s1 + $0x60] sm:$0xf]
      %v211 = vld [vmem:[%s1 + $0x64] sm:$0xf]
      %v212 = vld [vmem:[%s1 + $0x68] sm:$0xf]
      %v213 = vld [vmem:[%s1 + $0x6c] sm:$0xf]
      %v214 = vld [vmem:[%s1 + $0x70] sm:$0xf]
      %v215 = vld [vmem:[%s1 + $0x74] sm:$0xf]
      %v216 = vld [vmem:[%s1 + $0x78] sm:$0xf]
      %v217 = vld [vmem:[%s1 + $0x7c] sm:$0xf]
      %v218 = vld [vmem:[%s2] sm:$0x1]
      %v220 = vlaneseq
      %v221 = vshrl.u32 %v220, 7
      %v222 = vsub.s32 0, %v221
      %v223 = vrot.slane %v218, %v222
      %v233 = vunpack.c.l.b16 %v178
      %v234 = vunpack.c.h.b16 %v178
      %v235 = vunpack.c.l.b16 %v179
      %v236 = vunpack.c.h.b16 %v179
      %v237 = vunpack.c.l.b16 %v180
      %v238 = vunpack.c.h.b16 %v180
      %v239 = vunpack.c.l.b16 %v181
      %v240 = vunpack.c.h.b16 %v181
      %v241 = vunpack.c.l.b16 %v182
      %v242 = vunpack.c.h.b16 %v182
      %v243 = vunpack.c.l.b16 %v183
      %v244 = vunpack.c.h.b16 %v183
      %v245 = vunpack.c.l.b16 %v184
      %v246 = vunpack.c.h.b16 %v184
      %v247 = vunpack.c.l.b16 %v185
      %v248 = vunpack.c.h.b16 %v185
      %v249 = vpack.c.b16 %v235, %v233
      %v250 = vpack.c.b16 %v236, %v234
      %v251 = vpack.c.b16 %v239, %v237
      %v252 = vpack.c.b16 %v240, %v238
      %v253 = vpack.c.b16 %v243, %v241
      %v254 = vpack.c.b16 %v244, %v242
      %v255 = vpack.c.b16 %v247, %v245
      %v256 = vpack.c.b16 %v248, %v246
      %v297 = vunpack.c.l.b16 %v186
      %v298 = vunpack.c.l.b16 %v187
      %v299 = vunpack.c.l.b16 %v188
      %v300 = vunpack.c.l.b16 %v189
      %v301 = vunpack.c.l.b16 %v190
      %v302 = vunpack.c.l.b16 %v191
      %v303 = vunpack.c.l.b16 %v192
      %v304 = vunpack.c.l.b16 %v193
      %v305 = vunpack.c.l.b16 %v194
      %v306 = vunpack.c.l.b16 %v195
      %v307 = vunpack.c.l.b16 %v196
      %v308 = vunpack.c.l.b16 %v197
      %v309 = vunpack.c.l.b16 %v198
      %v310 = vunpack.c.l.b16 %v199
      %v311 = vunpack.c.l.b16 %v200
      %v312 = vunpack.c.l.b16 %v201
      %v313 = vunpack.c.l.b16 %v202
      %v314 = vunpack.c.l.b16 %v203
      %v315 = vunpack.c.l.b16 %v204
      %v316 = vunpack.c.l.b16 %v205
      %v317 = vunpack.c.l.b16 %v206
      %v318 = vunpack.c.l.b16 %v207
      %v319 = vunpack.c.l.b16 %v208
      %v320 = vunpack.c.l.b16 %v209
      %v321 = vunpack.c.l.b16 %v210
      %v322 = vunpack.c.l.b16 %v211
      %v323 = vunpack.c.l.b16 %v212
      %v324 = vunpack.c.l.b16 %v213
      %v325 = vunpack.c.l.b16 %v214
      %v326 = vunpack.c.l.b16 %v215
      %v327 = vunpack.c.l.b16 %v216
      %v328 = vunpack.c.l.b16 %v217
      %v329 = vpack.c.b16 %v298, %v297
      %v330 = vpack.c.b16 %v300, %v299
      %v331 = vpack.c.b16 %v302, %v301
      %v332 = vpack.c.b16 %v304, %v303
      %v333 = vpack.c.b16 %v306, %v305
      %v334 = vpack.c.b16 %v308, %v307
      %v335 = vpack.c.b16 %v310, %v309
      %v336 = vpack.c.b16 %v312, %v311
      %v337 = vpack.c.b16 %v314, %v313
      %v338 = vpack.c.b16 %v316, %v315
      %v339 = vpack.c.b16 %v318, %v317
      %v340 = vpack.c.b16 %v320, %v319
      %v341 = vpack.c.b16 %v322, %v321
      %v342 = vpack.c.b16 %v324, %v323
      %v343 = vpack.c.b16 %v326, %v325
      %v344 = vpack.c.b16 %v328, %v327
      %361 = vmatprep.subr.bf16.mxu0 0
      %362 = vmatpush1.bf16.msra.mxu0 %v329
      %363 = vmatprep.subr.bf16.mxu0 0
      %364 = vmatpush1.bf16.msra.mxu0 %v330
      %365 = vmatprep.subr.bf16.mxu0 0
      %366 = vmatpush1.bf16.msra.mxu0 %v331
      %367 = vmatprep.subr.bf16.mxu0 0
      %368 = vmatpush1.bf16.msra.mxu0 %v332
      %369 = vmatprep.subr.bf16.mxu0 0
      %370 = vmatpush1.bf16.msra.mxu0 %v333
      %371 = vmatprep.subr.bf16.mxu0 0
      %372 = vmatpush1.bf16.msra.mxu0 %v334
      %373 = vmatprep.subr.bf16.mxu0 0
      %374 = vmatpush1.bf16.msra.mxu0 %v335
      %375 = vmatprep.subr.bf16.mxu0 0
      %376 = vmatpush1.bf16.msra.mxu0 %v336
      %377 = vmatprep.subr.bf16.mxu0 0
      %378 = vmatpush1.bf16.msra.mxu0 %v337
      %379 = vmatprep.subr.bf16.mxu0 0
      %380 = vmatpush1.bf16.msra.mxu0 %v338
      %381 = vmatprep.subr.bf16.mxu0 0
      %382 = vmatpush1.bf16.msra.mxu0 %v339
      %383 = vmatprep.subr.bf16.mxu0 0
      %384 = vmatpush1.bf16.msra.mxu0 %v340
      %385 = vmatprep.subr.bf16.mxu0 0
      %386 = vmatpush1.bf16.msra.mxu0 %v341
      %387 = vmatprep.subr.bf16.mxu0 0
      %388 = vmatpush1.bf16.msra.mxu0 %v342
      %389 = vmatprep.subr.bf16.mxu0 0
      %390 = vmatpush1.bf16.msra.mxu0 %v343
      %391 = vmatprep.subr.bf16.mxu0 0
      %392 = vmatpush1.bf16.msra.mxu0 %v344
      %393 = vmatprep.mubr.bf16.mxu0 %v250
      %394 = vmatmul.mubr.bf16.gmra.mrb[0].mxu0 %v249
      %v395 = vpop.f32.mrb[0].mxu0
      %v396 = vadd.f32 %v223, %v395
      %v397 = vpop.f32.mrb[0].mxu0
      %v398 = vpop.f32.mrb[0].mxu0
      %v399 = vadd.f32 %v223, %v398
      %v400 = vpop.f32.mrb[0].mxu0
      %401 = vmatprep.mubr.bf16.mxu0 %v252
      %402 = vmatmul.mubr.bf16.gmra.mrb[0].mxu0 %v251
      %v403 = vpop.f32.mrb[0].mxu0
      %v404 = vadd.f32 %v223, %v403
      %v405 = vpop.f32.mrb[0].mxu0
      %v406 = vpop.f32.mrb[0].mxu0
      %v407 = vadd.f32 %v223, %v406
      %v408 = vpop.f32.mrb[0].mxu0
      %409 = vmatprep.mubr.bf16.mxu0 %v254
      %410 = vmatmul.mubr.bf16.gmra.mrb[0].mxu0 %v253
      %v411 = vpop.f32.mrb[0].mxu0
      %v412 = vadd.f32 %v223, %v411
      %v413 = vpop.f32.mrb[0].mxu0
      %v414 = vpop.f32.mrb[0].mxu0
      %v415 = vadd.f32 %v223, %v414
      %v416 = vpop.f32.mrb[0].mxu0
      %417 = vmatprep.mubr.bf16.mxu0 %v256
      %418 = vmatmul.mubr.bf16.gmra.mrb[0].mxu0 %v255
      %v419 = vpop.f32.mrb[0].mxu0
      %v420 = vadd.f32 %v223, %v419
      %v421 = vpop.f32.mrb[0].mxu0
      %v422 = vpop.f32.mrb[0].mxu0
      %v423 = vadd.f32 %v223, %v422
      %v424 = vpop.f32.mrb[0].mxu0
      %425 = vdwg.mxu0
      %v426 = vmax.f32 %v396, 0.0
      %v427 = vmax.f32 %v399, 0.0
      %v428 = vmax.f32 %v404, 0.0
      %v429 = vmax.f32 %v407, 0.0
      %v430 = vmax.f32 %v412, 0.0
      %v431 = vmax.f32 %v415, 0.0
      %v432 = vmax.f32 %v420, 0.0
      %v433 = vmax.f32 %v423, 0.0
      %v434 = vpack.c.bf16 %v427, %v426
      %v435 = vpack.c.bf16 %v429, %v428
      %v436 = vpack.c.bf16 %v431, %v430
      %v437 = vpack.c.bf16 %v433, %v432
      %v442 = vunpack.c.l.b16 %v434
      %v443 = vunpack.c.h.b16 %v434
      %v444 = vunpack.c.l.b16 %v435
      %v445 = vunpack.c.h.b16 %v435
      %v446 = vunpack.c.l.b16 %v436
      %v447 = vunpack.c.h.b16 %v436
      %v448 = vunpack.c.l.b16 %v437
      %v449 = vunpack.c.h.b16 %v437
      %v450 = vpack.c.b16 %v442, %v442
      %v451 = vpack.c.b16 %v443, %v443
      %v452 = vpack.c.b16 %v444, %v444
      %v453 = vpack.c.b16 %v445, %v445
      %v454 = vpack.c.b16 %v446, %v446
      %v455 = vpack.c.b16 %v447, %v447
      %v456 = vpack.c.b16 %v448, %v448
      %v457 = vpack.c.b16 %v449, %v449
      %vm466 = vcmask 257024
      %467 = vst.msk [vmem:[%s175] sm:$0xf] %vm466, %v450
      %468 = vst.msk [vmem:[%s175 + $0x4] sm:$0xf] %vm466, %v451
      %469 = vst.msk [vmem:[%s175 + $0x8] sm:$0xf] %vm466, %v452
      %470 = vst.msk [vmem:[%s175 + $0xc] sm:$0xf] %vm466, %v453
      %471 = vst.msk [vmem:[%s175 + $0x10] sm:$0xf] %vm466, %v454
      %472 = vst.msk [vmem:[%s175 + $0x14] sm:$0xf] %vm466, %v455
      %473 = vst.msk [vmem:[%s175 + $0x18] sm:$0xf] %vm466, %v456
      %474 = vst.msk [vmem:[%s175 + $0x1c] sm:$0xf] %vm466, %v457
      %s475 = smul.u32 8, %s14
      %p476 = scmp.lt.s32.totalorder %s475, 15
      %s477 = scalar_select %p476, %s475, 15
      %s478 = smul.addr %s477, 4
      %s479 = scalar_lea.vmem %s3, %s478
      // Predicated region
      $region33: #{actor_critic_cnn_forward.2} parent=31 // pred_check
        %p480 = pneg %p100
      $region34: #{actor_critic_cnn_forward.2} parent=31 // pred_check_branch
        %482 = sbr.rel (%p480) target = $region36
      $region35: #{actor_critic_cnn_forward.2} parent=31 // pred_region
        %s483 = smul.u32 8, %s14
      $region36: #{actor_critic_cnn_forward.2} parent=31 // pred_fallthru
        _
    $region32: #{actor_critic_cnn_forward.2} parent=5 // pred_fallthru
      _
    %p484 = scmp.le.s32.totalorder 2, %s9
    // Predicated region
    $region37: #{actor_critic_cnn_forward.2} parent=5 // pred_check
      %p485 = pneg %p484
    $region38: #{actor_critic_cnn_forward.2} parent=5 // pred_check_branch
      %487 = sbr.rel (%p485) target = $region40
    $region39: #{actor_critic_cnn_forward.2} parent=5 // pred_region
      %s488 = ssub.s32 %s9, 2
      // Predicated region
      $region41: #{actor_critic_cnn_forward.2} parent=39 // pred_check
        %p489 = pneg %p106
      $region42: #{actor_critic_cnn_forward.2} parent=39 // pred_check_branch
        %491 = sbr.rel (%p489) target = $region44
      $region43: #{actor_critic_cnn_forward.2} parent=39 // pred_region
        %s492 = smul.u32 8, %s15
        %p493 = scmp.lt.s32.totalorder %s492, 15
        %s494 = scalar_select %p493, %s492, 15
        %s495 = smul.addr %s494, 4
        %s496 = scalar_lea.vmem %s3, %s495
      $region44: #{actor_critic_cnn_forward.2} parent=39 // pred_fallthru
        _
    $region40: #{actor_critic_cnn_forward.2} parent=5 // pred_fallthru
      _
  $region6: #{actor_critic_cnn_forward.2} parent=0 // loop_footer
    %s13 = sadd.s32 1, %s9
  $region7: #{actor_critic_cnn_forward.2} parent=0 // loop_footer_branch
    %8 = sbr.rel target = $region3
  $region8: #{actor_critic_cnn_forward.2} parent=0 // loop_exit
    _

// kernel: actor_critic_cnn_forward.3
$region0: #{actor_critic_cnn_forward.3}
  #allocation0 [shape = 'u32[]', space=smem, size = 0x4, offset = 0x4, fixed_abs, tag = 'smem constant byte address 0x4 - core index']
  #allocation1 [shape = 'u32[144,128]{1,0:T(1,128)}', space=vmem, size = 0x12000, scoped, tag = 'internal scratch']
  %s0 = inlined_call_operand.hbm [shape: bf16[2,8,256], index: 0, kind: input, shape index: {}]
  %s1 = inlined_call_operand.hbm [shape: bf16[512,64], index: 1, kind: input, shape index: {}]
  %s2 = inlined_call_operand.hbm [shape: f32[1,64], index: 2, kind: input, shape index: {}]
  %s3 = inlined_call_operand.hbm [shape: bf16[576,64], index: 3, kind: input, shape index: {}]
  %s4 = inlined_call_operand.hbm [shape: f32[1,64], index: 4, kind: input, shape index: {}]
  %s5 = inlined_call_operand.hbm [shape: bf16[64,1024], index: 5, kind: input, shape index: {}]
  %s6 = inlined_call_operand.hbm [shape: f32[1,1024], index: 6, kind: input, shape index: {}]
  %s7 = inlined_call_operand.hbm [shape: bf16[1024,128], index: 7, kind: input, shape index: {}]
  %s8 = inlined_call_operand.hbm [shape: f32[1,128], index: 8, kind: input, shape index: {}]
  %s9 = inlined_call_operand.hbm [shape: f32[2,128], index: 9, kind: output, shape index: {}]
  %s10 = sld [smem:[#allocation0]]
  $region82: #{actor_critic_cnn_forward.3} parent=0
    _
  %s12 = ssub.s32 1, %s10
  %s13 = scalar_select 0, %s12, %s10
  $region1: #{actor_critic_cnn_forward.3} parent=0
    #allocation2 [shape = 'u8[8192]{0}', space=vmem, size = 0x2000, scoped, tag = 'input window, operand 0, single buffered']
    #allocation3 [shape = 's32[1]{0}', space=sflag, size = 0x4, scoped, tag = 'scoped memory for actor_critic_cnn_forward.3']
    #allocation4 [shape = 's32[1]{0}', space=sflag, size = 0x4, scoped, tag = 'scoped memory for actor_critic_cnn_forward.3']
    #allocation5 [shape = 'u8[131072]{0}', space=vmem, size = 0x20000, scoped, tag = 'input window, operand 1, single buffered']
    #allocation6 [shape = 's32[1]{0}', space=sflag, size = 0x4, scoped, tag = 'scoped memory for actor_critic_cnn_forward.3']
    #allocation7 [shape = 'u8[512]{0}', space=vmem, size = 0x400, scoped, tag = 'input window, operand 2, single buffered']
    #allocation8 [shape = 'u8[147456]{0}', space=vmem, size = 0x24000, scoped, tag = 'input window, operand 3, single buffered']
    #allocation9 [shape = 's32[1]{0}', space=sflag, size = 0x4, scoped, tag = 'scoped memory for actor_critic_cnn_forward.3']
    #allocation10 [shape = 'u8[512]{0}', space=vmem, size = 0x400, scoped, tag = 'input window, operand 4, single buffered']
    #allocation11 [shape = 'u8[131072]{0}', space=vmem, size = 0x20000, scoped, tag = 'input window, operand 5, single buffered']
    #allocation12 [shape = 's32[1]{0}', space=sflag, size = 0x4, scoped, tag = 'scoped memory for actor_critic_cnn_forward.3']
    #allocation13 [shape = 'u8[4096]{0}', space=vmem, size = 0x1000, scoped, tag = 'input window, operand 6, single buffered']
    #allocation14 [shape = 'u8[262144]{0}', space=vmem, size = 0x40000, scoped, tag = 'input window, operand 7, single buffered']
    #allocation15 [shape = 's32[1]{0}', space=sflag, size = 0x4, scoped, tag = 'scoped memory for actor_critic_cnn_forward.3']
    #allocation16 [shape = 'u8[512]{0}', space=vmem, size = 0x400, scoped, tag = 'input window, operand 8, single buffered']
    #allocation17 [shape = 'u8[1024]{0}', space=vmem, size = 0x400, scoped, tag = 'output window, operand 0, single buffered']
    %14 = vsyncpa [#allocation3], 0
    %15 = vsyncpa [#allocation6], 0
    %16 = vsyncpa [#allocation9], 0
    %17 = vsyncpa [#allocation12], 0
    %18 = vsyncpa [#allocation15], 0
    %19 = vsyncpa [#allocation4], 0
    // Predicated region
    $region2: #{actor_critic_cnn_forward.3} parent=1 // pred_check
      _
    $region3: #{actor_critic_cnn_forward.3} parent=1 // pred_check_branch
      %21 = sbr.rel (0) target = $region5
    $region4: #{actor_critic_cnn_forward.3} parent=1 // pred_region
      %s23 = ssub.s32 256, 256
      %24 = vsyncadd [#allocation3], %s23
      %s25 = sshll.u32 [#allocation2], 4
      %s26 = int_to_ptr.vmem [resolvable:$true] %s25
      %31 = dma.hbm_to_vmem [thread:$0]  %s0, 256, %s26, [#allocation3], 128, 128, 8
    $region5: #{actor_critic_cnn_forward.3} parent=1 // pred_fallthru
      _
    // Predicated region
    $region6: #{actor_critic_cnn_forward.3} parent=1 // pred_check
      _
    $region7: #{actor_critic_cnn_forward.3} parent=1 // pred_check_branch
      %33 = sbr.rel (0) target = $region9
    $region8: #{actor_critic_cnn_forward.3} parent=1 // pred_region
      %s35 = ssub.s32 4096, 4096
      %36 = vsyncadd [#allocation6], %s35
      %s37 = sshll.u32 [#allocation5], 4
      %s38 = int_to_ptr.vmem [resolvable:$true] %s37
      %43 = dma.hbm_to_vmem [thread:$0]  %s1, 4096, %s38, [#allocation6], 64, 64, 4
    $region9: #{actor_critic_cnn_forward.3} parent=1 // pred_fallthru
      _
    // Predicated region
    $region10: #{actor_critic_cnn_forward.3} parent=1 // pred_check
      _
    $region11: #{actor_critic_cnn_forward.3} parent=1 // pred_check_branch
      %45 = sbr.rel (0) target = $region13
    $region12: #{actor_critic_cnn_forward.3} parent=1 // pred_region
      %s47 = ssub.s32 16, 16
      %48 = vsyncadd [#allocation6], %s47
      %s50 = sshll.u32 [#allocation7], 4
      %s51 = int_to_ptr.vmem [resolvable:$true] %s50
      %53 = dma.hbm_to_vmem [thread:$0]  %s2, 16, %s51, [#allocation6]
    $region13: #{actor_critic_cnn_forward.3} parent=1 // pred_fallthru
      _
    // Predicated region
    $region14: #{actor_critic_cnn_forward.3} parent=1 // pred_check
      _
    $region15: #{actor_critic_cnn_forward.3} parent=1 // pred_check_branch
      %55 = sbr.rel (0) target = $region17
    $region16: #{actor_critic_cnn_forward.3} parent=1 // pred_region
      %s57 = ssub.s32 4608, 4608
      %58 = vsyncadd [#allocation9], %s57
      %s59 = sshll.u32 [#allocation8], 4
      %s60 = int_to_ptr.vmem [resolvable:$true] %s59
      %65 = dma.hbm_to_vmem [thread:$0]  %s3, 4608, %s60, [#allocation9], 64, 64, 4
    $region17: #{actor_critic_cnn_forward.3} parent=1 // pred_fallthru
      _
    // Predicated region
    $region18: #{actor_critic_cnn_forward.3} parent=1 // pred_check
      _
    $region19: #{actor_critic_cnn_forward.3} parent=1 // pred_check_branch
      %67 = sbr.rel (0) target = $region21
    $region20: #{actor_critic_cnn_forward.3} parent=1 // pred_region
      %s69 = ssub.s32 16, 16
      %70 = vsyncadd [#allocation9], %s69
      %s72 = sshll.u32 [#allocation10], 4
      %s73 = int_to_ptr.vmem [resolvable:$true] %s72
      %75 = dma.hbm_to_vmem [thread:$0]  %s4, 16, %s73, [#allocation9]
    $region21: #{actor_critic_cnn_forward.3} parent=1 // pred_fallthru
      _
    // Predicated region
    $region22: #{actor_critic_cnn_forward.3} parent=1 // pred_check
      _
    $region23: #{actor_critic_cnn_forward.3} parent=1 // pred_check_branch
      %77 = sbr.rel (0) target = $region25
    $region24: #{actor_critic_cnn_forward.3} parent=1 // pred_region
      %s79 = ssub.s32 4096, 4096
      %80 = vsyncadd [#allocation12], %s79
      %s81 = sshll.u32 [#allocation11], 4
      %s82 = int_to_ptr.vmem [resolvable:$true] %s81
      %87 = dma.hbm_to_vmem [thread:$0]  %s5, 4096, %s82, [#allocation12], 512, 512, 32
    $region25: #{actor_critic_cnn_forward.3} parent=1 // pred_fallthru
      _
    // Predicated region
    $region26: #{actor_critic_cnn_forward.3} parent=1 // pred_check
      _
    $region27: #{actor_critic_cnn_forward.3} parent=1 // pred_check_branch
      %89 = sbr.rel (0) target = $region29
    $region28: #{actor_critic_cnn_forward.3} parent=1 // pred_region
      %s91 = ssub.s32 128, 128
      %92 = vsyncadd [#allocation12], %s91
      %s94 = sshll.u32 [#allocation13], 4
      %s95 = int_to_ptr.vmem [resolvable:$true] %s94
      %97 = dma.hbm_to_vmem [thread:$0]  %s6, 128, %s95, [#allocation12]
    $region29: #{actor_critic_cnn_forward.3} parent=1 // pred_fallthru
      _
    // Predicated region
    $region30: #{actor_critic_cnn_forward.3} parent=1 // pred_check
      _
    $region31: #{actor_critic_cnn_forward.3} parent=1 // pred_check_branch
      %99 = sbr.rel (0) target = $region33
    $region32: #{actor_critic_cnn_forward.3} parent=1 // pred_region
      %s101 = ssub.s32 8192, 8192
      %102 = vsyncadd [#allocation15], %s101
      %s103 = sshll.u32 [#allocation14], 4
      %s104 = int_to_ptr.vmem [resolvable:$true] %s103
      %109 = dma.hbm_to_vmem [thread:$0]  %s7, 8192, %s104, [#allocation15], 64, 64, 4
    $region33: #{actor_critic_cnn_forward.3} parent=1 // pred_fallthru
      _
    // Predicated region
    $region34: #{actor_critic_cnn_forward.3} parent=1 // pred_check
      _
    $region35: #{actor_critic_cnn_forward.3} parent=1 // pred_check_branch
      %111 = sbr.rel (0) target = $region37
    $region36: #{actor_critic_cnn_forward.3} parent=1 // pred_region
      %s113 = ssub.s32 16, 16
      %114 = vsyncadd [#allocation15], %s113
      %s116 = sshll.u32 [#allocation16], 4
      %s117 = int_to_ptr.vmem [resolvable:$true] %s116
      %119 = dma.hbm_to_vmem [thread:$0]  %s8, 16, %s117, [#allocation15]
    $region37: #{actor_critic_cnn_forward.3} parent=1 // pred_fallthru
      _
    // Predicated region
    $region38: #{actor_critic_cnn_forward.3} parent=1 // pred_check
      _
    $region39: #{actor_critic_cnn_forward.3} parent=1 // pred_check_branch
      %121 = sbr.rel (0) target = $region41
    $region40: #{actor_critic_cnn_forward.3} parent=1 // pred_region
      %122 = dma.done [#allocation3], 256
    $region41: #{actor_critic_cnn_forward.3} parent=1 // pred_fallthru
      _
    // Predicated region
    $region42: #{actor_critic_cnn_forward.3} parent=1 // pred_check
      _
    $region43: #{actor_critic_cnn_forward.3} parent=1 // pred_check_branch
      %124 = sbr.rel (0) target = $region45
    $region44: #{actor_critic_cnn_forward.3} parent=1 // pred_region
      %125 = dma.done [#allocation6], 4096
    $region45: #{actor_critic_cnn_forward.3} parent=1 // pred_fallthru
      _
    // Predicated region
    $region46: #{actor_critic_cnn_forward.3} parent=1 // pred_check
      _
    $region47: #{actor_critic_cnn_forward.3} parent=1 // pred_check_branch
      %127 = sbr.rel (0) target = $region49
    $region48: #{actor_critic_cnn_forward.3} parent=1 // pred_region
      %128 = dma.done [#allocation6], 16
    $region49: #{actor_critic_cnn_forward.3} parent=1 // pred_fallthru
      _
    // Predicated region
    $region50: #{actor_critic_cnn_forward.3} parent=1 // pred_check
      _
    $region51: #{actor_critic_cnn_forward.3} parent=1 // pred_check_branch
      %130 = sbr.rel (0) target = $region53
    $region52: #{actor_critic_cnn_forward.3} parent=1 // pred_region
      %131 = dma.done [#allocation9], 4608
    $region53: #{actor_critic_cnn_forward.3} parent=1 // pred_fallthru
      _
    // Predicated region
    $region54: #{actor_critic_cnn_forward.3} parent=1 // pred_check
      _
    $region55: #{actor_critic_cnn_forward.3} parent=1 // pred_check_branch
      %133 = sbr.rel (0) target = $region57
    $region56: #{actor_critic_cnn_forward.3} parent=1 // pred_region
      %134 = dma.done [#allocation9], 16
    $region57: #{actor_critic_cnn_forward.3} parent=1 // pred_fallthru
      _
    // Predicated region
    $region58: #{actor_critic_cnn_forward.3} parent=1 // pred_check
      _
    $region59: #{actor_critic_cnn_forward.3} parent=1 // pred_check_branch
      %136 = sbr.rel (0) target = $region61
    $region60: #{actor_critic_cnn_forward.3} parent=1 // pred_region
      %137 = dma.done [#allocation12], 4096
    $region61: #{actor_critic_cnn_forward.3} parent=1 // pred_fallthru
      _
    // Predicated region
    $region62: #{actor_critic_cnn_forward.3} parent=1 // pred_check
      _
    $region63: #{actor_critic_cnn_forward.3} parent=1 // pred_check_branch
      %139 = sbr.rel (0) target = $region65
    $region64: #{actor_critic_cnn_forward.3} parent=1 // pred_region
      %140 = dma.done [#allocation12], 128
    $region65: #{actor_critic_cnn_forward.3} parent=1 // pred_fallthru
      _
    // Predicated region
    $region66: #{actor_critic_cnn_forward.3} parent=1 // pred_check
      _
    $region67: #{actor_critic_cnn_forward.3} parent=1 // pred_check_branch
      %142 = sbr.rel (0) target = $region69
    $region68: #{actor_critic_cnn_forward.3} parent=1 // pred_region
      %143 = dma.done [#allocation15], 8192
    $region69: #{actor_critic_cnn_forward.3} parent=1 // pred_fallthru
      _
    // Predicated region
    $region70: #{actor_critic_cnn_forward.3} parent=1 // pred_check
      _
    $region71: #{actor_critic_cnn_forward.3} parent=1 // pred_check_branch
      %145 = sbr.rel (0) target = $region73
    $region72: #{actor_critic_cnn_forward.3} parent=1 // pred_region
      %146 = dma.done [#allocation15], 16
    $region73: #{actor_critic_cnn_forward.3} parent=1 // pred_fallthru
      _
    %v148 = vld [vmem:[#allocation2] sm:$0x11]
    %v149 = vld [vmem:[#allocation2 + $0x8] sm:$0x11]
    %v150 = vld [vmem:[#allocation2] sm:$0x22]
    %v151 = vld [vmem:[#allocation2 + $0x8] sm:$0x22]
    %v152 = vld [vmem:[#allocation2] sm:$0x44]
    %v153 = vld [vmem:[#allocation2 + $0x8] sm:$0x44]
    %v154 = vld [vmem:[#allocation2] sm:$0x88]
    %v155 = vld [vmem:[#allocation2 + $0x8] sm:$0x88]
    %v156 = vld [vmem:[#allocation5] sm:$0xf]
    %v157 = vld [vmem:[#allocation5 + $0x4] sm:$0xf]
    %v158 = vld [vmem:[#allocation5 + $0x8] sm:$0xf]
    %v159 = vld [vmem:[#allocation5 + $0xc] sm:$0xf]
    %v160 = vld [vmem:[#allocation5 + $0x10] sm:$0xf]
    %v161 = vld [vmem:[#allocation5 + $0x14] sm:$0xf]
    %v162 = vld [vmem:[#allocation5 + $0x18] sm:$0xf]
    %v163 = vld [vmem:[#allocation5 + $0x1c] sm:$0xf]
    %v164 = vld [vmem:[#allocation5 + $0x20] sm:$0xf]
    %v165 = vld [vmem:[#allocation5 + $0x24] sm:$0xf]
    %v166 = vld [vmem:[#allocation5 + $0x28] sm:$0xf]
    %v167 = vld [vmem:[#allocation5 + $0x2c] sm:$0xf]
    %v168 = vld [vmem:[#allocation5 + $0x30] sm:$0xf]
    %v169 = vld [vmem:[#allocation5 + $0x34] sm:$0xf]
    %v170 = vld [vmem:[#allocation5 + $0x38] sm:$0xf]
    %v171 = vld [vmem:[#allocation5 + $0x3c] sm:$0xf]
    %v172 = vld [vmem:[#allocation5 + $0x40] sm:$0xf]
    %v173 = vld [vmem:[#allocation5 + $0x44] sm:$0xf]
    %v174 = vld [vmem:[#allocation5 + $0x48] sm:$0xf]
    %v175 = vld [vmem:[#allocation5 + $0x4c] sm:$0xf]
    %v176 = vld [vmem:[#allocation5 + $0x50] sm:$0xf]
    %v177 = vld [vmem:[#allocation5 + $0x54] sm:$0xf]
    %v178 = vld [vmem:[#allocation5 + $0x58] sm:$0xf]
    %v179 = vld [vmem:[#allocation5 + $0x5c] sm:$0xf]
    %v180 = vld [vmem:[#allocation5 + $0x60] sm:$0xf]
    %v181 = vld [vmem:[#allocation5 + $0x64] sm:$0xf]
    %v182 = vld [vmem:[#allocation5 + $0x68] sm:$0xf]
    %v183 = vld [vmem:[#allocation5 + $0x6c] sm:$0xf]
    %v184 = vld [vmem:[#allocation5 + $0x70] sm:$0xf]
    %v185 = vld [vmem:[#allocation5 + $0x74] sm:$0xf]
    %v186 = vld [vmem:[#allocation5 + $0x78] sm:$0xf]
    %v187 = vld [vmem:[#allocation5 + $0x7c] sm:$0xf]
    %v190 = vunpack.c.l.b16 %v148
    %v191 = vunpack.c.l.b16 %v149
    %v192 = vpack.c.b16 %v190, %v190
    %v193 = vpack.c.b16 %v191, %v191
    %v194 = vunpack.c.l.b16 %v192
    %v195 = vunpack.c.l.b16 %v193
    %v196 = vrot.slane %v194, 1
    %vm197 = vcmask 1041409
    %v198 = vsel %vm197, %v195, %v196
    %v199 = vpack.c.b16 %v198, %v198
    %v217 = vunpack.c.l.b16 %v172
    %v218 = vunpack.c.l.b16 %v173
    %v219 = vunpack.c.l.b16 %v174
    %v220 = vunpack.c.l.b16 %v175
    %v221 = vunpack.c.l.b16 %v176
    %v222 = vunpack.c.l.b16 %v177
    %v223 = vunpack.c.l.b16 %v178
    %v224 = vunpack.c.l.b16 %v179
    %v225 = vunpack.c.l.b16 %v180
    %v226 = vunpack.c.l.b16 %v181
    %v227 = vunpack.c.l.b16 %v182
    %v228 = vunpack.c.l.b16 %v183
    %v229 = vunpack.c.l.b16 %v184
    %v230 = vunpack.c.l.b16 %v185
    %v231 = vunpack.c.l.b16 %v186
    %v232 = vunpack.c.l.b16 %v187
    %v233 = vpack.c.b16 %v218, %v217
    %v234 = vpack.c.b16 %v220, %v219
    %v235 = vpack.c.b16 %v222, %v221
    %v236 = vpack.c.b16 %v224, %v223
    %v237 = vpack.c.b16 %v226, %v225
    %v238 = vpack.c.b16 %v228, %v227
    %v239 = vpack.c.b16 %v230, %v229
    %v240 = vpack.c.b16 %v232, %v231
    %249 = vmatprep.subr.bf16.mxu0 0
    %250 = vmatpush1.bf16.msra.mxu0 %v233
    %251 = vmatprep.subr.bf16.mxu0 0
    %252 = vmatpush1.bf16.msra.mxu0 %v234
    %253 = vmatprep.subr.bf16.mxu0 0
    %254 = vmatpush1.bf16.msra.mxu0 %v235
    %255 = vmatprep.subr.bf16.mxu0 0
    %256 = vmatpush1.bf16.msra.mxu0 %v236
    %257 = vmatprep.subr.bf16.mxu0 0
    %258 = vmatpush1.bf16.msra.mxu0 %v237
    %259 = vmatprep.subr.bf16.mxu0 0
    %260 = vmatpush1.bf16.msra.mxu0 %v238
    %261 = vmatprep.subr.bf16.mxu0 0
    %262 = vmatpush1.bf16.msra.mxu0 %v239
    %263 = vmatprep.subr.bf16.mxu0 0
    %264 = vmatpush1.bf16.msra.mxu0 %v240
    %265 = vmatprep.subr.bf16.mxu0 0
    %266 = vmatpush1.bf16.msra.mxu0 0
    %267 = vmatprep.subr.bf16.mxu0 0
    %268 = vmatpush1.bf16.msra.mxu0 0
    %269 = vmatprep.subr.bf16.mxu0 0
    %270 = vmatpush1.bf16.msra.mxu0 0
    %271 = vmatprep.subr.bf16.mxu0 0
    %272 = vmatpush1.bf16.msra.mxu0 0
    %273 = vmatprep.subr.bf16.mxu0 0
    %274 = vmatpush1.bf16.msra.mxu0 0
    %275 = vmatprep.subr.bf16.mxu0 0
    %276 = vmatpush1.bf16.msra.mxu0 0
    %277 = vmatprep.subr.bf16.mxu0 0
    %278 = vmatpush1.bf16.msra.mxu0 0
    %279 = vmatprep.subr.bf16.mxu0 0
    %280 = vmatpush1.bf16.msra.mxu0 0
    %281 = vmatprep.mubr.bf16.mxu0 0
    %282 = vmatmul.mubr.bf16.gmra.mrb[0].mxu0 %v199
    %v283 = vpop.f32.mrb[0].mxu0
    %v284 = vadd.f32 0.0, %v283
    %v285 = vpop.f32.mrb[0].mxu0
    %v286 = vpop.f32.mrb[0].mxu0
    %v287 = vpop.f32.mrb[0].mxu0
    %288 = vdwg.mxu0
    %v289 = vrot.slane %v195, 7
    %v290 = vsel %vm197, %v289, %v194
    %v291 = vpack.c.b16 %v290, %v290
    %v309 = vunpack.c.l.b16 %v156
    %v310 = vunpack.c.l.b16 %v157
    %v311 = vunpack.c.l.b16 %v158
    %v312 = vunpack.c.l.b16 %v159
    %v313 = vunpack.c.l.b16 %v160
    %v314 = vunpack.c.l.b16 %v161
    %v315 = vunpack.c.l.b16 %v162
    %v316 = vunpack.c.l.b16 %v163
    %v317 = vunpack.c.l.b16 %v164
    %v318 = vunpack.c.l.b16 %v165
    %v319 = vunpack.c.l.b16 %v166
    %v320 = vunpack.c.l.b16 %v167
    %v321 = vunpack.c.l.b16 %v168
    %v322 = vunpack.c.l.b16 %v169
    %v323 = vunpack.c.l.b16 %v170
    %v324 = vunpack.c.l.b16 %v171
    %v325 = vpack.c.b16 %v310, %v309
    %v326 = vpack.c.b16 %v312, %v311
    %v327 = vpack.c.b16 %v314, %v313
    %v328 = vpack.c.b16 %v316, %v315
    %v329 = vpack.c.b16 %v318, %v317
    %v330 = vpack.c.b16 %v320, %v319
    %v331 = vpack.c.b16 %v322, %v321
    %v332 = vpack.c.b16 %v324, %v323
    %341 = vmatprep.subr.bf16.mxu0 0
    %342 = vmatpush1.bf16.msra.mxu0 %v325
    %343 = vmatprep.subr.bf16.mxu0 0
    %344 = vmatpush1.bf16.msra.mxu0 %v326
    %345 = vmatprep.subr.bf16.mxu0 0
    %346 = vmatpush1.bf16.msra.mxu0 %v327
    %347 = vmatprep.subr.bf16.mxu0 0
    %348 = vmatpush1.bf16.msra.mxu0 %v328
    %349 = vmatprep.subr.bf16.mxu0 0
    %350 = vmatpush1.bf16.msra.mxu0 %v329
    %351 = vmatprep.subr.bf16.mxu0 0
    %352 = vmatpush1.bf16.msra.mxu0 %v330
    %353 = vmatprep.subr.bf16.mxu0 0
    %354 = vmatpush1.bf16.msra.mxu0 %v331
    %355 = vmatprep.subr.bf16.mxu0 0
    %356 = vmatpush1.bf16.msra.mxu0 %v332
    %357 = vmatprep.subr.bf16.mxu0 0
    %358 = vmatpush1.bf16.msra.mxu0 0
    %359 = vmatprep.subr.bf16.mxu0 0
    %360 = vmatpush1.bf16.msra.mxu0 0
    %361 = vmatprep.subr.bf16.mxu0 0
    %362 = vmatpush1.bf16.msra.mxu0 0
    %363 = vmatprep.subr.bf16.mxu0 0
    %364 = vmatpush1.bf16.msra.mxu0 0
    %365 = vmatprep.subr.bf16.mxu0 0
    %366 = vmatpush1.bf16.msra.mxu0 0
    %367 = vmatprep.subr.bf16.mxu0 0
    %368 = vmatpush1.bf16.msra.mxu0 0
    %369 = vmatprep.subr.bf16.mxu0 0
    %370 = vmatpush1.bf16.msra.mxu0 0
    %371 = vmatprep.subr.bf16.mxu0 0
    %372 = vmatpush1.bf16.msra.mxu0 0
    %373 = vmatprep.mubr.bf16.mxu0 0
    %374 = vmatmul.mubr.bf16.gmra.mrb[0].mxu0 %v291
    %v375 = vpop.f32.mrb[0].mxu0
    %v376 = vadd.f32 %v284, %v375
    %v377 = vpop.f32.mrb[0].mxu0
    %v378 = vpop.f32.mrb[0].mxu0
    %v379 = vpop.f32.mrb[0].mxu0
    %380 = vdwg.mxu0
    %v381 = vld [vmem:[#allocation5 + $0x80] sm:$0xf]
    %v382 = vld [vmem:[#allocation5 + $0x84] sm:$0xf]
    %v383 = vld [vmem:[#allocation5 + $0x88] sm:$0xf]
    %v384 = vld [vmem:[#allocation5 + $0x8c] sm:$0xf]
    %v385 = vld [vmem:[#allocation5 + $0x90] sm:$0xf]
    %v386 = vld [vmem:[#allocation5 + $0x94] sm:$0xf]
    %v387 = vld [vmem:[#allocation5 + $0x98] sm:$0xf]
    %v388 = vld [vmem:[#allocation5 + $0x9c] sm:$0xf]
    %v389 = vld [vmem:[#allocation5 + $0xa0] sm:$0xf]
    %v390 = vld [vmem:[#allocation5 + $0xa4] sm:$0xf]
    %v391 = vld [vmem:[#allocation5 + $0xa8] sm:$0xf]
    %v392 = vld [vmem:[#allocation5 + $0xac] sm:$0xf]
    %v393 = vld [vmem:[#allocation5 + $0xb0] sm:$0xf]
    %v394 = vld [vmem:[#allocation5 + $0xb4] sm:$0xf]
    %v395 = vld [vmem:[#allocation5 + $0xb8] sm:$0xf]
    %v396 = vld [vmem:[#allocation5 + $0xbc] sm:$0xf]
    %v399 = vunpack.c.l.b16 %v150
    %v400 = vunpack.c.l.b16 %v151
    %v401 = vpack.c.b16 %v399, %v399
    %v402 = vpack.c.b16 %v400, %v400
    %v403 = vunpack.c.l.b16 %v401
    %v404 = vunpack.c.l.b16 %v402
    %v405 = vrot.slane %v403, 2
    %v406 = vrot.slane %v404, 1
    %v407 = vsel %vm197, %v406, %v405
    %v408 = vpack.c.b16 %v407, %v407
    %v426 = vunpack.c.l.b16 %v381
    %v427 = vunpack.c.l.b16 %v382
    %v428 = vunpack.c.l.b16 %v383
    %v429 = vunpack.c.l.b16 %v384
    %v430 = vunpack.c.l.b16 %v385
    %v431 = vunpack.c.l.b16 %v386
    %v432 = vunpack.c.l.b16 %v387
    %v433 = vunpack.c.l.b16 %v388
    %v434 = vunpack.c.l.b16 %v389
    %v435 = vunpack.c.l.b16 %v390
    %v436 = vunpack.c.l.b16 %v391
    %v437 = vunpack.c.l.b16 %v392
    %v438 = vunpack.c.l.b16 %v393
    %v439 = vunpack.c.l.b16 %v394
    %v440 = vunpack.c.l.b16 %v395
    %v441 = vunpack.c.l.b16 %v396
    %v442 = vpack.c.b16 %v427, %v426
    %v443 = vpack.c.b16 %v429, %v428
    %v444 = vpack.c.b16 %v431, %v430
    %v445 = vpack.c.b16 %v433, %v432
    %v446 = vpack.c.b16 %v435, %v434
    %v447 = vpack.c.b16 %v437, %v436
    %v448 = vpack.c.b16 %v439, %v438
    %v449 = vpack.c.b16 %v441, %v440
    %458 = vmatprep.subr.bf16.mxu0 0
    %459 = vmatpush1.bf16.msra.mxu0 %v442
    %460 = vmatprep.subr.bf16.mxu0 0
    %461 = vmatpush1.bf16.msra.mxu0 %v443
    %462 = vmatprep.subr.bf16.mxu0 0
    %463 = vmatpush1.bf16.msra.mxu0 %v444
    %464 = vmatprep.subr.bf16.mxu0 0
    %465 = vmatpush1.bf16.msra.mxu0 %v445
    %466 = vmatprep.subr.bf16.mxu0 0
    %467 = vmatpush1.bf16.msra.mxu0 %v446
    %468 = vmatprep.subr.bf16.mxu0 0
    %469 = vmatpush1.bf16.msra.mxu0 %v447
    %470 = vmatprep.subr.bf16.mxu0 0
    %471 = vmatpush1.bf16.msra.mxu0 %v448
    %472 = vmatprep.subr.bf16.mxu0 0
    %473 = vmatpush1.bf16.msra.mxu0 %v449
    %474 = vmatprep.subr.bf16.mxu0 0
    %475 = vmatpush1.bf16.msra.mxu0 0
    %476 = vmatprep.subr.bf16.mxu0 0
    %477 = vmatpush1.bf16.msra.mxu0 0
    %478 = vmatprep.subr.bf16.mxu0 0
    %479 = vmatpush1.bf16.msra.mxu0 0
    %480 = vmatprep.subr.bf16.mxu0 0
    %481 = vmatpush1.bf16.msra.mxu0 0
    %482 = vmatprep.subr.bf16.mxu0 0
    %483 = vmatpush1.bf16.msra.mxu0 0
    %484 = vmatprep.subr.bf16.mxu0 0
    %485 = vmatpush1.bf16.msra.mxu0 0
    %486 = vmatprep.subr.bf16.mxu0 0
    %487 = vmatpush1.bf16.msra.mxu0 0
    %488 = vmatprep.subr.bf16.mxu0 0
    %489 = vmatpush1.bf16.msra.mxu0 0
    %490 = vmatprep.mubr.bf16.mxu0 0
    %491 = vmatmul.mubr.bf16.gmra.mrb[0].mxu0 %v408
    %v492 = vpop.f32.mrb[0].mxu0
    %v493 = vadd.f32 0.0, %v492
    %v494 = vpop.f32.mrb[0].mxu0
    %v495 = vpop.f32.mrb[0].mxu0
    %v496 = vpop.f32.mrb[0].mxu0
    %497 = vdwg.mxu0
    %v498 = vadd.f32 %v376, %v493
    %v499 = vld [vmem:[#allocation5 + $0xc0] sm:$0xf]
    %v500 = vld [vmem:[#allocation5 + $0xc4] sm:$0xf]
    %v501 = vld [vmem:[#allocation5 + $0xc8] sm:$0xf]
    %v502 = vld [vmem:[#allocation5 + $0xcc] sm:$0xf]
    %v503 = vld [vmem:[#allocation5 + $0xd0] sm:$0xf]
    %v504 = vld [vmem:[#allocation5 + $0xd4] sm:$0xf]
    %v505 = vld [vmem:[#allocation5 + $0xd8] sm:$0xf]
    %v506 = vld [vmem:[#allocation5 + $0xdc] sm:$0xf]
    %v507 = vld [vmem:[#allocation5 + $0xe0] sm:$0xf]
    %v508 = vld [vmem:[#allocation5 + $0xe4] sm:$0xf]
    %v509 = vld [vmem:[#allocation5 + $0xe8] sm:$0xf]
    %v510 = vld [vmem:[#allocation5 + $0xec] sm:$0xf]
    %v511 = vld [vmem:[#allocation5 + $0xf0] sm:$0xf]
    %v512 = vld [vmem:[#allocation5 + $0xf4] sm:$0xf]
    %v513 = vld [vmem:[#allocation5 + $0xf8] sm:$0xf]
    %v514 = vld [vmem:[#allocation5 + $0xfc] sm:$0xf]
    %v515 = vrot.slane %v403, 3
    %v516 = vrot.slane %v404, 2
    %v517 = vsel %vm197, %v516, %v515
    %v518 = vpack.c.b16 %v517, %v517
    %v536 = vunpack.c.l.b16 %v499
    %v537 = vunpack.c.l.b16 %v500
    %v538 = vunpack.c.l.b16 %v501
    %v539 = vunpack.c.l.b16 %v502
    %v540 = vunpack.c.l.b16 %v503
    %v541 = vunpack.c.l.b16 %v504
    %v542 = vunpack.c.l.b16 %v505
    %v543 = vunpack.c.l.b16 %v506
    %v544 = vunpack.c.l.b16 %v507
    %v545 = vunpack.c.l.b16 %v508
    %v546 = vunpack.c.l.b16 %v509
    %v547 = vunpack.c.l.b16 %v510
    %v548 = vunpack.c.l.b16 %v511
    %v549 = vunpack.c.l.b16 %v512
    %v550 = vunpack.c.l.b16 %v513
    %v551 = vunpack.c.l.b16 %v514
    %v552 = vpack.c.b16 %v537, %v536
    %v553 = vpack.c.b16 %v539, %v538
    %v554 = vpack.c.b16 %v541, %v540
    %v555 = vpack.c.b16 %v543, %v542
    %v556 = vpack.c.b16 %v545, %v544
    %v557 = vpack.c.b16 %v547, %v546
    %v558 = vpack.c.b16 %v549, %v548
    %v559 = vpack.c.b16 %v551, %v550
    %568 = vmatprep.subr.bf16.mxu0 0
    %569 = vmatpush1.bf16.msra.mxu0 %v552
    %570 = vmatprep.subr.bf16.mxu0 0
    %571 = vmatpush1.bf16.msra.mxu0 %v553
    %572 = vmatprep.subr.bf16.mxu0 0
    %573 = vmatpush1.bf16.msra.mxu0 %v554
    %574 = vmatprep.subr.bf16.mxu0 0
    %575 = vmatpush1.bf16.msra.mxu0 %v555
    %576 = vmatprep.subr.bf16.mxu0 0
    %577 = vmatpush1.bf16.msra.mxu0 %v556
    %578 = vmatprep.subr.bf16.mxu0 0
    %579 = vmatpush1.bf16.msra.mxu0 %v557
    %580 = vmatprep.subr.bf16.mxu0 0
    %581 = vmatpush1.bf16.msra.mxu0 %v558
    %582 = vmatprep.subr.bf16.mxu0 0
    %583 = vmatpush1.bf16.msra.mxu0 %v559
    %584 = vmatprep.subr.bf16.mxu0 0
    %585 = vmatpush1.bf16.msra.mxu0 0
    %586 = vmatprep.subr.bf16.mxu0 0
    %587 = vmatpush1.bf16.msra.mxu0 0
    %588 = vmatprep.subr.bf16.mxu0 0
    %589 = vmatpush1.bf16.msra.mxu0 0
    %590 = vmatprep.subr.bf16.mxu0 0
    %591 = vmatpush1.bf16.msra.mxu0 0
    %592 = vmatprep.subr.bf16.mxu0 0
    %593 = vmatpush1.bf16.msra.mxu0 0
    %594 = vmatprep.subr.bf16.mxu0 0
    %595 = vmatpush1.bf16.msra.mxu0 0
    %596 = vmatprep.subr.bf16.mxu0 0
    %597 = vmatpush1.bf16.msra.mxu0 0
    %598 = vmatprep.subr.bf16.mxu0 0
    %599 = vmatpush1.bf16.msra.mxu0 0
    %600 = vmatprep.mubr.bf16.mxu0 0
    %601 = vmatmul.mubr.bf16.gmra.mrb[0].mxu0 %v518
    %v602 = vpop.f32.mrb[0].mxu0
    %v603 = vadd.f32 0.0, %v602
    %v604 = vpop.f32.mrb[0].mxu0
    %v605 = vpop.f32.mrb[0].mxu0
    %v606 = vpop.f32.mrb[0].mxu0
    %607 = vdwg.mxu0
    %v608 = vadd.f32 %v498, %v603
    %v609 = vld [vmem:[#allocation7] sm:$0x1]
    %v611 = vlaneseq
    %v612 = vshrl.u32 %v611, 7
    %v613 = vsub.s32 0, %v612
    %v614 = vrot.slane %v609, %v613
    %v616 = vadd.f32 %v608, %v614
    %v617 = vmax.f32 %v616, 0.0
    %v618 = vpack.c.bf16 %v617, %v617
    %v619 = vld [vmem:[#allocation8] sm:$0xf]
    %v620 = vld [vmem:[#allocation8 + $0x4] sm:$0xf]
    %v621 = vld [vmem:[#allocation8 + $0x8] sm:$0xf]
    %v622 = vld [vmem:[#allocation8 + $0xc] sm:$0xf]
    %v623 = vld [vmem:[#allocation8 + $0x10] sm:$0xf]
    %v624 = vld [vmem:[#allocation8 + $0x14] sm:$0xf]
    %v625 = vld [vmem:[#allocation8 + $0x18] sm:$0xf]
    %v626 = vld [vmem:[#allocation8 + $0x1c] sm:$0xf]
    %v627 = vunpack.c.h.b16 %v148
    %v628 = vunpack.c.h.b16 %v149
    %v629 = vpack.c.b16 %v627, %v627
    %v630 = vpack.c.b16 %v628, %v628
    %v631 = vunpack.c.l.b16 %v629
    %v632 = vunpack.c.l.b16 %v630
    %v633 = vrot.slane %v631, 1
    %v634 = vsel %vm197, %v632, %v633
    %v635 = vpack.c.b16 %v634, %v634
    %636 = vrot.lane.b32.xlu0 %v199, 64
    %v637 = vpop.permute.xlu0 %636
    %638 = vrot.lane.b32.xlu0 %v635, 64
    %v639 = vpop.permute.xlu0 %638
    %vm640 = vcmask 523264
    %v641 = vsel %vm640, %v637, %v639
    %643 = vmatprep.subr.bf16.mxu0 0
    %644 = vmatpush1.bf16.msra.mxu0 %v233
    %645 = vmatprep.subr.bf16.mxu0 0
    %646 = vmatpush1.bf16.msra.mxu0 %v234
    %647 = vmatprep.subr.bf16.mxu0 0
    %648 = vmatpush1.bf16.msra.mxu0 %v235
    %649 = vmatprep.subr.bf16.mxu0 0
    %650 = vmatpush1.bf16.msra.mxu0 %v236
    %651 = vmatprep.subr.bf16.mxu0 0
    %652 = vmatpush1.bf16.msra.mxu0 %v237
    %653 = vmatprep.subr.bf16.mxu0 0
    %654 = vmatpush1.bf16.msra.mxu0 %v238
    %655 = vmatprep.subr.bf16.mxu0 0
    %656 = vmatpush1.bf16.msra.mxu0 %v239
    %657 = vmatprep.subr.bf16.mxu0 0
    %658 = vmatpush1.bf16.msra.mxu0 %v240
    %659 = vmatprep.subr.bf16.mxu0 0
    %660 = vmatpush1.bf16.msra.mxu0 0
    %661 = vmatprep.subr.bf16.mxu0 0
    %662 = vmatpush1.bf16.msra.mxu0 0
    %663 = vmatprep.subr.bf16.mxu0 0
    %664 = vmatpush1.bf16.msra.mxu0 0
    %665 = vmatprep.subr.bf16.mxu0 0
    %666 = vmatpush1.bf16.msra.mxu0 0
    %667 = vmatprep.subr.bf16.mxu0 0
    %668 = vmatpush1.bf16.msra.mxu0 0
    %669 = vmatprep.subr.bf16.mxu0 0
    %670 = vmatpush1.bf16.msra.mxu0 0
    %671 = vmatprep.subr.bf16.mxu0 0
    %672 = vmatpush1.bf16.msra.mxu0 0
    %673 = vmatprep.subr.bf16.mxu0 0
    %674 = vmatpush1.bf16.msra.mxu0 0
    %675 = vmatprep.mubr.bf16.mxu0 0
    %676 = vmatmul.mubr.bf16.gmra.mrb[0].mxu0 %v641
    %v677 = vpop.f32.mrb[0].mxu0
    %v678 = vadd.f32 0.0, %v677
    %v679 = vpop.f32.mrb[0].mxu0
    %v680 = vpop.f32.mrb[0].mxu0
    %v681 = vpop.f32.mrb[0].mxu0
    %682 = vdwg.mxu0
    %v683 = vrot.slane %v632, 7
    %v684 = vsel %vm197, %v683, %v631
    %v685 = vpack.c.b16 %v684, %v684
    %686 = vrot.lane.b32.xlu0 %v291, 64
    %v687 = vpop.permute.xlu0 %686
    %688 = vrot.lane.b32.xlu0 %v685, 64
    %v689 = vpop.permute.xlu0 %688
    %v690 = vsel %vm640, %v687, %v689
    %692 = vmatprep.subr.bf16.mxu0 0
    %693 = vmatpush1.bf16.msra.mxu0 %v325
    %694 = vmatprep.subr.bf16.mxu0 0
    %695 = vmatpush1.bf16.msra.mxu0 %v326
    %696 = vmatprep.subr.bf16.mxu0 0
    %697 = vmatpush1.bf16.msra.mxu0 %v327
    %698 = vmatprep.subr.bf16.mxu0 0
    %699 = vmatpush1.bf16.msra.mxu0 %v328
    %700 = vmatprep.subr.bf16.mxu0 0
    %701 = vmatpush1.bf16.msra.mxu0 %v329
    %702 = vmatprep.subr.bf16.mxu0 0
    %703 = vmatpush1.bf16.msra.mxu0 %v330
    %704 = vmatprep.subr.bf16.mxu0 0
    %705 = vmatpush1.bf16.msra.mxu0 %v331
    %706 = vmatprep.subr.bf16.mxu0 0
    %707 = vmatpush1.bf16.msra.mxu0 %v332
    %708 = vmatprep.subr.bf16.mxu0 0
    %709 = vmatpush1.bf16.msra.mxu0 0
    %710 = vmatprep.subr.bf16.mxu0 0
    %711 = vmatpush1.bf16.msra.mxu0 0
    %712 = vmatprep.subr.bf16.mxu0 0
    %713 = vmatpush1.bf16.msra.mxu0 0
    %714 = vmatprep.subr.bf16.mxu0 0
    %715 = vmatpush1.bf16.msra.mxu0 0
    %716 = vmatprep.subr.bf16.mxu0 0
    %717 = vmatpush1.bf16.msra.mxu0 0
    %718 = vmatprep.subr.bf16.mxu0 0
    %719 = vmatpush1.bf16.msra.mxu0 0
    %720 = vmatprep.subr.bf16.mxu0 0
    %721 = vmatpush1.bf16.msra.mxu0 0
    %722 = vmatprep.subr.bf16.mxu0 0
    %723 = vmatpush1.bf16.msra.mxu0 0
    %724 = vmatprep.mubr.bf16.mxu0 0
    %725 = vmatmul.mubr.bf16.gmra.mrb[0].mxu0 %v690
    %v726 = vpop.f32.mrb[0].mxu0
    %v727 = vadd.f32 %v678, %v726
    %v728 = vpop.f32.mrb[0].mxu0
    %v729 = vpop.f32.mrb[0].mxu0
    %v730 = vpop.f32.mrb[0].mxu0
    %731 = vdwg.mxu0
    %v732 = vunpack.c.h.b16 %v150
    %v733 = vunpack.c.h.b16 %v151
    %v734 = vpack.c.b16 %v732, %v732
    %v735 = vpack.c.b16 %v733, %v733
    %v736 = vunpack.c.l.b16 %v734
    %v737 = vunpack.c.l.b16 %v735
    %v738 = vrot.slane %v736, 2
    %v739 = vrot.slane %v737, 1
    %v740 = vsel %vm197, %v739, %v738
    %v741 = vpack.c.b16 %v740, %v740
    %742 = vrot.lane.b32.xlu0 %v408, 64
    %v743 = vpop.permute.xlu0 %742
    %744 = vrot.lane.b32.xlu0 %v741, 64
    %v745 = vpop.permute.xlu0 %744
    %v746 = vsel %vm640, %v743, %v745
    %748 = vmatprep.subr.bf16.mxu0 0
    %749 = vmatpush1.bf16.msra.mxu0 %v442
    %750 = vmatprep.subr.bf16.mxu0 0
    %751 = vmatpush1.bf16.msra.mxu0 %v443
    %752 = vmatprep.subr.bf16.mxu0 0
    %753 = vmatpush1.bf16.msra.mxu0 %v444
    %754 = vmatprep.subr.bf16.mxu0 0
    %755 = vmatpush1.bf16.msra.mxu0 %v445
    %756 = vmatprep.subr.bf16.mxu0 0
    %757 = vmatpush1.bf16.msra.mxu0 %v446
    %758 = vmatprep.subr.bf16.mxu0 0
    %759 = vmatpush1.bf16.msra.mxu0 %v447
    %760 = vmatprep.subr.bf16.mxu0 0
    %761 = vmatpush1.bf16.msra.mxu0 %v448
    %762 = vmatprep.subr.bf16.mxu0 0
    %763 = vmatpush1.bf16.msra.mxu0 %v449
    %764 = vmatprep.subr.bf16.mxu0 0
    %765 = vmatpush1.bf16.msra.mxu0 0
    %766 = vmatprep.subr.bf16.mxu0 0
    %767 = vmatpush1.bf16.msra.mxu0 0
    %768 = vmatprep.subr.bf16.mxu0 0
    %769 = vmatpush1.bf16.msra.mxu0 0
    %770 = vmatprep.subr.bf16.mxu0 0
    %771 = vmatpush1.bf16.msra.mxu0 0
    %772 = vmatprep.subr.bf16.mxu0 0
    %773 = vmatpush1.bf16.msra.mxu0 0
    %774 = vmatprep.subr.bf16.mxu0 0
    %775 = vmatpush1.bf16.msra.mxu0 0
    %776 = vmatprep.subr.bf16.mxu0 0
    %777 = vmatpush1.bf16.msra.mxu0 0
    %778 = vmatprep.subr.bf16.mxu0 0
    %779 = vmatpush1.bf16.msra.mxu0 0
    %780 = vmatprep.mubr.bf16.mxu0 0
    %781 = vmatmul.mubr.bf16.gmra.mrb[0].mxu0 %v746
    %v782 = vpop.f32.mrb[0].mxu0
    %v783 = vadd.f32 0.0, %v782
    %v784 = vpop.f32.mrb[0].mxu0
    %v785 = vpop.f32.mrb[0].mxu0
    %v786 = vpop.f32.mrb[0].mxu0
    %787 = vdwg.mxu0
    %v788 = vadd.f32 %v727, %v783
    %v789 = vrot.slane %v736, 3
    %v790 = vrot.slane %v737, 2
    %v791 = vsel %vm197, %v790, %v789
    %v792 = vpack.c.b16 %v791, %v791
    %793 = vrot.lane.b32.xlu0 %v518, 64
    %v794 = vpop.permute.xlu0 %793
    %795 = vrot.lane.b32.xlu0 %v792, 64
    %v796 = vpop.permute.xlu0 %795
    %v797 = vsel %vm640, %v794, %v796
    %799 = vmatprep.subr.bf16.mxu0 0
    %800 = vmatpush1.bf16.msra.mxu0 %v552
    %801 = vmatprep.subr.bf16.mxu0 0
    %802 = vmatpush1.bf16.msra.mxu0 %v553
    %803 = vmatprep.subr.bf16.mxu0 0
    %804 = vmatpush1.bf16.msra.mxu0 %v554
    %805 = vmatprep.subr.bf16.mxu0 0
    %806 = vmatpush1.bf16.msra.mxu0 %v555
    %807 = vmatprep.subr.bf16.mxu0 0
    %808 = vmatpush1.bf16.msra.mxu0 %v556
    %809 = vmatprep.subr.bf16.mxu0 0
    %810 = vmatpush1.bf16.msra.mxu0 %v557
    %811 = vmatprep.subr.bf16.mxu0 0
    %812 = vmatpush1.bf16.msra.mxu0 %v558
    %813 = vmatprep.subr.bf16.mxu0 0
    %814 = vmatpush1.bf16.msra.mxu0 %v559
    %815 = vmatprep.subr.bf16.mxu0 0
    %816 = vmatpush1.bf16.msra.mxu0 0
    %817 = vmatprep.subr.bf16.mxu0 0
    %818 = vmatpush1.bf16.msra.mxu0 0
    %819 = vmatprep.subr.bf16.mxu0 0
    %820 = vmatpush1.bf16.msra.mxu0 0
    %821 = vmatprep.subr.bf16.mxu0 0
    %822 = vmatpush1.bf16.msra.mxu0 0
    %823 = vmatprep.subr.bf16.mxu0 0
    %824 = vmatpush1.bf16.msra.mxu0 0
    %825 = vmatprep.subr.bf16.mxu0 0
    %826 = vmatpush1.bf16.msra.mxu0 0
    %827 = vmatprep.subr.bf16.mxu0 0
    %828 = vmatpush1.bf16.msra.mxu0 0
    %829 = vmatprep.subr.bf16.mxu0 0
    %830 = vmatpush1.bf16.msra.mxu0 0
    %831 = vmatprep.mubr.bf16.mxu0 0
    %832 = vmatmul.mubr.bf16.gmra.mrb[0].mxu0 %v797
    %v833 = vpop.f32.mrb[0].mxu0
    %v834 = vadd.f32 0.0, %v833
    %v835 = vpop.f32.mrb[0].mxu0
    %v836 = vpop.f32.mrb[0].mxu0
    %v837 = vpop.f32.mrb[0].mxu0
    %838 = vdwg.mxu0
    %v839 = vadd.f32 %v788, %v834
    %v840 = vadd.f32 %v839, %v614
    %v841 = vmax.f32 %v840, 0.0
    %v842 = vpack.c.bf16 %v841, %v841
    %v843 = vld [vmem:[#allocation8 + $0x20] sm:$0xf]
    %v844 = vld [vmem:[#allocation8 + $0x24] sm:$0xf]
    %v845 = vld [vmem:[#allocation8 + $0x28] sm:$0xf]
    %v846 = vld [vmem:[#allocation8 + $0x2c] sm:$0xf]
    %v847 = vld [vmem:[#allocation8 + $0x30] sm:$0xf]
    %v848 = vld [vmem:[#allocation8 + $0x34] sm:$0xf]
    %v849 = vld [vmem:[#allocation8 + $0x38] sm:$0xf]
    %v850 = vld [vmem:[#allocation8 + $0x3c] sm:$0xf]
    %v859 = vunpack.c.l.b16 %v843
    %v860 = vunpack.c.l.b16 %v844
    %v861 = vunpack.c.l.b16 %v845
    %v862 = vunpack.c.l.b16 %v846
    %v863 = vunpack.c.l.b16 %v847
    %v864 = vunpack.c.l.b16 %v848
    %v865 = vunpack.c.l.b16 %v849
    %v866 = vunpack.c.l.b16 %v850
    %v867 = vpack.c.b16 %v860, %v859
    %v868 = vpack.c.b16 %v862, %v861
    %v869 = vpack.c.b16 %v864, %v863
    %v870 = vpack.c.b16 %v866, %v865
    %vm875 = vcmask 523264
    %v877 = vsel %vm875, %v842, 0
    %879 = vmatprep.subr.bf16.mxu0 0
    %880 = vmatpush1.bf16.msra.mxu0 %v867
    %881 = vmatprep.subr.bf16.mxu0 0
    %882 = vmatpush1.bf16.msra.mxu0 %v868
    %883 = vmatprep.subr.bf16.mxu0 0
    %884 = vmatpush1.bf16.msra.mxu0 %v869
    %885 = vmatprep.subr.bf16.mxu0 0
    %886 = vmatpush1.bf16.msra.mxu0 %v870
    %887 = vmatprep.subr.bf16.mxu0 0
    %888 = vmatpush1.bf16.msra.mxu0 0
    %889 = vmatprep.subr.bf16.mxu0 0
    %890 = vmatpush1.bf16.msra.mxu0 0
    %891 = vmatprep.subr.bf16.mxu0 0
    %892 = vmatpush1.bf16.msra.mxu0 0
    %893 = vmatprep.subr.bf16.mxu0 0
    %894 = vmatpush1.bf16.msra.mxu0 0
    %895 = vmatprep.subr.bf16.mxu0 0
    %896 = vmatpush1.bf16.msra.mxu0 0
    %897 = vmatprep.subr.bf16.mxu0 0
    %898 = vmatpush1.bf16.msra.mxu0 0
    %899 = vmatprep.subr.bf16.mxu0 0
    %900 = vmatpush1.bf16.msra.mxu0 0
    %901 = vmatprep.subr.bf16.mxu0 0
    %902 = vmatpush1.bf16.msra.mxu0 0
    %903 = vmatprep.subr.bf16.mxu0 0
    %904 = vmatpush1.bf16.msra.mxu0 0
    %905 = vmatprep.subr.bf16.mxu0 0
    %906 = vmatpush1.bf16.msra.mxu0 0
    %907 = vmatprep.subr.bf16.mxu0 0
    %908 = vmatpush1.bf16.msra.mxu0 0
    %909 = vmatprep.subr.bf16.mxu0 0
    %910 = vmatpush1.bf16.msra.mxu0 0
    %911 = vmatprep.mubr.bf16.mxu0 0
    %912 = vmatmul.mubr.bf16.gmra.mrb[0].mxu0 %v877
    %v913 = vpop.f32.mrb[0].mxu0
    %v914 = vadd.f32 0.0, %v913
    %v915 = vpop.f32.mrb[0].mxu0
    %v916 = vpop.f32.mrb[0].mxu0
    %v917 = vpop.f32.mrb[0].mxu0
    %918 = vdwg.mxu0
    %v927 = vunpack.c.l.b16 %v619
    %v928 = vunpack.c.l.b16 %v620
    %v929 = vunpack.c.l.b16 %v621
    %v930 = vunpack.c.l.b16 %v622
    %v931 = vunpack.c.l.b16 %v623
    %v932 = vunpack.c.l.b16 %v624
    %v933 = vunpack.c.l.b16 %v625
    %v934 = vunpack.c.l.b16 %v626
    %v935 = vpack.c.b16 %v928, %v927
    %v936 = vpack.c.b16 %v930, %v929
    %v937 = vpack.c.b16 %v932, %v931
    %v938 = vpack.c.b16 %v934, %v933
    %v944 = vsel %vm875, %v618, 0
    %946 = vmatprep.subr.bf16.mxu0 0
    %947 = vmatpush1.bf16.msra.mxu0 %v935
    %948 = vmatprep.subr.bf16.mxu0 0
    %949 = vmatpush1.bf16.msra.mxu0 %v936
    %950 = vmatprep.subr.bf16.mxu0 0
    %951 = vmatpush1.bf16.msra.mxu0 %v937
    %952 = vmatprep.subr.bf16.mxu0 0
    %953 = vmatpush1.bf16.msra.mxu0 %v938
    %954 = vmatprep.subr.bf16.mxu0 0
    %955 = vmatpush1.bf16.msra.mxu0 0
    %956 = vmatprep.subr.bf16.mxu0 0
    %957 = vmatpush1.bf16.msra.mxu0 0
    %958 = vmatprep.subr.bf16.mxu0 0
    %959 = vmatpush1.bf16.msra.mxu0 0
    %960 = vmatprep.subr.bf16.mxu0 0
    %961 = vmatpush1.bf16.msra.mxu0 0
    %962 = vmatprep.subr.bf16.mxu0 0
    %963 = vmatpush1.bf16.msra.mxu0 0
    %964 = vmatprep.subr.bf16.mxu0 0
    %965 = vmatpush1.bf16.msra.mxu0 0
    %966 = vmatprep.subr.bf16.mxu0 0
    %967 = vmatpush1.bf16.msra.mxu0 0
    %968 = vmatprep.subr.bf16.mxu0 0
    %969 = vmatpush1.bf16.msra.mxu0 0
    %970 = vmatprep.subr.bf16.mxu0 0
    %971 = vmatpush1.bf16.msra.mxu0 0
    %972 = vmatprep.subr.bf16.mxu0 0
    %973 = vmatpush1.bf16.msra.mxu0 0
    %974 = vmatprep.subr.bf16.mxu0 0
    %975 = vmatpush1.bf16.msra.mxu0 0
    %976 = vmatprep.subr.bf16.mxu0 0
    %977 = vmatpush1.bf16.msra.mxu0 0
    %978 = vmatprep.mubr.bf16.mxu0 0
    %979 = vmatmul.mubr.bf16.gmra.mrb[0].mxu0 %v944
    %v980 = vpop.f32.mrb[0].mxu0
    %v981 = vadd.f32 %v914, %v980
    %v982 = vpop.f32.mrb[0].mxu0
    %v983 = vpop.f32.mrb[0].mxu0
    %v984 = vpop.f32.mrb[0].mxu0
    %985 = vdwg.mxu0
    %987 = vmatprep.subr.bf16.mxu0 0
    %988 = vmatpush1.bf16.msra.mxu0 %v233
    %989 = vmatprep.subr.bf16.mxu0 0
    %990 = vmatpush1.bf16.msra.mxu0 %v234
    %991 = vmatprep.subr.bf16.mxu0 0
    %992 = vmatpush1.bf16.msra.mxu0 %v235
    %993 = vmatprep.subr.bf16.mxu0 0
    %994 = vmatpush1.bf16.msra.mxu0 %v236
    %995 = vmatprep.subr.bf16.mxu0 0
    %996 = vmatpush1.bf16.msra.mxu0 %v237
    %997 = vmatprep.subr.bf16.mxu0 0
    %998 = vmatpush1.bf16.msra.mxu0 %v238
    %999 = vmatprep.subr.bf16.mxu0 0
    %1000 = vmatpush1.bf16.msra.mxu0 %v239
    %1001 = vmatprep.subr.bf16.mxu0 0
    %1002 = vmatpush1.bf16.msra.mxu0 %v240
    %1003 = vmatprep.subr.bf16.mxu0 0
    %1004 = vmatpush1.bf16.msra.mxu0 0
    %1005 = vmatprep.subr.bf16.mxu0 0
    %1006 = vmatpush1.bf16.msra.mxu0 0
    %1007 = vmatprep.subr.bf16.mxu0 0
    %1008 = vmatpush1.bf16.msra.mxu0 0
    %1009 = vmatprep.subr.bf16.mxu0 0
    %1010 = vmatpush1.bf16.msra.mxu0 0
    %1011 = vmatprep.subr.bf16.mxu0 0
    %1012 = vmatpush1.bf16.msra.mxu0 0
    %1013 = vmatprep.subr.bf16.mxu0 0
    %1014 = vmatpush1.bf16.msra.mxu0 0
    %1015 = vmatprep.subr.bf16.mxu0 0
    %1016 = vmatpush1.bf16.msra.mxu0 0
    %1017 = vmatprep.subr.bf16.mxu0 0
    %1018 = vmatpush1.bf16.msra.mxu0 0
    %1019 = vmatprep.mubr.bf16.mxu0 0
    %1020 = vmatmul.mubr.bf16.gmra.mrb[0].mxu0 %v635
    %v1021 = vpop.f32.mrb[0].mxu0
    %v1022 = vadd.f32 0.0, %v1021
    %v1023 = vpop.f32.mrb[0].mxu0
    %v1024 = vpop.f32.mrb[0].mxu0
    %v1025 = vpop.f32.mrb[0].mxu0
    %1026 = vdwg.mxu0
    %1028 = vmatprep.subr.bf16.mxu0 0
    %1029 = vmatpush1.bf16.msra.mxu0 %v325
    %1030 = vmatprep.subr.bf16.mxu0 0
    %1031 = vmatpush1.bf16.msra.mxu0 %v326
    %1032 = vmatprep.subr.bf16.mxu0 0
    %1033 = vmatpush1.bf16.msra.mxu0 %v327
    %1034 = vmatprep.subr.bf16.mxu0 0
    %1035 = vmatpush1.bf16.msra.mxu0 %v328
    %1036 = vmatprep.subr.bf16.mxu0 0
    %1037 = vmatpush1.bf16.msra.mxu0 %v329
    %1038 = vmatprep.subr.bf16.mxu0 0
    %1039 = vmatpush1.bf16.msra.mxu0 %v330
    %1040 = vmatprep.subr.bf16.mxu0 0
    %1041 = vmatpush1.bf16.msra.mxu0 %v331
    %1042 = vmatprep.subr.bf16.mxu0 0
    %1043 = vmatpush1.bf16.msra.mxu0 %v332
    %1044 = vmatprep.subr.bf16.mxu0 0
    %1045 = vmatpush1.bf16.msra.mxu0 0
    %1046 = vmatprep.subr.bf16.mxu0 0
    %1047 = vmatpush1.bf16.msra.mxu0 0
    %1048 = vmatprep.subr.bf16.mxu0 0
    %1049 = vmatpush1.bf16.msra.mxu0 0
    %1050 = vmatprep.subr.bf16.mxu0 0
    %1051 = vmatpush1.bf16.msra.mxu0 0
    %1052 = vmatprep.subr.bf16.mxu0 0
    %1053 = vmatpush1.bf16.msra.mxu0 0
    %1054 = vmatprep.subr.bf16.mxu0 0
    %1055 = vmatpush1.bf16.msra.mxu0 0
    %1056 = vmatprep.subr.bf16.mxu0 0
    %1057 = vmatpush1.bf16.msra.mxu0 0
    %1058 = vmatprep.subr.bf16.mxu0 0
    %1059 = vmatpush1.bf16.msra.mxu0 0
    %1060 = vmatprep.mubr.bf16.mxu0 0
    %1061 = vmatmul.mubr.bf16.gmra.mrb[0].mxu0 %v685
    %v1062 = vpop.f32.mrb[0].mxu0
    %v1063 = vadd.f32 %v1022, %v1062
    %v1064 = vpop.f32.mrb[0].mxu0
    %v1065 = vpop.f32.mrb[0].mxu0
    %v1066 = vpop.f32.mrb[0].mxu0
    %1067 = vdwg.mxu0
    %1069 = vmatprep.subr.bf16.mxu0 0
    %1070 = vmatpush1.bf16.msra.mxu0 %v442
    %1071 = vmatprep.subr.bf16.mxu0 0
    %1072 = vmatpush1.bf16.msra.mxu0 %v443
    %1073 = vmatprep.subr.bf16.mxu0 0
    %1074 = vmatpush1.bf16.msra.mxu0 %v444
    %1075 = vmatprep.subr.bf16.mxu0 0
    %1076 = vmatpush1.bf16.msra.mxu0 %v445
    %1077 = vmatprep.subr.bf16.mxu0 0
    %1078 = vmatpush1.bf16.msra.mxu0 %v446
    %1079 = vmatprep.subr.bf16.mxu0 0
    %1080 = vmatpush1.bf16.msra.mxu0 %v447
    %1081 = vmatprep.subr.bf16.mxu0 0
    %1082 = vmatpush1.bf16.msra.mxu0 %v448
    %1083 = vmatprep.subr.bf16.mxu0 0
    %1084 = vmatpush1.bf16.msra.mxu0 %v449
    %1085 = vmatprep.subr.bf16.mxu0 0
    %1086 = vmatpush1.bf16.msra.mxu0 0
    %1087 = vmatprep.subr.bf16.mxu0 0
    %1088 = vmatpush1.bf16.msra.mxu0 0
    %1089 = vmatprep.subr.bf16.mxu0 0
    %1090 = vmatpush1.bf16.msra.mxu0 0
    %1091 = vmatprep.subr.bf16.mxu0 0
    %1092 = vmatpush1.bf16.msra.mxu0 0
    %1093 = vmatprep.subr.bf16.mxu0 0
    %1094 = vmatpush1.bf16.msra.mxu0 0
    %1095 = vmatprep.subr.bf16.mxu0 0
    %1096 = vmatpush1.bf16.msra.mxu0 0
    %1097 = vmatprep.subr.bf16.mxu0 0
    %1098 = vmatpush1.bf16.msra.mxu0 0
    %1099 = vmatprep.subr.bf16.mxu0 0
    %1100 = vmatpush1.bf16.msra.mxu0 0
    %1101 = vmatprep.mubr.bf16.mxu0 0
    %1102 = vmatmul.mubr.bf16.gmra.mrb[0].mxu0 %v741
    %v1103 = vpop.f32.mrb[0].mxu0
    %v1104 = vadd.f32 0.0, %v1103
    %v1105 = vpop.f32.mrb[0].mxu0
    %v1106 = vpop.f32.mrb[0].mxu0
    %v1107 = vpop.f32.mrb[0].mxu0
    %1108 = vdwg.mxu0
    %v1109 = vadd.f32 %v1063, %v1104
    %1111 = vmatprep.subr.bf16.mxu0 0
    %1112 = vmatpush1.bf16.msra.mxu0 %v552
    %1113 = vmatprep.subr.bf16.mxu0 0
    %1114 = vmatpush1.bf16.msra.mxu0 %v553
    %1115 = vmatprep.subr.bf16.mxu0 0
    %1116 = vmatpush1.bf16.msra.mxu0 %v554
    %1117 = vmatprep.subr.bf16.mxu0 0
    %1118 = vmatpush1.bf16.msra.mxu0 %v555
    %1119 = vmatprep.subr.bf16.mxu0 0
    %1120 = vmatpush1.bf16.msra.mxu0 %v556
    %1121 = vmatprep.subr.bf16.mxu0 0
    %1122 = vmatpush1.bf16.msra.mxu0 %v557
    %1123 = vmatprep.subr.bf16.mxu0 0
    %1124 = vmatpush1.bf16.msra.mxu0 %v558
    %1125 = vmatprep.subr.bf16.mxu0 0
    %1126 = vmatpush1.bf16.msra.mxu0 %v559
    %1127 = vmatprep.subr.bf16.mxu0 0
    %1128 = vmatpush1.bf16.msra.mxu0 0
    %1129 = vmatprep.subr.bf16.mxu0 0
    %1130 = vmatpush1.bf16.msra.mxu0 0
    %1131 = vmatprep.subr.bf16.mxu0 0
    %1132 = vmatpush1.bf16.msra.mxu0 0
    %1133 = vmatprep.subr.bf16.mxu0 0
    %1134 = vmatpush1.bf16.msra.mxu0 0
    %1135 = vmatprep.subr.bf16.mxu0 0
    %1136 = vmatpush1.bf16.msra.mxu0 0
    %1137 = vmatprep.subr.bf16.mxu0 0
    %1138 = vmatpush1.bf16.msra.mxu0 0
    %1139 = vmatprep.subr.bf16.mxu0 0
    %1140 = vmatpush1.bf16.msra.mxu0 0
    %1141 = vmatprep.subr.bf16.mxu0 0
    %1142 = vmatpush1.bf16.msra.mxu0 0
    %1143 = vmatprep.mubr.bf16.mxu0 0
    %1144 = vmatmul.mubr.bf16.gmra.mrb[0].mxu0 %v792
    %v1145 = vpop.f32.mrb[0].mxu0
    %v1146 = vadd.f32 0.0, %v1145
    %v1147 = vpop.f32.mrb[0].mxu0
    %v1148 = vpop.f32.mrb[0].mxu0
    %v1149 = vpop.f32.mrb[0].mxu0
    %1150 = vdwg.mxu0
    %v1151 = vadd.f32 %v1109, %v1146
    %v1152 = vadd.f32 %v1151, %v614
    %v1153 = vmax.f32 %v1152, 0.0
    %v1154 = vpack.c.bf16 %v1153, %v1153
    %v1155 = vld [vmem:[#allocation8 + $0x40] sm:$0xf]
    %v1156 = vld [vmem:[#allocation8 + $0x44] sm:$0xf]
    %v1157 = vld [vmem:[#allocation8 + $0x48] sm:$0xf]
    %v1158 = vld [vmem:[#allocation8 + $0x4c] sm:$0xf]
    %v1159 = vld [vmem:[#allocation8 + $0x50] sm:$0xf]
    %v1160 = vld [vmem:[#allocation8 + $0x54] sm:$0xf]
    %v1161 = vld [vmem:[#allocation8 + $0x58] sm:$0xf]
    %v1162 = vld [vmem:[#allocation8 + $0x5c] sm:$0xf]
    %v1171 = vunpack.c.l.b16 %v1155
    %v1172 = vunpack.c.l.b16 %v1156
    %v1173 = vunpack.c.l.b16 %v1157
    %v1174 = vunpack.c.l.b16 %v1158
    %v1175 = vunpack.c.l.b16 %v1159
    %v1176 = vunpack.c.l.b16 %v1160
    %v1177 = vunpack.c.l.b16 %v1161
    %v1178 = vunpack.c.l.b16 %v1162
    %v1179 = vpack.c.b16 %v1172, %v1171
    %v1180 = vpack.c.b16 %v1174, %v1173
    %v1181 = vpack.c.b16 %v1176, %v1175
    %v1182 = vpack.c.b16 %v1178, %v1177
    %v1188 = vsel %vm875, %v1154, 0
    %1190 = vmatprep.subr.bf16.mxu0 0
    %1191 = vmatpush1.bf16.msra.mxu0 %v1179
    %1192 = vmatprep.subr.bf16.mxu0 0
    %1193 = vmatpush1.bf16.msra.mxu0 %v1180
    %1194 = vmatprep.subr.bf16.mxu0 0
    %1195 = vmatpush1.bf16.msra.mxu0 %v1181
    %1196 = vmatprep.subr.bf16.mxu0 0
    %1197 = vmatpush1.bf16.msra.mxu0 %v1182
    %1198 = vmatprep.subr.bf16.mxu0 0
    %1199 = vmatpush1.bf16.msra.mxu0 0
    %1200 = vmatprep.subr.bf16.mxu0 0
    %1201 = vmatpush1.bf16.msra.mxu0 0
    %1202 = vmatprep.subr.bf16.mxu0 0
    %1203 = vmatpush1.bf16.msra.mxu0 0
    %1204 = vmatprep.subr.bf16.mxu0 0
    %1205 = vmatpush1.bf16.msra.mxu0 0
    %1206 = vmatprep.subr.bf16.mxu0 0
    %1207 = vmatpush1.bf16.msra.mxu0 0
    %1208 = vmatprep.subr.bf16.mxu0 0
    %1209 = vmatpush1.bf16.msra.mxu0 0
    %1210 = vmatprep.subr.bf16.mxu0 0
    %1211 = vmatpush1.bf16.msra.mxu0 0
    %1212 = vmatprep.subr.bf16.mxu0 0
    %1213 = vmatpush1.bf16.msra.mxu0 0
    %1214 = vmatprep.subr.bf16.mxu0 0
    %1215 = vmatpush1.bf16.msra.mxu0 0
    %1216 = vmatprep.subr.bf16.mxu0 0
    %1217 = vmatpush1.bf16.msra.mxu0 0
    %1218 = vmatprep.subr.bf16.mxu0 0
    %1219 = vmatpush1.bf16.msra.mxu0 0
    %1220 = vmatprep.subr.bf16.mxu0 0
    %1221 = vmatpush1.bf16.msra.mxu0 0
    %1222 = vmatprep.mubr.bf16.mxu0 0
    %1223 = vmatmul.mubr.bf16.gmra.mrb[0].mxu0 %v1188
    %v1224 = vpop.f32.mrb[0].mxu0
    %v1225 = vadd.f32 0.0, %v1224
    %v1226 = vpop.f32.mrb[0].mxu0
    %v1227 = vpop.f32.mrb[0].mxu0
    %v1228 = vpop.f32.mrb[0].mxu0
    %1229 = vdwg.mxu0
    %v1230 = vadd.f32 %v981, %v1225
    %1231 = vmatprep.subr.bf16.mxu0 0
    %1232 = vmatpush1.bf16.msra.mxu0 %v233
    %1233 = vmatprep.subr.bf16.mxu0 0
    %1234 = vmatpush1.bf16.msra.mxu0 %v234
    %1235 = vmatprep.subr.bf16.mxu0 0
    %1236 = vmatpush1.bf16.msra.mxu0 %v235
    %1237 = vmatprep.subr.bf16.mxu0 0
    %1238 = vmatpush1.bf16.msra.mxu0 %v236
    %1239 = vmatprep.subr.bf16.mxu0 0
    %1240 = vmatpush1.bf16.msra.mxu0 %v237
    %1241 = vmatprep.subr.bf16.mxu0 0
    %1242 = vmatpush1.bf16.msra.mxu0 %v238
    %1243 = vmatprep.subr.bf16.mxu0 0
    %1244 = vmatpush1.bf16.msra.mxu0 %v239
    %1245 = vmatprep.subr.bf16.mxu0 0
    %1246 = vmatpush1.bf16.msra.mxu0 %v240
    %1247 = vmatprep.subr.bf16.mxu0 0
    %1248 = vmatpush1.bf16.msra.mxu0 0
    %1249 = vmatprep.subr.bf16.mxu0 0
    %1250 = vmatpush1.bf16.msra.mxu0 0
    %1251 = vmatprep.subr.bf16.mxu0 0
    %1252 = vmatpush1.bf16.msra.mxu0 0
    %1253 = vmatprep.subr.bf16.mxu0 0
    %1254 = vmatpush1.bf16.msra.mxu0 0
    %1255 = vmatprep.subr.bf16.mxu0 0
    %1256 = vmatpush1.bf16.msra.mxu0 0
    %1257 = vmatprep.subr.bf16.mxu0 0
    %1258 = vmatpush1.bf16.msra.mxu0 0
    %1259 = vmatprep.subr.bf16.mxu0 0
    %1260 = vmatpush1.bf16.msra.mxu0 0
    %1261 = vmatprep.subr.bf16.mxu0 0
    %1262 = vmatpush1.bf16.msra.mxu0 0
    %1263 = vmatprep.mubr.bf16.mxu0 0
    %1264 = vmatmul.mubr.bf16.gmra.mrb[0].mxu0 %v518
    %v1265 = vpop.f32.mrb[0].mxu0
    %v1266 = vadd.f32 0.0, %v1265
    %v1267 = vpop.f32.mrb[0].mxu0
    %v1268 = vpop.f32.mrb[0].mxu0
    %v1269 = vpop.f32.mrb[0].mxu0
    %1270 = vdwg.mxu0
    %1271 = vmatprep.subr.bf16.mxu0 0
    %1272 = vmatpush1.bf16.msra.mxu0 %v325
    %1273 = vmatprep.subr.bf16.mxu0 0
    %1274 = vmatpush1.bf16.msra.mxu0 %v326
    %1275 = vmatprep.subr.bf16.mxu0 0
    %1276 = vmatpush1.bf16.msra.mxu0 %v327
    %1277 = vmatprep.subr.bf16.mxu0 0
    %1278 = vmatpush1.bf16.msra.mxu0 %v328
    %1279 = vmatprep.subr.bf16.mxu0 0
    %1280 = vmatpush1.bf16.msra.mxu0 %v329
    %1281 = vmatprep.subr.bf16.mxu0 0
    %1282 = vmatpush1.bf16.msra.mxu0 %v330
    %1283 = vmatprep.subr.bf16.mxu0 0
    %1284 = vmatpush1.bf16.msra.mxu0 %v331
    %1285 = vmatprep.subr.bf16.mxu0 0
    %1286 = vmatpush1.bf16.msra.mxu0 %v332
    %1287 = vmatprep.subr.bf16.mxu0 0
    %1288 = vmatpush1.bf16.msra.mxu0 0
    %1289 = vmatprep.subr.bf16.mxu0 0
    %1290 = vmatpush1.bf16.msra.mxu0 0
    %1291 = vmatprep.subr.bf16.mxu0 0
    %1292 = vmatpush1.bf16.msra.mxu0 0
    %1293 = vmatprep.subr.bf16.mxu0 0
    %1294 = vmatpush1.bf16.msra.mxu0 0
    %1295 = vmatprep.subr.bf16.mxu0 0
    %1296 = vmatpush1.bf16.msra.mxu0 0
    %1297 = vmatprep.subr.bf16.mxu0 0
    %1298 = vmatpush1.bf16.msra.mxu0 0
    %1299 = vmatprep.subr.bf16.mxu0 0
    %1300 = vmatpush1.bf16.msra.mxu0 0
    %1301 = vmatprep.subr.bf16.mxu0 0
    %1302 = vmatpush1.bf16.msra.mxu0 0
    %1303 = vmatprep.mubr.bf16.mxu0 0
    %1304 = vmatmul.mubr.bf16.gmra.mrb[0].mxu0 %v408
    %v1305 = vpop.f32.mrb[0].mxu0
    %v1306 = vadd.f32 %v1266, %v1305
    %v1307 = vpop.f32.mrb[0].mxu0
    %v1308 = vpop.f32.mrb[0].mxu0
    %v1309 = vpop.f32.mrb[0].mxu0
    %1310 = vdwg.mxu0
    %v1313 = vunpack.c.l.b16 %v152
    %v1314 = vunpack.c.l.b16 %v153
    %v1315 = vpack.c.b16 %v1313, %v1313
    %v1316 = vpack.c.b16 %v1314, %v1314
    %v1317 = vunpack.c.l.b16 %v1315
    %v1318 = vunpack.c.l.b16 %v1316
    %v1319 = vrot.slane %v1317, 4
    %v1320 = vrot.slane %v1318, 3
    %v1321 = vsel %vm197, %v1320, %v1319
    %v1322 = vpack.c.b16 %v1321, %v1321
    %1324 = vmatprep.subr.bf16.mxu0 0
    %1325 = vmatpush1.bf16.msra.mxu0 %v442
    %1326 = vmatprep.subr.bf16.mxu0 0
    %1327 = vmatpush1.bf16.msra.mxu0 %v443
    %1328 = vmatprep.subr.bf16.mxu0 0
    %1329 = vmatpush1.bf16.msra.mxu0 %v444
    %1330 = vmatprep.subr.bf16.mxu0 0
    %1331 = vmatpush1.bf16.msra.mxu0 %v445
    %1332 = vmatprep.subr.bf16.mxu0 0
    %1333 = vmatpush1.bf16.msra.mxu0 %v446
    %1334 = vmatprep.subr.bf16.mxu0 0
    %1335 = vmatpush1.bf16.msra.mxu0 %v447
    %1336 = vmatprep.subr.bf16.mxu0 0
    %1337 = vmatpush1.bf16.msra.mxu0 %v448
    %1338 = vmatprep.subr.bf16.mxu0 0
    %1339 = vmatpush1.bf16.msra.mxu0 %v449
    %1340 = vmatprep.subr.bf16.mxu0 0
    %1341 = vmatpush1.bf16.msra.mxu0 0
    %1342 = vmatprep.subr.bf16.mxu0 0
    %1343 = vmatpush1.bf16.msra.mxu0 0
    %1344 = vmatprep.subr.bf16.mxu0 0
    %1345 = vmatpush1.bf16.msra.mxu0 0
    %1346 = vmatprep.subr.bf16.mxu0 0
    %1347 = vmatpush1.bf16.msra.mxu0 0
    %1348 = vmatprep.subr.bf16.mxu0 0
    %1349 = vmatpush1.bf16.msra.mxu0 0
    %1350 = vmatprep.subr.bf16.mxu0 0
    %1351 = vmatpush1.bf16.msra.mxu0 0
    %1352 = vmatprep.subr.bf16.mxu0 0
    %1353 = vmatpush1.bf16.msra.mxu0 0
    %1354 = vmatprep.subr.bf16.mxu0 0
    %1355 = vmatpush1.bf16.msra.mxu0 0
    %1356 = vmatprep.mubr.bf16.mxu0 0
    %1357 = vmatmul.mubr.bf16.gmra.mrb[0].mxu0 %v1322
    %v1358 = vpop.f32.mrb[0].mxu0
    %v1359 = vadd.f32 0.0, %v1358
    %v1360 = vpop.f32.mrb[0].mxu0
    %v1361 = vpop.f32.mrb[0].mxu0
    %v1362 = vpop.f32.mrb[0].mxu0
    %1363 = vdwg.mxu0
    %v1364 = vadd.f32 %v1306, %v1359
    %v1365 = vrot.slane %v1317, 5
    %v1366 = vrot.slane %v1318, 4
    %v1367 = vsel %vm197, %v1366, %v1365
    %v1368 = vpack.c.b16 %v1367, %v1367
    %1370 = vmatprep.subr.bf16.mxu0 0
    %1371 = vmatpush1.bf16.msra.mxu0 %v552
    %1372 = vmatprep.subr.bf16.mxu0 0
    %1373 = vmatpush1.bf16.msra.mxu0 %v553
    %1374 = vmatprep.subr.bf16.mxu0 0
    %1375 = vmatpush1.bf16.msra.mxu0 %v554
    %1376 = vmatprep.subr.bf16.mxu0 0
    %1377 = vmatpush1.bf16.msra.mxu0 %v555
    %1378 = vmatprep.subr.bf16.mxu0 0
    %1379 = vmatpush1.bf16.msra.mxu0 %v556
    %1380 = vmatprep.subr.bf16.mxu0 0
    %1381 = vmatpush1.bf16.msra.mxu0 %v557
    %1382 = vmatprep.subr.bf16.mxu0 0
    %1383 = vmatpush1.bf16.msra.mxu0 %v558
    %1384 = vmatprep.subr.bf16.mxu0 0
    %1385 = vmatpush1.bf16.msra.mxu0 %v559
    %1386 = vmatprep.subr.bf16.mxu0 0
    %1387 = vmatpush1.bf16.msra.mxu0 0
    %1388 = vmatprep.subr.bf16.mxu0 0
    %1389 = vmatpush1.bf16.msra.mxu0 0
    %1390 = vmatprep.subr.bf16.mxu0 0
    %1391 = vmatpush1.bf16.msra.mxu0 0
    %1392 = vmatprep.subr.bf16.mxu0 0
    %1393 = vmatpush1.bf16.msra.mxu0 0
    %1394 = vmatprep.subr.bf16.mxu0 0
    %1395 = vmatpush1.bf16.msra.mxu0 0
    %1396 = vmatprep.subr.bf16.mxu0 0
    %1397 = vmatpush1.bf16.msra.mxu0 0
    %1398 = vmatprep.subr.bf16.mxu0 0
    %1399 = vmatpush1.bf16.msra.mxu0 0
    %1400 = vmatprep.subr.bf16.mxu0 0
    %1401 = vmatpush1.bf16.msra.mxu0 0
    %1402 = vmatprep.mubr.bf16.mxu0 0
    %1403 = vmatmul.mubr.bf16.gmra.mrb[0].mxu0 %v1368
    %v1404 = vpop.f32.mrb[0].mxu0
    %v1405 = vadd.f32 0.0, %v1404
    %v1406 = vpop.f32.mrb[0].mxu0
    %v1407 = vpop.f32.mrb[0].mxu0
    %v1408 = vpop.f32.mrb[0].mxu0
    %1409 = vdwg.mxu0
    %v1410 = vadd.f32 %v1364, %v1405
    %v1411 = vadd.f32 %v1410, %v614
    %v1412 = vmax.f32 %v1411, 0.0
    %v1413 = vpack.c.bf16 %v1412, %v1412
    %v1414 = vld [vmem:[#allocation8 + $0x60] sm:$0xf]
    %v1415 = vld [vmem:[#allocation8 + $0x64] sm:$0xf]
    %v1416 = vld [vmem:[#allocation8 + $0x68] sm:$0xf]
    %v1417 = vld [vmem:[#allocation8 + $0x6c] sm:$0xf]
    %v1418 = vld [vmem:[#allocation8 + $0x70] sm:$0xf]
    %v1419 = vld [vmem:[#allocation8 + $0x74] sm:$0xf]
    %v1420 = vld [vmem:[#allocation8 + $0x78] sm:$0xf]
    %v1421 = vld [vmem:[#allocation8 + $0x7c] sm:$0xf]
    %v1430 = vunpack.c.l.b16 %v1414
    %v1431 = vunpack.c.l.b16 %v1415
    %v1432 = vunpack.c.l.b16 %v1416
    %v1433 = vunpack.c.l.b16 %v1417
    %v1434 = vunpack.c.l.b16 %v1418
    %v1435 = vunpack.c.l.b16 %v1419
    %v1436 = vunpack.c.l.b16 %v1420
    %v1437 = vunpack.c.l.b16 %v1421
    %v1438 = vpack.c.b16 %v1431, %v1430
    %v1439 = vpack.c.b16 %v1433, %v1432
    %v1440 = vpack.c.b16 %v1435, %v1434
    %v1441 = vpack.c.b16 %v1437, %v1436
    %v1447 = vsel %vm875, %v1413, 0
    %1449 = vmatprep.subr.bf16.mxu0 0
    %1450 = vmatpush1.bf16.msra.mxu0 %v1438
    %1451 = vmatprep.subr.bf16.mxu0 0
    %1452 = vmatpush1.bf16.msra.mxu0 %v1439
    %1453 = vmatprep.subr.bf16.mxu0 0
    %1454 = vmatpush1.bf16.msra.mxu0 %v1440
    %1455 = vmatprep.subr.bf16.mxu0 0
    %1456 = vmatpush1.bf16.msra.mxu0 %v1441
    %1457 = vmatprep.subr.bf16.mxu0 0
    %1458 = vmatpush1.bf16.msra.mxu0 0
    %1459 = vmatprep.subr.bf16.mxu0 0
    %1460 = vmatpush1.bf16.msra.mxu0 0
    %1461 = vmatprep.subr.bf16.mxu0 0
    %1462 = vmatpush1.bf16.msra.mxu0 0
    %1463 = vmatprep.subr.bf16.mxu0 0
    %1464 = vmatpush1.bf16.msra.mxu0 0
    %1465 = vmatprep.subr.bf16.mxu0 0
    %1466 = vmatpush1.bf16.msra.mxu0 0
    %1467 = vmatprep.subr.bf16.mxu0 0
    %1468 = vmatpush1.bf16.msra.mxu0 0
    %1469 = vmatprep.subr.bf16.mxu0 0
    %1470 = vmatpush1.bf16.msra.mxu0 0
    %1471 = vmatprep.subr.bf16.mxu0 0
    %1472 = vmatpush1.bf16.msra.mxu0 0
    %1473 = vmatprep.subr.bf16.mxu0 0
    %1474 = vmatpush1.bf16.msra.mxu0 0
    %1475 = vmatprep.subr.bf16.mxu0 0
    %1476 = vmatpush1.bf16.msra.mxu0 0
    %1477 = vmatprep.subr.bf16.mxu0 0
    %1478 = vmatpush1.bf16.msra.mxu0 0
    %1479 = vmatprep.subr.bf16.mxu0 0
    %1480 = vmatpush1.bf16.msra.mxu0 0
    %1481 = vmatprep.mubr.bf16.mxu0 0
    %1482 = vmatmul.mubr.bf16.gmra.mrb[0].mxu0 %v1447
    %v1483 = vpop.f32.mrb[0].mxu0
    %v1484 = vadd.f32 0.0, %v1483
    %v1485 = vpop.f32.mrb[0].mxu0
    %v1486 = vpop.f32.mrb[0].mxu0
    %v1487 = vpop.f32.mrb[0].mxu0
    %1488 = vdwg.mxu0
    %v1489 = vadd.f32 %v1230, %v1484
    %1490 = vmatprep.subr.bf16.mxu0 0
    %1491 = vmatpush1.bf16.msra.mxu0 %v233
    %1492 = vmatprep.subr.bf16.mxu0 0
    %1493 = vmatpush1.bf16.msra.mxu0 %v234
    %1494 = vmatprep.subr.bf16.mxu0 0
    %1495 = vmatpush1.bf16.msra.mxu0 %v235
    %1496 = vmatprep.subr.bf16.mxu0 0
    %1497 = vmatpush1.bf16.msra.mxu0 %v236
    %1498 = vmatprep.subr.bf16.mxu0 0
    %1499 = vmatpush1.bf16.msra.mxu0 %v237
    %1500 = vmatprep.subr.bf16.mxu0 0
    %1501 = vmatpush1.bf16.msra.mxu0 %v238
    %1502 = vmatprep.subr.bf16.mxu0 0
    %1503 = vmatpush1.bf16.msra.mxu0 %v239
    %1504 = vmatprep.subr.bf16.mxu0 0
    %1505 = vmatpush1.bf16.msra.mxu0 %v240
    %1506 = vmatprep.subr.bf16.mxu0 0
    %1507 = vmatpush1.bf16.msra.mxu0 0
    %1508 = vmatprep.subr.bf16.mxu0 0
    %1509 = vmatpush1.bf16.msra.mxu0 0
    %1510 = vmatprep.subr.bf16.mxu0 0
    %1511 = vmatpush1.bf16.msra.mxu0 0
    %1512 = vmatprep.subr.bf16.mxu0 0
    %1513 = vmatpush1.bf16.msra.mxu0 0
    %1514 = vmatprep.subr.bf16.mxu0 0
    %1515 = vmatpush1.bf16.msra.mxu0 0
    %1516 = vmatprep.subr.bf16.mxu0 0
    %1517 = vmatpush1.bf16.msra.mxu0 0
    %1518 = vmatprep.subr.bf16.mxu0 0
    %1519 = vmatpush1.bf16.msra.mxu0 0
    %1520 = vmatprep.subr.bf16.mxu0 0
    %1521 = vmatpush1.bf16.msra.mxu0 0
    %1522 = vmatprep.mubr.bf16.mxu0 0
    %1523 = vmatmul.mubr.bf16.gmra.mrb[0].mxu0 %v797
    %v1524 = vpop.f32.mrb[0].mxu0
    %v1525 = vadd.f32 0.0, %v1524
    %v1526 = vpop.f32.mrb[0].mxu0
    %v1527 = vpop.f32.mrb[0].mxu0
    %v1528 = vpop.f32.mrb[0].mxu0
    %1529 = vdwg.mxu0
    %1530 = vmatprep.subr.bf16.mxu0 0
    %1531 = vmatpush1.bf16.msra.mxu0 %v325
    %1532 = vmatprep.subr.bf16.mxu0 0
    %1533 = vmatpush1.bf16.msra.mxu0 %v326
    %1534 = vmatprep.subr.bf16.mxu0 0
    %1535 = vmatpush1.bf16.msra.mxu0 %v327
    %1536 = vmatprep.subr.bf16.mxu0 0
    %1537 = vmatpush1.bf16.msra.mxu0 %v328
    %1538 = vmatprep.subr.bf16.mxu0 0
    %1539 = vmatpush1.bf16.msra.mxu0 %v329
    %1540 = vmatprep.subr.bf16.mxu0 0
    %1541 = vmatpush1.bf16.msra.mxu0 %v330
    %1542 = vmatprep.subr.bf16.mxu0 0
    %1543 = vmatpush1.bf16.msra.mxu0 %v331
    %1544 = vmatprep.subr.bf16.mxu0 0
    %1545 = vmatpush1.bf16.msra.mxu0 %v332
    %1546 = vmatprep.subr.bf16.mxu0 0
    %1547 = vmatpush1.bf16.msra.mxu0 0
    %1548 = vmatprep.subr.bf16.mxu0 0
    %1549 = vmatpush1.bf16.msra.mxu0 0
    %1550 = vmatprep.subr.bf16.mxu0 0
    %1551 = vmatpush1.bf16.msra.mxu0 0
    %1552 = vmatprep.subr.bf16.mxu0 0
    %1553 = vmatpush1.bf16.msra.mxu0 0
    %1554 = vmatprep.subr.bf16.mxu0 0
    %1555 = vmatpush1.bf16.msra.mxu0 0
    %1556 = vmatprep.subr.bf16.mxu0 0
    %1557 = vmatpush1.bf16.msra.mxu0 0
    %1558 = vmatprep.subr.bf16.mxu0 0
    %1559 = vmatpush1.bf16.msra.mxu0 0
    %1560 = vmatprep.subr.bf16.mxu0 0
    %1561 = vmatpush1.bf16.msra.mxu0 0
    %1562 = vmatprep.mubr.bf16.mxu0 0
    %1563 = vmatmul.mubr.bf16.gmra.mrb[0].mxu0 %v746
    %v1564 = vpop.f32.mrb[0].mxu0
    %v1565 = vadd.f32 %v1525, %v1564
    %v1566 = vpop.f32.mrb[0].mxu0
    %v1567 = vpop.f32.mrb[0].mxu0
    %v1568 = vpop.f32.mrb[0].mxu0
    %1569 = vdwg.mxu0
    %v1570 = vunpack.c.h.b16 %v152
    %v1571 = vunpack.c.h.b16 %v153
    %v1572 = vpack.c.b16 %v1570, %v1570
    %v1573 = vpack.c.b16 %v1571, %v1571
    %v1574 = vunpack.c.l.b16 %v1572
    %v1575 = vunpack.c.l.b16 %v1573
    %v1576 = vrot.slane %v1574, 4
    %v1577 = vrot.slane %v1575, 3
    %v1578 = vsel %vm197, %v1577, %v1576
    %v1579 = vpack.c.b16 %v1578, %v1578
    %1580 = vrot.lane.b32.xlu0 %v1322, 64
    %v1581 = vpop.permute.xlu0 %1580
    %1582 = vrot.lane.b32.xlu0 %v1579, 64
    %v1583 = vpop.permute.xlu0 %1582
    %v1584 = vsel %vm640, %v1581, %v1583
    %1586 = vmatprep.subr.bf16.mxu0 0
    %1587 = vmatpush1.bf16.msra.mxu0 %v442
    %1588 = vmatprep.subr.bf16.mxu0 0
    %1589 = vmatpush1.bf16.msra.mxu0 %v443
    %1590 = vmatprep.subr.bf16.mxu0 0
    %1591 = vmatpush1.bf16.msra.mxu0 %v444
    %1592 = vmatprep.subr.bf16.mxu0 0
    %1593 = vmatpush1.bf16.msra.mxu0 %v445
    %1594 = vmatprep.subr.bf16.mxu0 0
    %1595 = vmatpush1.bf16.msra.mxu0 %v446
    %1596 = vmatprep.subr.bf16.mxu0 0
    %1597 = vmatpush1.bf16.msra.mxu0 %v447
    %1598 = vmatprep.subr.bf16.mxu0 0
    %1599 = vmatpush1.bf16.msra.mxu0 %v448
    %1600 = vmatprep.subr.bf16.mxu0 0
    %1601 = vmatpush1.bf16.msra.mxu0 %v449
    %1602 = vmatprep.subr.bf16.mxu0 0
    %1603 = vmatpush1.bf16.msra.mxu0 0
    %1604 = vmatprep.subr.bf16.mxu0 0
    %1605 = vmatpush1.bf16.msra.mxu0 0
    %1606 = vmatprep.subr.bf16.mxu0 0
    %1607 = vmatpush1.bf16.msra.mxu0 0
    %1608 = vmatprep.subr.bf16.mxu0 0
    %1609 = vmatpush1.bf16.msra.mxu0 0
    %1610 = vmatprep.subr.bf16.mxu0 0
    %1611 = vmatpush1.bf16.msra.mxu0 0
    %1612 = vmatprep.subr.bf16.mxu0 0
    %1613 = vmatpush1.bf16.msra.mxu0 0
    %1614 = vmatprep.subr.bf16.mxu0 0
    %1615 = vmatpush1.bf16.msra.mxu0 0
    %1616 = vmatprep.subr.bf16.mxu0 0
    %1617 = vmatpush1.bf16.msra.mxu0 0
    %1618 = vmatprep.mubr.bf16.mxu0 0
    %1619 = vmatmul.mubr.bf16.gmra.mrb[0].mxu0 %v1584
    %v1620 = vpop.f32.mrb[0].mxu0
    %v1621 = vadd.f32 0.0, %v1620
    %v1622 = vpop.f32.mrb[0].mxu0
    %v1623 = vpop.f32.mrb[0].mxu0
    %v1624 = vpop.f32.mrb[0].mxu0
    %1625 = vdwg.mxu0
    %v1626 = vadd.f32 %v1565, %v1621
    %v1627 = vrot.slane %v1574, 5
    %v1628 = vrot.slane %v1575, 4
    %v1629 = vsel %vm197, %v1628, %v1627
    %v1630 = vpack.c.b16 %v1629, %v1629
    %1631 = vrot.lane.b32.xlu0 %v1368, 64
    %v1632 = vpop.permute.xlu0 %1631
    %1633 = vrot.lane.b32.xlu0 %v1630, 64
    %v1634 = vpop.permute.xlu0 %1633
    %v1635 = vsel %vm640, %v1632, %v1634
    %1637 = vmatprep.subr.bf16.mxu0 0
    %1638 = vmatpush1.bf16.msra.mxu0 %v552
    %1639 = vmatprep.subr.bf16.mxu0 0
    %1640 = vmatpush1.bf16.msra.mxu0 %v553
    %1641 = vmatprep.subr.bf16.mxu0 0
    %1642 = vmatpush1.bf16.msra.mxu0 %v554
    %1643 = vmatprep.subr.bf16.mxu0 0
    %1644 = vmatpush1.bf16.msra.mxu0 %v555
    %1645 = vmatprep.subr.bf16.mxu0 0
    %1646 = vmatpush1.bf16.msra.mxu0 %v556
    %1647 = vmatprep.subr.bf16.mxu0 0
    %1648 = vmatpush1.bf16.msra.mxu0 %v557
    %1649 = vmatprep.subr.bf16.mxu0 0
    %1650 = vmatpush1.bf16.msra.mxu0 %v558
    %1651 = vmatprep.subr.bf16.mxu0 0
    %1652 = vmatpush1.bf16.msra.mxu0 %v559
    %1653 = vmatprep.subr.bf16.mxu0 0
    %1654 = vmatpush1.bf16.msra.mxu0 0
    %1655 = vmatprep.subr.bf16.mxu0 0
    %1656 = vmatpush1.bf16.msra.mxu0 0
    %1657 = vmatprep.subr.bf16.mxu0 0
    %1658 = vmatpush1.bf16.msra.mxu0 0
    %1659 = vmatprep.subr.bf16.mxu0 0
    %1660 = vmatpush1.bf16.msra.mxu0 0
    %1661 = vmatprep.subr.bf16.mxu0 0
    %1662 = vmatpush1.bf16.msra.mxu0 0
    %1663 = vmatprep.subr.bf16.mxu0 0
    %1664 = vmatpush1.bf16.msra.mxu0 0
    %1665 = vmatprep.subr.bf16.mxu0 0
    %1666 = vmatpush1.bf16.msra.mxu0 0
    %1667 = vmatprep.subr.bf16.mxu0 0
    %1668 = vmatpush1.bf16.msra.mxu0 0
    %1669 = vmatprep.mubr.bf16.mxu0 0
    %1670 = vmatmul.mubr.bf16.gmra.mrb[0].mxu0 %v1635
    %v1671 = vpop.f32.mrb[0].mxu0
    %v1672 = vadd.f32 0.0, %v1671
    %v1673 = vpop.f32.mrb[0].mxu0
    %v1674 = vpop.f32.mrb[0].mxu0
    %v1675 = vpop.f32.mrb[0].mxu0
    %1676 = vdwg.mxu0
    %v1677 = vadd.f32 %v1626, %v1672
    %v1678 = vadd.f32 %v1677, %v614
    %v1679 = vmax.f32 %v1678, 0.0
    %v1680 = vpack.c.bf16 %v1679, %v1679
    %v1681 = vld [vmem:[#allocation8 + $0x80] sm:$0xf]
    %v1682 = vld [vmem:[#allocation8 + $0x84] sm:$0xf]
    %v1683 = vld [vmem:[#allocation8 + $0x88] sm:$0xf]
    %v1684 = vld [vmem:[#allocation8 + $0x8c] sm:$0xf]
    %v1685 = vld [vmem:[#allocation8 + $0x90] sm:$0xf]
    %v1686 = vld [vmem:[#allocation8 + $0x94] sm:$0xf]
    %v1687 = vld [vmem:[#allocation8 + $0x98] sm:$0xf]
    %v1688 = vld [vmem:[#allocation8 + $0x9c] sm:$0xf]
    %v1697 = vunpack.c.l.b16 %v1681
    %v1698 = vunpack.c.l.b16 %v1682
    %v1699 = vunpack.c.l.b16 %v1683
    %v1700 = vunpack.c.l.b16 %v1684
    %v1701 = vunpack.c.l.b16 %v1685
    %v1702 = vunpack.c.l.b16 %v1686
    %v1703 = vunpack.c.l.b16 %v1687
    %v1704 = vunpack.c.l.b16 %v1688
    %v1705 = vpack.c.b16 %v1698, %v1697
    %v1706 = vpack.c.b16 %v1700, %v1699
    %v1707 = vpack.c.b16 %v1702, %v1701
    %v1708 = vpack.c.b16 %v1704, %v1703
    %v1714 = vsel %vm875, %v1680, 0
    %1716 = vmatprep.subr.bf16.mxu0 0
    %1717 = vmatpush1.bf16.msra.mxu0 %v1705
    %1718 = vmatprep.subr.bf16.mxu0 0
    %1719 = vmatpush1.bf16.msra.mxu0 %v1706
    %1720 = vmatprep.subr.bf16.mxu0 0
    %1721 = vmatpush1.bf16.msra.mxu0 %v1707
    %1722 = vmatprep.subr.bf16.mxu0 0
    %1723 = vmatpush1.bf16.msra.mxu0 %v1708
    %1724 = vmatprep.subr.bf16.mxu0 0
    %1725 = vmatpush1.bf16.msra.mxu0 0
    %1726 = vmatprep.subr.bf16.mxu0 0
    %1727 = vmatpush1.bf16.msra.mxu0 0
    %1728 = vmatprep.subr.bf16.mxu0 0
    %1729 = vmatpush1.bf16.msra.mxu0 0
    %1730 = vmatprep.subr.bf16.mxu0 0
    %1731 = vmatpush1.bf16.msra.mxu0 0
    %1732 = vmatprep.subr.bf16.mxu0 0
    %1733 = vmatpush1.bf16.msra.mxu0 0
    %1734 = vmatprep.subr.bf16.mxu0 0
    %1735 = vmatpush1.bf16.msra.mxu0 0
    %1736 = vmatprep.subr.bf16.mxu0 0
    %1737 = vmatpush1.bf16.msra.mxu0 0
    %1738 = vmatprep.subr.bf16.mxu0 0
    %1739 = vmatpush1.bf16.msra.mxu0 0
    %1740 = vmatprep.subr.bf16.mxu0 0
    %1741 = vmatpush1.bf16.msra.mxu0 0
    %1742 = vmatprep.subr.bf16.mxu0 0
    %1743 = vmatpush1.bf16.msra.mxu0 0
    %1744 = vmatprep.subr.bf16.mxu0 0
    %1745 = vmatpush1.bf16.msra.mxu0 0
    %1746 = vmatprep.subr.bf16.mxu0 0
    %1747 = vmatpush1.bf16.msra.mxu0 0
    %1748 = vmatprep.mubr.bf16.mxu0 0
    %1749 = vmatmul.mubr.bf16.gmra.mrb[0].mxu0 %v1714
    %v1750 = vpop.f32.mrb[0].mxu0
    %v1751 = vadd.f32 0.0, %v1750
    %v1752 = vpop.f32.mrb[0].mxu0
    %v1753 = vpop.f32.mrb[0].mxu0
    %v1754 = vpop.f32.mrb[0].mxu0
    %1755 = vdwg.mxu0
    %v1756 = vadd.f32 %v1489, %v1751
    %1757 = vmatprep.subr.bf16.mxu0 0
    %1758 = vmatpush1.bf16.msra.mxu0 %v233
    %1759 = vmatprep.subr.bf16.mxu0 0
    %1760 = vmatpush1.bf16.msra.mxu0 %v234
    %1761 = vmatprep.subr.bf16.mxu0 0
    %1762 = vmatpush1.bf16.msra.mxu0 %v235
    %1763 = vmatprep.subr.bf16.mxu0 0
    %1764 = vmatpush1.bf16.msra.mxu0 %v236
    %1765 = vmatprep.subr.bf16.mxu0 0
    %1766 = vmatpush1.bf16.msra.mxu0 %v237
    %1767 = vmatprep.subr.bf16.mxu0 0
    %1768 = vmatpush1.bf16.msra.mxu0 %v238
    %1769 = vmatprep.subr.bf16.mxu0 0
    %1770 = vmatpush1.bf16.msra.mxu0 %v239
    %1771 = vmatprep.subr.bf16.mxu0 0
    %1772 = vmatpush1.bf16.msra.mxu0 %v240
    %1773 = vmatprep.subr.bf16.mxu0 0
    %1774 = vmatpush1.bf16.msra.mxu0 0
    %1775 = vmatprep.subr.bf16.mxu0 0
    %1776 = vmatpush1.bf16.msra.mxu0 0
    %1777 = vmatprep.subr.bf16.mxu0 0
    %1778 = vmatpush1.bf16.msra.mxu0 0
    %1779 = vmatprep.subr.bf16.mxu0 0
    %1780 = vmatpush1.bf16.msra.mxu0 0
    %1781 = vmatprep.subr.bf16.mxu0 0
    %1782 = vmatpush1.bf16.msra.mxu0 0
    %1783 = vmatprep.subr.bf16.mxu0 0
    %1784 = vmatpush1.bf16.msra.mxu0 0
    %1785 = vmatprep.subr.bf16.mxu0 0
    %1786 = vmatpush1.bf16.msra.mxu0 0
    %1787 = vmatprep.subr.bf16.mxu0 0
    %1788 = vmatpush1.bf16.msra.mxu0 0
    %1789 = vmatprep.mubr.bf16.mxu0 0
    %1790 = vmatmul.mubr.bf16.gmra.mrb[0].mxu0 %v792
    %v1791 = vpop.f32.mrb[0].mxu0
    %v1792 = vadd.f32 0.0, %v1791
    %v1793 = vpop.f32.mrb[0].mxu0
    %v1794 = vpop.f32.mrb[0].mxu0
    %v1795 = vpop.f32.mrb[0].mxu0
    %1796 = vdwg.mxu0
    %1797 = vmatprep.subr.bf16.mxu0 0
    %1798 = vmatpush1.bf16.msra.mxu0 %v325
    %1799 = vmatprep.subr.bf16.mxu0 0
    %1800 = vmatpush1.bf16.msra.mxu0 %v326
    %1801 = vmatprep.subr.bf16.mxu0 0
    %1802 = vmatpush1.bf16.msra.mxu0 %v327
    %1803 = vmatprep.subr.bf16.mxu0 0
    %1804 = vmatpush1.bf16.msra.mxu0 %v328
    %1805 = vmatprep.subr.bf16.mxu0 0
    %1806 = vmatpush1.bf16.msra.mxu0 %v329
    %1807 = vmatprep.subr.bf16.mxu0 0
    %1808 = vmatpush1.bf16.msra.mxu0 %v330
    %1809 = vmatprep.subr.bf16.mxu0 0
    %1810 = vmatpush1.bf16.msra.mxu0 %v331
    %1811 = vmatprep.subr.bf16.mxu0 0
    %1812 = vmatpush1.bf16.msra.mxu0 %v332
    %1813 = vmatprep.subr.bf16.mxu0 0
    %1814 = vmatpush1.bf16.msra.mxu0 0
    %1815 = vmatprep.subr.bf16.mxu0 0
    %1816 = vmatpush1.bf16.msra.mxu0 0
    %1817 = vmatprep.subr.bf16.mxu0 0
    %1818 = vmatpush1.bf16.msra.mxu0 0
    %1819 = vmatprep.subr.bf16.mxu0 0
    %1820 = vmatpush1.bf16.msra.mxu0 0
    %1821 = vmatprep.subr.bf16.mxu0 0
    %1822 = vmatpush1.bf16.msra.mxu0 0
    %1823 = vmatprep.subr.bf16.mxu0 0
    %1824 = vmatpush1.bf16.msra.mxu0 0
    %1825 = vmatprep.subr.bf16.mxu0 0
    %1826 = vmatpush1.bf16.msra.mxu0 0
    %1827 = vmatprep.subr.bf16.mxu0 0
    %1828 = vmatpush1.bf16.msra.mxu0 0
    %1829 = vmatprep.mubr.bf16.mxu0 0
    %1830 = vmatmul.mubr.bf16.gmra.mrb[0].mxu0 %v741
    %v1831 = vpop.f32.mrb[0].mxu0
    %v1832 = vadd.f32 %v1792, %v1831
    %v1833 = vpop.f32.mrb[0].mxu0
    %v1834 = vpop.f32.mrb[0].mxu0
    %v1835 = vpop.f32.mrb[0].mxu0
    %1836 = vdwg.mxu0
    %1838 = vmatprep.subr.bf16.mxu0 0
    %1839 = vmatpush1.bf16.msra.mxu0 %v442
    %1840 = vmatprep.subr.bf16.mxu0 0
    %1841 = vmatpush1.bf16.msra.mxu0 %v443
    %1842 = vmatprep.subr.bf16.mxu0 0
    %1843 = vmatpush1.bf16.msra.mxu0 %v444
    %1844 = vmatprep.subr.bf16.mxu0 0
    %1845 = vmatpush1.bf16.msra.mxu0 %v445
    %1846 = vmatprep.subr.bf16.mxu0 0
    %1847 = vmatpush1.bf16.msra.mxu0 %v446
    %1848 = vmatprep.subr.bf16.mxu0 0
    %1849 = vmatpush1.bf16.msra.mxu0 %v447
    %1850 = vmatprep.subr.bf16.mxu0 0
    %1851 = vmatpush1.bf16.msra.mxu0 %v448
    %1852 = vmatprep.subr.bf16.mxu0 0
    %1853 = vmatpush1.bf16.msra.mxu0 %v449
    %1854 = vmatprep.subr.bf16.mxu0 0
    %1855 = vmatpush1.bf16.msra.mxu0 0
    %1856 = vmatprep.subr.bf16.mxu0 0
    %1857 = vmatpush1.bf16.msra.mxu0 0
    %1858 = vmatprep.subr.bf16.mxu0 0
    %1859 = vmatpush1.bf16.msra.mxu0 0
    %1860 = vmatprep.subr.bf16.mxu0 0
    %1861 = vmatpush1.bf16.msra.mxu0 0
    %1862 = vmatprep.subr.bf16.mxu0 0
    %1863 = vmatpush1.bf16.msra.mxu0 0
    %1864 = vmatprep.subr.bf16.mxu0 0
    %1865 = vmatpush1.bf16.msra.mxu0 0
    %1866 = vmatprep.subr.bf16.mxu0 0
    %1867 = vmatpush1.bf16.msra.mxu0 0
    %1868 = vmatprep.subr.bf16.mxu0 0
    %1869 = vmatpush1.bf16.msra.mxu0 0
    %1870 = vmatprep.mubr.bf16.mxu0 0
    %1871 = vmatmul.mubr.bf16.gmra.mrb[0].mxu0 %v1579
    %v1872 = vpop.f32.mrb[0].mxu0
    %v1873 = vadd.f32 0.0, %v1872
    %v1874 = vpop.f32.mrb[0].mxu0
    %v1875 = vpop.f32.mrb[0].mxu0
    %v1876 = vpop.f32.mrb[0].mxu0
    %1877 = vdwg.mxu0
    %v1878 = vadd.f32 %v1832, %v1873
    %1880 = vmatprep.subr.bf16.mxu0 0
    %1881 = vmatpush1.bf16.msra.mxu0 %v552
    %1882 = vmatprep.subr.bf16.mxu0 0
    %1883 = vmatpush1.bf16.msra.mxu0 %v553
    %1884 = vmatprep.subr.bf16.mxu0 0
    %1885 = vmatpush1.bf16.msra.mxu0 %v554
    %1886 = vmatprep.subr.bf16.mxu0 0
    %1887 = vmatpush1.bf16.msra.mxu0 %v555
    %1888 = vmatprep.subr.bf16.mxu0 0
    %1889 = vmatpush1.bf16.msra.mxu0 %v556
    %1890 = vmatprep.subr.bf16.mxu0 0
    %1891 = vmatpush1.bf16.msra.mxu0 %v557
    %1892 = vmatprep.subr.bf16.mxu0 0
    %1893 = vmatpush1.bf16.msra.mxu0 %v558
    %1894 = vmatprep.subr.bf16.mxu0 0
    %1895 = vmatpush1.bf16.msra.mxu0 %v559
    %1896 = vmatprep.subr.bf16.mxu0 0
    %1897 = vmatpush1.bf16.msra.mxu0 0
    %1898 = vmatprep.subr.bf16.mxu0 0
    %1899 = vmatpush1.bf16.msra.mxu0 0
    %1900 = vmatprep.subr.bf16.mxu0 0
    %1901 = vmatpush1.bf16.msra.mxu0 0
    %1902 = vmatprep.subr.bf16.mxu0 0
    %1903 = vmatpush1.bf16.msra.mxu0 0
    %1904 = vmatprep.subr.bf16.mxu0 0
    %1905 = vmatpush1.bf16.msra.mxu0 0
    %1906 = vmatprep.subr.bf16.mxu0 0
    %1907 = vmatpush1.bf16.msra.mxu0 0
    %1908 = vmatprep.subr.bf16.mxu0 0
    %1909 = vmatpush1.bf16.msra.mxu0 0
    %1910 = vmatprep.subr.bf16.mxu0 0
    %1911 = vmatpush1.bf16.msra.mxu0 0
    %1912 = vmatprep.mubr.bf16.mxu0 0
    %1913 = vmatmul.mubr.bf16.gmra.mrb[0].mxu0 %v1630
    %v1914 = vpop.f32.mrb[0].mxu0
    %v1915 = vadd.f32 0.0, %v1914
    %v1916 = vpop.f32.mrb[0].mxu0
    %v1917 = vpop.f32.mrb[0].mxu0
    %v1918 = vpop.f32.mrb[0].mxu0
    %1919 = vdwg.mxu0
    %v1920 = vadd.f32 %v1878, %v1915
    %v1921 = vadd.f32 %v1920, %v614
    %v1922 = vmax.f32 %v1921, 0.0
    %v1923 = vpack.c.bf16 %v1922, %v1922
    %v1924 = vld [vmem:[#allocation8 + $0xa0] sm:$0xf]
    %v1925 = vld [vmem:[#allocation8 + $0xa4] sm:$0xf]
    %v1926 = vld [vmem:[#allocation8 + $0xa8] sm:$0xf]
    %v1927 = vld [vmem:[#allocation8 + $0xac] sm:$0xf]
    %v1928 = vld [vmem:[#allocation8 + $0xb0] sm:$0xf]
    %v1929 = vld [vmem:[#allocation8 + $0xb4] sm:$0xf]
    %v1930 = vld [vmem:[#allocation8 + $0xb8] sm:$0xf]
    %v1931 = vld [vmem:[#allocation8 + $0xbc] sm:$0xf]
    %v1940 = vunpack.c.l.b16 %v1924
    %v1941 = vunpack.c.l.b16 %v1925
    %v1942 = vunpack.c.l.b16 %v1926
    %v1943 = vunpack.c.l.b16 %v1927
    %v1944 = vunpack.c.l.b16 %v1928
    %v1945 = vunpack.c.l.b16 %v1929
    %v1946 = vunpack.c.l.b16 %v1930
    %v1947 = vunpack.c.l.b16 %v1931
    %v1948 = vpack.c.b16 %v1941, %v1940
    %v1949 = vpack.c.b16 %v1943, %v1942
    %v1950 = vpack.c.b16 %v1945, %v1944
    %v1951 = vpack.c.b16 %v1947, %v1946
    %v1957 = vsel %vm875, %v1923, 0
    %1959 = vmatprep.subr.bf16.mxu0 0
    %1960 = vmatpush1.bf16.msra.mxu0 %v1948
    %1961 = vmatprep.subr.bf16.mxu0 0
    %1962 = vmatpush1.bf16.msra.mxu0 %v1949
    %1963 = vmatprep.subr.bf16.mxu0 0
    %1964 = vmatpush1.bf16.msra.mxu0 %v1950
    %1965 = vmatprep.subr.bf16.mxu0 0
    %1966 = vmatpush1.bf16.msra.mxu0 %v1951
    %1967 = vmatprep.subr.bf16.mxu0 0
    %1968 = vmatpush1.bf16.msra.mxu0 0
    %1969 = vmatprep.subr.bf16.mxu0 0
    %1970 = vmatpush1.bf16.msra.mxu0 0
    %1971 = vmatprep.subr.bf16.mxu0 0
    %1972 = vmatpush1.bf16.msra.mxu0 0
    %1973 = vmatprep.subr.bf16.mxu0 0
    %1974 = vmatpush1.bf16.msra.mxu0 0
    %1975 = vmatprep.subr.bf16.mxu0 0
    %1976 = vmatpush1.bf16.msra.mxu0 0
    %1977 = vmatprep.subr.bf16.mxu0 0
    %1978 = vmatpush1.bf16.msra.mxu0 0
    %1979 = vmatprep.subr.bf16.mxu0 0
    %1980 = vmatpush1.bf16.msra.mxu0 0
    %1981 = vmatprep.subr.bf16.mxu0 0
    %1982 = vmatpush1.bf16.msra.mxu0 0
    %1983 = vmatprep.subr.bf16.mxu0 0
    %1984 = vmatpush1.bf16.msra.mxu0 0
    %1985 = vmatprep.subr.bf16.mxu0 0
    %1986 = vmatpush1.bf16.msra.mxu0 0
    %1987 = vmatprep.subr.bf16.mxu0 0
    %1988 = vmatpush1.bf16.msra.mxu0 0
    %1989 = vmatprep.subr.bf16.mxu0 0
    %1990 = vmatpush1.bf16.msra.mxu0 0
    %1991 = vmatprep.mubr.bf16.mxu0 0
    %1992 = vmatmul.mubr.bf16.gmra.mrb[0].mxu0 %v1957
    %v1993 = vpop.f32.mrb[0].mxu0
    %v1994 = vadd.f32 0.0, %v1993
    %v1995 = vpop.f32.mrb[0].mxu0
    %v1996 = vpop.f32.mrb[0].mxu0
    %v1997 = vpop.f32.mrb[0].mxu0
    %1998 = vdwg.mxu0
    %v1999 = vadd.f32 %v1756, %v1994
    %2000 = vmatprep.subr.bf16.mxu0 0
    %2001 = vmatpush1.bf16.msra.mxu0 %v233
    %2002 = vmatprep.subr.bf16.mxu0 0
    %2003 = vmatpush1.bf16.msra.mxu0 %v234
    %2004 = vmatprep.subr.bf16.mxu0 0
    %2005 = vmatpush1.bf16.msra.mxu0 %v235
    %2006 = vmatprep.subr.bf16.mxu0 0
    %2007 = vmatpush1.bf16.msra.mxu0 %v236
    %2008 = vmatprep.subr.bf16.mxu0 0
    %2009 = vmatpush1.bf16.msra.mxu0 %v237
    %2010 = vmatprep.subr.bf16.mxu0 0
    %2011 = vmatpush1.bf16.msra.mxu0 %v238
    %2012 = vmatprep.subr.bf16.mxu0 0
    %2013 = vmatpush1.bf16.msra.mxu0 %v239
    %2014 = vmatprep.subr.bf16.mxu0 0
    %2015 = vmatpush1.bf16.msra.mxu0 %v240
    %2016 = vmatprep.subr.bf16.mxu0 0
    %2017 = vmatpush1.bf16.msra.mxu0 0
    %2018 = vmatprep.subr.bf16.mxu0 0
    %2019 = vmatpush1.bf16.msra.mxu0 0
    %2020 = vmatprep.subr.bf16.mxu0 0
    %2021 = vmatpush1.bf16.msra.mxu0 0
    %2022 = vmatprep.subr.bf16.mxu0 0
    %2023 = vmatpush1.bf16.msra.mxu0 0
    %2024 = vmatprep.subr.bf16.mxu0 0
    %2025 = vmatpush1.bf16.msra.mxu0 0
    %2026 = vmatprep.subr.bf16.mxu0 0
    %2027 = vmatpush1.bf16.msra.mxu0 0
    %2028 = vmatprep.subr.bf16.mxu0 0
    %2029 = vmatpush1.bf16.msra.mxu0 0
    %2030 = vmatprep.subr.bf16.mxu0 0
    %2031 = vmatpush1.bf16.msra.mxu0 0
    %2032 = vmatprep.mubr.bf16.mxu0 0
    %2033 = vmatmul.mubr.bf16.gmra.mrb[0].mxu0 %v1368
    %v2034 = vpop.f32.mrb[0].mxu0
    %v2035 = vadd.f32 0.0, %v2034
    %v2036 = vpop.f32.mrb[0].mxu0
    %v2037 = vpop.f32.mrb[0].mxu0
    %v2038 = vpop.f32.mrb[0].mxu0
    %2039 = vdwg.mxu0
    %2040 = vmatprep.subr.bf16.mxu0 0
    %2041 = vmatpush1.bf16.msra.mxu0 %v325
    %2042 = vmatprep.subr.bf16.mxu0 0
    %2043 = vmatpush1.bf16.msra.mxu0 %v326
    %2044 = vmatprep.subr.bf16.mxu0 0
    %2045 = vmatpush1.bf16.msra.mxu0 %v327
    %2046 = vmatprep.subr.bf16.mxu0 0
    %2047 = vmatpush1.bf16.msra.mxu0 %v328
    %2048 = vmatprep.subr.bf16.mxu0 0
    %2049 = vmatpush1.bf16.msra.mxu0 %v329
    %2050 = vmatprep.subr.bf16.mxu0 0
    %2051 = vmatpush1.bf16.msra.mxu0 %v330
    %2052 = vmatprep.subr.bf16.mxu0 0
    %2053 = vmatpush1.bf16.msra.mxu0 %v331
    %2054 = vmatprep.subr.bf16.mxu0 0
    %2055 = vmatpush1.bf16.msra.mxu0 %v332
    %2056 = vmatprep.subr.bf16.mxu0 0
    %2057 = vmatpush1.bf16.msra.mxu0 0
    %2058 = vmatprep.subr.bf16.mxu0 0
    %2059 = vmatpush1.bf16.msra.mxu0 0
    %2060 = vmatprep.subr.bf16.mxu0 0
    %2061 = vmatpush1.bf16.msra.mxu0 0
    %2062 = vmatprep.subr.bf16.mxu0 0
    %2063 = vmatpush1.bf16.msra.mxu0 0
    %2064 = vmatprep.subr.bf16.mxu0 0
    %2065 = vmatpush1.bf16.msra.mxu0 0
    %2066 = vmatprep.subr.bf16.mxu0 0
    %2067 = vmatpush1.bf16.msra.mxu0 0
    %2068 = vmatprep.subr.bf16.mxu0 0
    %2069 = vmatpush1.bf16.msra.mxu0 0
    %2070 = vmatprep.subr.bf16.mxu0 0
    %2071 = vmatpush1.bf16.msra.mxu0 0
    %2072 = vmatprep.mubr.bf16.mxu0 0
    %2073 = vmatmul.mubr.bf16.gmra.mrb[0].mxu0 %v1322
    %v2074 = vpop.f32.mrb[0].mxu0
    %v2075 = vadd.f32 %v2035, %v2074
    %v2076 = vpop.f32.mrb[0].mxu0
    %v2077 = vpop.f32.mrb[0].mxu0
    %v2078 = vpop.f32.mrb[0].mxu0
    %2079 = vdwg.mxu0
    %v2082 = vunpack.c.l.b16 %v154
    %v2083 = vunpack.c.l.b16 %v155
    %v2084 = vpack.c.b16 %v2082, %v2082
    %v2085 = vpack.c.b16 %v2083, %v2083
    %v2086 = vunpack.c.l.b16 %v2084
    %v2087 = vunpack.c.l.b16 %v2085
    %v2088 = vrot.slane %v2086, 6
    %v2089 = vrot.slane %v2087, 5
    %v2090 = vsel %vm197, %v2089, %v2088
    %v2091 = vpack.c.b16 %v2090, %v2090
    %2093 = vmatprep.subr.bf16.mxu0 0
    %2094 = vmatpush1.bf16.msra.mxu0 %v442
    %2095 = vmatprep.subr.bf16.mxu0 0
    %2096 = vmatpush1.bf16.msra.mxu0 %v443
    %2097 = vmatprep.subr.bf16.mxu0 0
    %2098 = vmatpush1.bf16.msra.mxu0 %v444
    %2099 = vmatprep.subr.bf16.mxu0 0
    %2100 = vmatpush1.bf16.msra.mxu0 %v445
    %2101 = vmatprep.subr.bf16.mxu0 0
    %2102 = vmatpush1.bf16.msra.mxu0 %v446
    %2103 = vmatprep.subr.bf16.mxu0 0
    %2104 = vmatpush1.bf16.msra.mxu0 %v447
    %2105 = vmatprep.subr.bf16.mxu0 0
    %2106 = vmatpush1.bf16.msra.mxu0 %v448
    %2107 = vmatprep.subr.bf16.mxu0 0
    %2108 = vmatpush1.bf16.msra.mxu0 %v449
    %2109 = vmatprep.subr.bf16.mxu0 0
    %2110 = vmatpush1.bf16.msra.mxu0 0
    %2111 = vmatprep.subr.bf16.mxu0 0
    %2112 = vmatpush1.bf16.msra.mxu0 0
    %2113 = vmatprep.subr.bf16.mxu0 0
    %2114 = vmatpush1.bf16.msra.mxu0 0
    %2115 = vmatprep.subr.bf16.mxu0 0
    %2116 = vmatpush1.bf16.msra.mxu0 0
    %2117 = vmatprep.subr.bf16.mxu0 0
    %2118 = vmatpush1.bf16.msra.mxu0 0
    %2119 = vmatprep.subr.bf16.mxu0 0
    %2120 = vmatpush1.bf16.msra.mxu0 0
    %2121 = vmatprep.subr.bf16.mxu0 0
    %2122 = vmatpush1.bf16.msra.mxu0 0
    %2123 = vmatprep.subr.bf16.mxu0 0
    %2124 = vmatpush1.bf16.msra.mxu0 0
    %2125 = vmatprep.mubr.bf16.mxu0 0
    %2126 = vmatmul.mubr.bf16.gmra.mrb[0].mxu0 %v2091
    %v2127 = vpop.f32.mrb[0].mxu0
    %v2128 = vadd.f32 0.0, %v2127
    %v2129 = vpop.f32.mrb[0].mxu0
    %v2130 = vpop.f32.mrb[0].mxu0
    %v2131 = vpop.f32.mrb[0].mxu0
    %2132 = vdwg.mxu0
    %v2133 = vadd.f32 %v2075, %v2128
    %v2134 = vrot.slane %v2086, 7
    %v2135 = vrot.slane %v2087, 6
    %v2136 = vsel %vm197, %v2135, %v2134
    %v2137 = vpack.c.b16 %v2136, %v2136
    %2139 = vmatprep.subr.bf16.mxu0 0
    %2140 = vmatpush1.bf16.msra.mxu0 %v552
    %2141 = vmatprep.subr.bf16.mxu0 0
    %2142 = vmatpush1.bf16.msra.mxu0 %v553
    %2143 = vmatprep.subr.bf16.mxu0 0
    %2144 = vmatpush1.bf16.msra.mxu0 %v554
    %2145 = vmatprep.subr.bf16.mxu0 0
    %2146 = vmatpush1.bf16.msra.mxu0 %v555
    %2147 = vmatprep.subr.bf16.mxu0 0
    %2148 = vmatpush1.bf16.msra.mxu0 %v556
    %2149 = vmatprep.subr.bf16.mxu0 0
    %2150 = vmatpush1.bf16.msra.mxu0 %v557
    %2151 = vmatprep.subr.bf16.mxu0 0
    %2152 = vmatpush1.bf16.msra.mxu0 %v558
    %2153 = vmatprep.subr.bf16.mxu0 0
    %2154 = vmatpush1.bf16.msra.mxu0 %v559
    %2155 = vmatprep.subr.bf16.mxu0 0
    %2156 = vmatpush1.bf16.msra.mxu0 0
    %2157 = vmatprep.subr.bf16.mxu0 0
    %2158 = vmatpush1.bf16.msra.mxu0 0
    %2159 = vmatprep.subr.bf16.mxu0 0
    %2160 = vmatpush1.bf16.msra.mxu0 0
    %2161 = vmatprep.subr.bf16.mxu0 0
    %2162 = vmatpush1.bf16.msra.mxu0 0
    %2163 = vmatprep.subr.bf16.mxu0 0
    %2164 = vmatpush1.bf16.msra.mxu0 0
    %2165 = vmatprep.subr.bf16.mxu0 0
    %2166 = vmatpush1.bf16.msra.mxu0 0
    %2167 = vmatprep.subr.bf16.mxu0 0
    %2168 = vmatpush1.bf16.msra.mxu0 0
    %2169 = vmatprep.subr.bf16.mxu0 0
    %2170 = vmatpush1.bf16.msra.mxu0 0
    %2171 = vmatprep.mubr.bf16.mxu0 0
    %2172 = vmatmul.mubr.bf16.gmra.mrb[0].mxu0 %v2137
    %v2173 = vpop.f32.mrb[0].mxu0
    %v2174 = vadd.f32 0.0, %v2173
    %v2175 = vpop.f32.mrb[0].mxu0
    %v2176 = vpop.f32.mrb[0].mxu0
    %v2177 = vpop.f32.mrb[0].mxu0
    %2178 = vdwg.mxu0
    %v2179 = vadd.f32 %v2133, %v2174
    %v2180 = vadd.f32 %v2179, %v614
    %v2181 = vmax.f32 %v2180, 0.0
    %v2182 = vpack.c.bf16 %v2181, %v2181
    %v2183 = vld [vmem:[#allocation8 + $0xc0] sm:$0xf]
    %v2184 = vld [vmem:[#allocation8 + $0xc4] sm:$0xf]
    %v2185 = vld [vmem:[#allocation8 + $0xc8] sm:$0xf]
    %v2186 = vld [vmem:[#allocation8 + $0xcc] sm:$0xf]
    %v2187 = vld [vmem:[#allocation8 + $0xd0] sm:$0xf]
    %v2188 = vld [vmem:[#allocation8 + $0xd4] sm:$0xf]
    %v2189 = vld [vmem:[#allocation8 + $0xd8] sm:$0xf]
    %v2190 = vld [vmem:[#allocation8 + $0xdc] sm:$0xf]
    %v2199 = vunpack.c.l.b16 %v2183
    %v2200 = vunpack.c.l.b16 %v2184
    %v2201 = vunpack.c.l.b16 %v2185
    %v2202 = vunpack.c.l.b16 %v2186
    %v2203 = vunpack.c.l.b16 %v2187
    %v2204 = vunpack.c.l.b16 %v2188
    %v2205 = vunpack.c.l.b16 %v2189
    %v2206 = vunpack.c.l.b16 %v2190
    %v2207 = vpack.c.b16 %v2200, %v2199
    %v2208 = vpack.c.b16 %v2202, %v2201
    %v2209 = vpack.c.b16 %v2204, %v2203
    %v2210 = vpack.c.b16 %v2206, %v2205
    %v2216 = vsel %vm875, %v2182, 0
    %2218 = vmatprep.subr.bf16.mxu0 0
    %2219 = vmatpush1.bf16.msra.mxu0 %v2207
    %2220 = vmatprep.subr.bf16.mxu0 0
    %2221 = vmatpush1.bf16.msra.mxu0 %v2208
    %2222 = vmatprep.subr.bf16.mxu0 0
    %2223 = vmatpush1.bf16.msra.mxu0 %v2209
    %2224 = vmatprep.subr.bf16.mxu0 0
    %2225 = vmatpush1.bf16.msra.mxu0 %v2210
    %2226 = vmatprep.subr.bf16.mxu0 0
    %2227 = vmatpush1.bf16.msra.mxu0 0
    %2228 = vmatprep.subr.bf16.mxu0 0
    %2229 = vmatpush1.bf16.msra.mxu0 0
    %2230 = vmatprep.subr.bf16.mxu0 0
    %2231 = vmatpush1.bf16.msra.mxu0 0
    %2232 = vmatprep.subr.bf16.mxu0 0
    %2233 = vmatpush1.bf16.msra.mxu0 0
    %2234 = vmatprep.subr.bf16.mxu0 0
    %2235 = vmatpush1.bf16.msra.mxu0 0
    %2236 = vmatprep.subr.bf16.mxu0 0
    %2237 = vmatpush1.bf16.msra.mxu0 0
    %2238 = vmatprep.subr.bf16.mxu0 0
    %2239 = vmatpush1.bf16.msra.mxu0 0
    %2240 = vmatprep.subr.bf16.mxu0 0
    %2241 = vmatpush1.bf16.msra.mxu0 0
    %2242 = vmatprep.subr.bf16.mxu0 0
    %2243 = vmatpush1.bf16.msra.mxu0 0
    %2244 = vmatprep.subr.bf16.mxu0 0
    %2245 = vmatpush1.bf16.msra.mxu0 0
    %2246 = vmatprep.subr.bf16.mxu0 0
    %2247 = vmatpush1.bf16.msra.mxu0 0
    %2248 = vmatprep.subr.bf16.mxu0 0
    %2249 = vmatpush1.bf16.msra.mxu0 0
    %2250 = vmatprep.mubr.bf16.mxu0 0
    %2251 = vmatmul.mubr.bf16.gmra.mrb[0].mxu0 %v2216
    %v2252 = vpop.f32.mrb[0].mxu0
    %v2253 = vadd.f32 0.0, %v2252
    %v2254 = vpop.f32.mrb[0].mxu0
    %v2255 = vpop.f32.mrb[0].mxu0
    %v2256 = vpop.f32.mrb[0].mxu0
    %2257 = vdwg.mxu0
    %v2258 = vadd.f32 %v1999, %v2253
    %2259 = vmatprep.subr.bf16.mxu0 0
    %2260 = vmatpush1.bf16.msra.mxu0 %v233
    %2261 = vmatprep.subr.bf16.mxu0 0
    %2262 = vmatpush1.bf16.msra.mxu0 %v234
    %2263 = vmatprep.subr.bf16.mxu0 0
    %2264 = vmatpush1.bf16.msra.mxu0 %v235
    %2265 = vmatprep.subr.bf16.mxu0 0
    %2266 = vmatpush1.bf16.msra.mxu0 %v236
    %2267 = vmatprep.subr.bf16.mxu0 0
    %2268 = vmatpush1.bf16.msra.mxu0 %v237
    %2269 = vmatprep.subr.bf16.mxu0 0
    %2270 = vmatpush1.bf16.msra.mxu0 %v238
    %2271 = vmatprep.subr.bf16.mxu0 0
    %2272 = vmatpush1.bf16.msra.mxu0 %v239
    %2273 = vmatprep.subr.bf16.mxu0 0
    %2274 = vmatpush1.bf16.msra.mxu0 %v240
    %2275 = vmatprep.subr.bf16.mxu0 0
    %2276 = vmatpush1.bf16.msra.mxu0 0
    %2277 = vmatprep.subr.bf16.mxu0 0
    %2278 = vmatpush1.bf16.msra.mxu0 0
    %2279 = vmatprep.subr.bf16.mxu0 0
    %2280 = vmatpush1.bf16.msra.mxu0 0
    %2281 = vmatprep.subr.bf16.mxu0 0
    %2282 = vmatpush1.bf16.msra.mxu0 0
    %2283 = vmatprep.subr.bf16.mxu0 0
    %2284 = vmatpush1.bf16.msra.mxu0 0
    %2285 = vmatprep.subr.bf16.mxu0 0
    %2286 = vmatpush1.bf16.msra.mxu0 0
    %2287 = vmatprep.subr.bf16.mxu0 0
    %2288 = vmatpush1.bf16.msra.mxu0 0
    %2289 = vmatprep.subr.bf16.mxu0 0
    %2290 = vmatpush1.bf16.msra.mxu0 0
    %2291 = vmatprep.mubr.bf16.mxu0 0
    %2292 = vmatmul.mubr.bf16.gmra.mrb[0].mxu0 %v1635
    %v2293 = vpop.f32.mrb[0].mxu0
    %v2294 = vadd.f32 0.0, %v2293
    %v2295 = vpop.f32.mrb[0].mxu0
    %v2296 = vpop.f32.mrb[0].mxu0
    %v2297 = vpop.f32.mrb[0].mxu0
    %2298 = vdwg.mxu0
    %2299 = vmatprep.subr.bf16.mxu0 0
    %2300 = vmatpush1.bf16.msra.mxu0 %v325
    %2301 = vmatprep.subr.bf16.mxu0 0
    %2302 = vmatpush1.bf16.msra.mxu0 %v326
    %2303 = vmatprep.subr.bf16.mxu0 0
    %2304 = vmatpush1.bf16.msra.mxu0 %v327
    %2305 = vmatprep.subr.bf16.mxu0 0
    %2306 = vmatpush1.bf16.msra.mxu0 %v328
    %2307 = vmatprep.subr.bf16.mxu0 0
    %2308 = vmatpush1.bf16.msra.mxu0 %v329
    %2309 = vmatprep.subr.bf16.mxu0 0
    %2310 = vmatpush1.bf16.msra.mxu0 %v330
    %2311 = vmatprep.subr.bf16.mxu0 0
    %2312 = vmatpush1.bf16.msra.mxu0 %v331
    %2313 = vmatprep.subr.bf16.mxu0 0
    %2314 = vmatpush1.bf16.msra.mxu0 %v332
    %2315 = vmatprep.subr.bf16.mxu0 0
    %2316 = vmatpush1.bf16.msra.mxu0 0
    %2317 = vmatprep.subr.bf16.mxu0 0
    %2318 = vmatpush1.bf16.msra.mxu0 0
    %2319 = vmatprep.subr.bf16.mxu0 0
    %2320 = vmatpush1.bf16.msra.mxu0 0
    %2321 = vmatprep.subr.bf16.mxu0 0
    %2322 = vmatpush1.bf16.msra.mxu0 0
    %2323 = vmatprep.subr.bf16.mxu0 0
    %2324 = vmatpush1.bf16.msra.mxu0 0
    %2325 = vmatprep.subr.bf16.mxu0 0
    %2326 = vmatpush1.bf16.msra.mxu0 0
    %2327 = vmatprep.subr.bf16.mxu0 0
    %2328 = vmatpush1.bf16.msra.mxu0 0
    %2329 = vmatprep.subr.bf16.mxu0 0
    %2330 = vmatpush1.bf16.msra.mxu0 0
    %2331 = vmatprep.mubr.bf16.mxu0 0
    %2332 = vmatmul.mubr.bf16.gmra.mrb[0].mxu0 %v1584
    %v2333 = vpop.f32.mrb[0].mxu0
    %v2334 = vadd.f32 %v2294, %v2333
    %v2335 = vpop.f32.mrb[0].mxu0
    %v2336 = vpop.f32.mrb[0].mxu0
    %v2337 = vpop.f32.mrb[0].mxu0
    %2338 = vdwg.mxu0
    %v2339 = vunpack.c.h.b16 %v154
    %v2340 = vunpack.c.h.b16 %v155
    %v2341 = vpack.c.b16 %v2339, %v2339
    %v2342 = vpack.c.b16 %v2340, %v2340
    %v2343 = vunpack.c.l.b16 %v2341
    %v2344 = vunpack.c.l.b16 %v2342
    %v2345 = vrot.slane %v2343, 6
    %v2346 = vrot.slane %v2344, 5
    %v2347 = vsel %vm197, %v2346, %v2345
    %v2348 = vpack.c.b16 %v2347, %v2347
    %2349 = vrot.lane.b32.xlu0 %v2091, 64
    %v2350 = vpop.permute.xlu0 %2349
    %2351 = vrot.lane.b32.xlu0 %v2348, 64
    %v2352 = vpop.permute.xlu0 %2351
    %v2353 = vsel %vm640, %v2350, %v2352
    %2355 = vmatprep.subr.bf16.mxu0 0
    %2356 = vmatpush1.bf16.msra.mxu0 %v442
    %2357 = vmatprep.subr.bf16.mxu0 0
    %2358 = vmatpush1.bf16.msra.mxu0 %v443
    %2359 = vmatprep.subr.bf16.mxu0 0
    %2360 = vmatpush1.bf16.msra.mxu0 %v444
    %2361 = vmatprep.subr.bf16.mxu0 0
    %2362 = vmatpush1.bf16.msra.mxu0 %v445
    %2363 = vmatprep.subr.bf16.mxu0 0
    %2364 = vmatpush1.bf16.msra.mxu0 %v446
    %2365 = vmatprep.subr.bf16.mxu0 0
    %2366 = vmatpush1.bf16.msra.mxu0 %v447
    %2367 = vmatprep.subr.bf16.mxu0 0
    %2368 = vmatpush1.bf16.msra.mxu0 %v448
    %2369 = vmatprep.subr.bf16.mxu0 0
    %2370 = vmatpush1.bf16.msra.mxu0 %v449
    %2371 = vmatprep.subr.bf16.mxu0 0
    %2372 = vmatpush1.bf16.msra.mxu0 0
    %2373 = vmatprep.subr.bf16.mxu0 0
    %2374 = vmatpush1.bf16.msra.mxu0 0
    %2375 = vmatprep.subr.bf16.mxu0 0
    %2376 = vmatpush1.bf16.msra.mxu0 0
    %2377 = vmatprep.subr.bf16.mxu0 0
    %2378 = vmatpush1.bf16.msra.mxu0 0
    %2379 = vmatprep.subr.bf16.mxu0 0
    %2380 = vmatpush1.bf16.msra.mxu0 0
    %2381 = vmatprep.subr.bf16.mxu0 0
    %2382 = vmatpush1.bf16.msra.mxu0 0
    %2383 = vmatprep.subr.bf16.mxu0 0
    %2384 = vmatpush1.bf16.msra.mxu0 0
    %2385 = vmatprep.subr.bf16.mxu0 0
    %2386 = vmatpush1.bf16.msra.mxu0 0
    %2387 = vmatprep.mubr.bf16.mxu0 0
    %2388 = vmatmul.mubr.bf16.gmra.mrb[0].mxu0 %v2353
    %v2389 = vpop.f32.mrb[0].mxu0
    %v2390 = vadd.f32 0.0, %v2389
    %v2391 = vpop.f32.mrb[0].mxu0
    %v2392 = vpop.f32.mrb[0].mxu0
    %v2393 = vpop.f32.mrb[0].mxu0
    %2394 = vdwg.mxu0
    %v2395 = vadd.f32 %v2334, %v2390
    %v2396 = vrot.slane %v2343, 7
    %v2397 = vrot.slane %v2344, 6
    %v2398 = vsel %vm197, %v2397, %v2396
    %v2399 = vpack.c.b16 %v2398, %v2398
    %2400 = vrot.lane.b32.xlu0 %v2137, 64
    %v2401 = vpop.permute.xlu0 %2400
    %2402 = vrot.lane.b32.xlu0 %v2399, 64
    %v2403 = vpop.permute.xlu0 %2402
    %v2404 = vsel %vm640, %v2401, %v2403
    %2406 = vmatprep.subr.bf16.mxu0 0
    %2407 = vmatpush1.bf16.msra.mxu0 %v552
    %2408 = vmatprep.subr.bf16.mxu0 0
    %2409 = vmatpush1.bf16.msra.mxu0 %v553
    %2410 = vmatprep.subr.bf16.mxu0 0
    %2411 = vmatpush1.bf16.msra.mxu0 %v554
    %2412 = vmatprep.subr.bf16.mxu0 0
    %2413 = vmatpush1.bf16.msra.mxu0 %v555
    %2414 = vmatprep.subr.bf16.mxu0 0
    %2415 = vmatpush1.bf16.msra.mxu0 %v556
    %2416 = vmatprep.subr.bf16.mxu0 0
    %2417 = vmatpush1.bf16.msra.mxu0 %v557
    %2418 = vmatprep.subr.bf16.mxu0 0
    %2419 = vmatpush1.bf16.msra.mxu0 %v558
    %2420 = vmatprep.subr.bf16.mxu0 0
    %2421 = vmatpush1.bf16.msra.mxu0 %v559
    %2422 = vmatprep.subr.bf16.mxu0 0
    %2423 = vmatpush1.bf16.msra.mxu0 0
    %2424 = vmatprep.subr.bf16.mxu0 0
    %2425 = vmatpush1.bf16.msra.mxu0 0
    %2426 = vmatprep.subr.bf16.mxu0 0
    %2427 = vmatpush1.bf16.msra.mxu0 0
    %2428 = vmatprep.subr.bf16.mxu0 0
    %2429 = vmatpush1.bf16.msra.mxu0 0
    %2430 = vmatprep.subr.bf16.mxu0 0
    %2431 = vmatpush1.bf16.msra.mxu0 0
    %2432 = vmatprep.subr.bf16.mxu0 0
    %2433 = vmatpush1.bf16.msra.mxu0 0
    %2434 = vmatprep.subr.bf16.mxu0 0
    %2435 = vmatpush1.bf16.msra.mxu0 0
    %2436 = vmatprep.subr.bf16.mxu0 0
    %2437 = vmatpush1.bf16.msra.mxu0 0
    %2438 = vmatprep.mubr.bf16.mxu0 0
    %2439 = vmatmul.mubr.bf16.gmra.mrb[0].mxu0 %v2404
    %v2440 = vpop.f32.mrb[0].mxu0
    %v2441 = vadd.f32 0.0, %v2440
    %v2442 = vpop.f32.mrb[0].mxu0
    %v2443 = vpop.f32.mrb[0].mxu0
    %v2444 = vpop.f32.mrb[0].mxu0
    %2445 = vdwg.mxu0
    %v2446 = vadd.f32 %v2395, %v2441
    %v2447 = vadd.f32 %v2446, %v614
    %v2448 = vmax.f32 %v2447, 0.0
    %v2449 = vpack.c.bf16 %v2448, %v2448
    %v2450 = vld [vmem:[#allocation8 + $0xe0] sm:$0xf]
    %v2451 = vld [vmem:[#allocation8 + $0xe4] sm:$0xf]
    %v2452 = vld [vmem:[#allocation8 + $0xe8] sm:$0xf]
    %v2453 = vld [vmem:[#allocation8 + $0xec] sm:$0xf]
    %v2454 = vld [vmem:[#allocation8 + $0xf0] sm:$0xf]
    %v2455 = vld [vmem:[#allocation8 + $0xf4] sm:$0xf]
    %v2456 = vld [vmem:[#allocation8 + $0xf8] sm:$0xf]
    %v2457 = vld [vmem:[#allocation8 + $0xfc] sm:$0xf]
    %v2466 = vunpack.c.l.b16 %v2450
    %v2467 = vunpack.c.l.b16 %v2451
    %v2468 = vunpack.c.l.b16 %v2452
    %v2469 = vunpack.c.l.b16 %v2453
    %v2470 = vunpack.c.l.b16 %v2454
    %v2471 = vunpack.c.l.b16 %v2455
    %v2472 = vunpack.c.l.b16 %v2456
    %v2473 = vunpack.c.l.b16 %v2457
    %v2474 = vpack.c.b16 %v2467, %v2466
    %v2475 = vpack.c.b16 %v2469, %v2468
    %v2476 = vpack.c.b16 %v2471, %v2470
    %v2477 = vpack.c.b16 %v2473, %v2472
    %v2483 = vsel %vm875, %v2449, 0
    %2485 = vmatprep.subr.bf16.mxu0 0
    %2486 = vmatpush1.bf16.msra.mxu0 %v2474
    %2487 = vmatprep.subr.bf16.mxu0 0
    %2488 = vmatpush1.bf16.msra.mxu0 %v2475
    %2489 = vmatprep.subr.bf16.mxu0 0
    %2490 = vmatpush1.bf16.msra.mxu0 %v2476
    %2491 = vmatprep.subr.bf16.mxu0 0
    %2492 = vmatpush1.bf16.msra.mxu0 %v2477
    %2493 = vmatprep.subr.bf16.mxu0 0
    %2494 = vmatpush1.bf16.msra.mxu0 0
    %2495 = vmatprep.subr.bf16.mxu0 0
    %2496 = vmatpush1.bf16.msra.mxu0 0
    %2497 = vmatprep.subr.bf16.mxu0 0
    %2498 = vmatpush1.bf16.msra.mxu0 0
    %2499 = vmatprep.subr.bf16.mxu0 0
    %2500 = vmatpush1.bf16.msra.mxu0 0
    %2501 = vmatprep.subr.bf16.mxu0 0
    %2502 = vmatpush1.bf16.msra.mxu0 0
    %2503 = vmatprep.subr.bf16.mxu0 0
    %2504 = vmatpush1.bf16.msra.mxu0 0
    %2505 = vmatprep.subr.bf16.mxu0 0
    %2506 = vmatpush1.bf16.msra.mxu0 0
    %2507 = vmatprep.subr.bf16.mxu0 0
    %2508 = vmatpush1.bf16.msra.mxu0 0
    %2509 = vmatprep.subr.bf16.mxu0 0
    %2510 = vmatpush1.bf16.msra.mxu0 0
    %2511 = vmatprep.subr.bf16.mxu0 0
    %2512 = vmatpush1.bf16.msra.mxu0 0
    %2513 = vmatprep.subr.bf16.mxu0 0
    %2514 = vmatpush1.bf16.msra.mxu0 0
    %2515 = vmatprep.subr.bf16.mxu0 0
    %2516 = vmatpush1.bf16.msra.mxu0 0
    %2517 = vmatprep.mubr.bf16.mxu0 0
    %2518 = vmatmul.mubr.bf16.gmra.mrb[0].mxu0 %v2483
    %v2519 = vpop.f32.mrb[0].mxu0
    %v2520 = vadd.f32 0.0, %v2519
    %v2521 = vpop.f32.mrb[0].mxu0
    %v2522 = vpop.f32.mrb[0].mxu0
    %v2523 = vpop.f32.mrb[0].mxu0
    %2524 = vdwg.mxu0
    %v2525 = vadd.f32 %v2258, %v2520
    %2526 = vmatprep.subr.bf16.mxu0 0
    %2527 = vmatpush1.bf16.msra.mxu0 %v233
    %2528 = vmatprep.subr.bf16.mxu0 0
    %2529 = vmatpush1.bf16.msra.mxu0 %v234
    %2530 = vmatprep.subr.bf16.mxu0 0
    %2531 = vmatpush1.bf16.msra.mxu0 %v235
    %2532 = vmatprep.subr.bf16.mxu0 0
    %2533 = vmatpush1.bf16.msra.mxu0 %v236
    %2534 = vmatprep.subr.bf16.mxu0 0
    %2535 = vmatpush1.bf16.msra.mxu0 %v237
    %2536 = vmatprep.subr.bf16.mxu0 0
    %2537 = vmatpush1.bf16.msra.mxu0 %v238
    %2538 = vmatprep.subr.bf16.mxu0 0
    %2539 = vmatpush1.bf16.msra.mxu0 %v239
    %2540 = vmatprep.subr.bf16.mxu0 0
    %2541 = vmatpush1.bf16.msra.mxu0 %v240
    %2542 = vmatprep.subr.bf16.mxu0 0
    %2543 = vmatpush1.bf16.msra.mxu0 0
    %2544 = vmatprep.subr.bf16.mxu0 0
    %2545 = vmatpush1.bf16.msra.mxu0 0
    %2546 = vmatprep.subr.bf16.mxu0 0
    %2547 = vmatpush1.bf16.msra.mxu0 0
    %2548 = vmatprep.subr.bf16.mxu0 0
    %2549 = vmatpush1.bf16.msra.mxu0 0
    %2550 = vmatprep.subr.bf16.mxu0 0
    %2551 = vmatpush1.bf16.msra.mxu0 0
    %2552 = vmatprep.subr.bf16.mxu0 0
    %2553 = vmatpush1.bf16.msra.mxu0 0
    %2554 = vmatprep.subr.bf16.mxu0 0
    %2555 = vmatpush1.bf16.msra.mxu0 0
    %2556 = vmatprep.subr.bf16.mxu0 0
    %2557 = vmatpush1.bf16.msra.mxu0 0
    %2558 = vmatprep.mubr.bf16.mxu0 0
    %2559 = vmatmul.mubr.bf16.gmra.mrb[0].mxu0 %v1630
    %v2560 = vpop.f32.mrb[0].mxu0
    %v2561 = vadd.f32 0.0, %v2560
    %v2562 = vpop.f32.mrb[0].mxu0
    %v2563 = vpop.f32.mrb[0].mxu0
    %v2564 = vpop.f32.mrb[0].mxu0
    %2565 = vdwg.mxu0
    %2566 = vmatprep.subr.bf16.mxu0 0
    %2567 = vmatpush1.bf16.msra.mxu0 %v325
    %2568 = vmatprep.subr.bf16.mxu0 0
    %2569 = vmatpush1.bf16.msra.mxu0 %v326
    %2570 = vmatprep.subr.bf16.mxu0 0
    %2571 = vmatpush1.bf16.msra.mxu0 %v327
    %2572 = vmatprep.subr.bf16.mxu0 0
    %2573 = vmatpush1.bf16.msra.mxu0 %v328
    %2574 = vmatprep.subr.bf16.mxu0 0
    %2575 = vmatpush1.bf16.msra.mxu0 %v329
    %2576 = vmatprep.subr.bf16.mxu0 0
    %2577 = vmatpush1.bf16.msra.mxu0 %v330
    %2578 = vmatprep.subr.bf16.mxu0 0
    %2579 = vmatpush1.bf16.msra.mxu0 %v331
    %2580 = vmatprep.subr.bf16.mxu0 0
    %2581 = vmatpush1.bf16.msra.mxu0 %v332
    %2582 = vmatprep.subr.bf16.mxu0 0
    %2583 = vmatpush1.bf16.msra.mxu0 0
    %2584 = vmatprep.subr.bf16.mxu0 0
    %2585 = vmatpush1.bf16.msra.mxu0 0
    %2586 = vmatprep.subr.bf16.mxu0 0
    %2587 = vmatpush1.bf16.msra.mxu0 0
    %2588 = vmatprep.subr.bf16.mxu0 0
    %2589 = vmatpush1.bf16.msra.mxu0 0
    %2590 = vmatprep.subr.bf16.mxu0 0
    %2591 = vmatpush1.bf16.msra.mxu0 0
    %2592 = vmatprep.subr.bf16.mxu0 0
    %2593 = vmatpush1.bf16.msra.mxu0 0
    %2594 = vmatprep.subr.bf16.mxu0 0
    %2595 = vmatpush1.bf16.msra.mxu0 0
    %2596 = vmatprep.subr.bf16.mxu0 0
    %2597 = vmatpush1.bf16.msra.mxu0 0
    %2598 = vmatprep.mubr.bf16.mxu0 0
    %2599 = vmatmul.mubr.bf16.gmra.mrb[0].mxu0 %v1579
    %v2600 = vpop.f32.mrb[0].mxu0
    %v2601 = vadd.f32 %v2561, %v2600
    %v2602 = vpop.f32.mrb[0].mxu0
    %v2603 = vpop.f32.mrb[0].mxu0
    %v2604 = vpop.f32.mrb[0].mxu0
    %2605 = vdwg.mxu0
    %2607 = vmatprep.subr.bf16.mxu0 0
    %2608 = vmatpush1.bf16.msra.mxu0 %v442
    %2609 = vmatprep.subr.bf16.mxu0 0
    %2610 = vmatpush1.bf16.msra.mxu0 %v443
    %2611 = vmatprep.subr.bf16.mxu0 0
    %2612 = vmatpush1.bf16.msra.mxu0 %v444
    %2613 = vmatprep.subr.bf16.mxu0 0
    %2614 = vmatpush1.bf16.msra.mxu0 %v445
    %2615 = vmatprep.subr.bf16.mxu0 0
    %2616 = vmatpush1.bf16.msra.mxu0 %v446
    %2617 = vmatprep.subr.bf16.mxu0 0
    %2618 = vmatpush1.bf16.msra.mxu0 %v447
    %2619 = vmatprep.subr.bf16.mxu0 0
    %2620 = vmatpush1.bf16.msra.mxu0 %v448
    %2621 = vmatprep.subr.bf16.mxu0 0
    %2622 = vmatpush1.bf16.msra.mxu0 %v449
    %2623 = vmatprep.subr.bf16.mxu0 0
    %2624 = vmatpush1.bf16.msra.mxu0 0
    %2625 = vmatprep.subr.bf16.mxu0 0
    %2626 = vmatpush1.bf16.msra.mxu0 0
    %2627 = vmatprep.subr.bf16.mxu0 0
    %2628 = vmatpush1.bf16.msra.mxu0 0
    %2629 = vmatprep.subr.bf16.mxu0 0
    %2630 = vmatpush1.bf16.msra.mxu0 0
    %2631 = vmatprep.subr.bf16.mxu0 0
    %2632 = vmatpush1.bf16.msra.mxu0 0
    %2633 = vmatprep.subr.bf16.mxu0 0
    %2634 = vmatpush1.bf16.msra.mxu0 0
    %2635 = vmatprep.subr.bf16.mxu0 0
    %2636 = vmatpush1.bf16.msra.mxu0 0
    %2637 = vmatprep.subr.bf16.mxu0 0
    %2638 = vmatpush1.bf16.msra.mxu0 0
    %2639 = vmatprep.mubr.bf16.mxu0 0
    %2640 = vmatmul.mubr.bf16.gmra.mrb[0].mxu0 %v2348
    %v2641 = vpop.f32.mrb[0].mxu0
    %v2642 = vadd.f32 0.0, %v2641
    %v2643 = vpop.f32.mrb[0].mxu0
    %v2644 = vpop.f32.mrb[0].mxu0
    %v2645 = vpop.f32.mrb[0].mxu0
    %2646 = vdwg.mxu0
    %v2647 = vadd.f32 %v2601, %v2642
    %2649 = vmatprep.subr.bf16.mxu0 0
    %2650 = vmatpush1.bf16.msra.mxu0 %v552
    %2651 = vmatprep.subr.bf16.mxu0 0
    %2652 = vmatpush1.bf16.msra.mxu0 %v553
    %2653 = vmatprep.subr.bf16.mxu0 0
    %2654 = vmatpush1.bf16.msra.mxu0 %v554
    %2655 = vmatprep.subr.bf16.mxu0 0
    %2656 = vmatpush1.bf16.msra.mxu0 %v555
    %2657 = vmatprep.subr.bf16.mxu0 0
    %2658 = vmatpush1.bf16.msra.mxu0 %v556
    %2659 = vmatprep.subr.bf16.mxu0 0
    %2660 = vmatpush1.bf16.msra.mxu0 %v557
    %2661 = vmatprep.subr.bf16.mxu0 0
    %2662 = vmatpush1.bf16.msra.mxu0 %v558
    %2663 = vmatprep.subr.bf16.mxu0 0
    %2664 = vmatpush1.bf16.msra.mxu0 %v559
    %2665 = vmatprep.subr.bf16.mxu0 0
    %2666 = vmatpush1.bf16.msra.mxu0 0
    %2667 = vmatprep.subr.bf16.mxu0 0
    %2668 = vmatpush1.bf16.msra.mxu0 0
    %2669 = vmatprep.subr.bf16.mxu0 0
    %2670 = vmatpush1.bf16.msra.mxu0 0
    %2671 = vmatprep.subr.bf16.mxu0 0
    %2672 = vmatpush1.bf16.msra.mxu0 0
    %2673 = vmatprep.subr.bf16.mxu0 0
    %2674 = vmatpush1.bf16.msra.mxu0 0
    %2675 = vmatprep.subr.bf16.mxu0 0
    %2676 = vmatpush1.bf16.msra.mxu0 0
    %2677 = vmatprep.subr.bf16.mxu0 0
    %2678 = vmatpush1.bf16.msra.mxu0 0
    %2679 = vmatprep.subr.bf16.mxu0 0
    %2680 = vmatpush1.bf16.msra.mxu0 0
    %2681 = vmatprep.mubr.bf16.mxu0 0
    %2682 = vmatmul.mubr.bf16.gmra.mrb[0].mxu0 %v2399
    %v2683 = vpop.f32.mrb[0].mxu0
    %v2684 = vadd.f32 0.0, %v2683
    %v2685 = vpop.f32.mrb[0].mxu0
    %v2686 = vpop.f32.mrb[0].mxu0
    %v2687 = vpop.f32.mrb[0].mxu0
    %2688 = vdwg.mxu0
    %v2689 = vadd.f32 %v2647, %v2684
    %v2690 = vadd.f32 %v2689, %v614
    %v2691 = vmax.f32 %v2690, 0.0
    %v2692 = vpack.c.bf16 %v2691, %v2691
    %v2693 = vld [vmem:[#allocation8 + $0x100] sm:$0xf]
    %v2694 = vld [vmem:[#allocation8 + $0x104] sm:$0xf]
    %v2695 = vld [vmem:[#allocation8 + $0x108] sm:$0xf]
    %v2696 = vld [vmem:[#allocation8 + $0x10c] sm:$0xf]
    %v2697 = vld [vmem:[#allocation8 + $0x110] sm:$0xf]
    %v2698 = vld [vmem:[#allocation8 + $0x114] sm:$0xf]
    %v2699 = vld [vmem:[#allocation8 + $0x118] sm:$0xf]
    %v2700 = vld [vmem:[#allocation8 + $0x11c] sm:$0xf]
    %v2709 = vunpack.c.l.b16 %v2693
    %v2710 = vunpack.c.l.b16 %v2694
    %v2711 = vunpack.c.l.b16 %v2695
    %v2712 = vunpack.c.l.b16 %v2696
    %v2713 = vunpack.c.l.b16 %v2697
    %v2714 = vunpack.c.l.b16 %v2698
    %v2715 = vunpack.c.l.b16 %v2699
    %v2716 = vunpack.c.l.b16 %v2700
    %v2717 = vpack.c.b16 %v2710, %v2709
    %v2718 = vpack.c.b16 %v2712, %v2711
    %v2719 = vpack.c.b16 %v2714, %v2713
    %v2720 = vpack.c.b16 %v2716, %v2715
    %v2726 = vsel %vm875, %v2692, 0
    %2728 = vmatprep.subr.bf16.mxu0 0
    %2729 = vmatpush1.bf16.msra.mxu0 %v2717
    %2730 = vmatprep.subr.bf16.mxu0 0
    %2731 = vmatpush1.bf16.msra.mxu0 %v2718
    %2732 = vmatprep.subr.bf16.mxu0 0
    %2733 = vmatpush1.bf16.msra.mxu0 %v2719
    %2734 = vmatprep.subr.bf16.mxu0 0
    %2735 = vmatpush1.bf16.msra.mxu0 %v2720
    %2736 = vmatprep.subr.bf16.mxu0 0
    %2737 = vmatpush1.bf16.msra.mxu0 0
    %2738 = vmatprep.subr.bf16.mxu0 0
    %2739 = vmatpush1.bf16.msra.mxu0 0
    %2740 = vmatprep.subr.bf16.mxu0 0
    %2741 = vmatpush1.bf16.msra.mxu0 0
    %2742 = vmatprep.subr.bf16.mxu0 0
    %2743 = vmatpush1.bf16.msra.mxu0 0
    %2744 = vmatprep.subr.bf16.mxu0 0
    %2745 = vmatpush1.bf16.msra.mxu0 0
    %2746 = vmatprep.subr.bf16.mxu0 0
    %2747 = vmatpush1.bf16.msra.mxu0 0
    %2748 = vmatprep.subr.bf16.mxu0 0
    %2749 = vmatpush1.bf16.msra.mxu0 0
    %2750 = vmatprep.subr.bf16.mxu0 0
    %2751 = vmatpush1.bf16.msra.mxu0 0
    %2752 = vmatprep.subr.bf16.mxu0 0
    %2753 = vmatpush1.bf16.msra.mxu0 0
    %2754 = vmatprep.subr.bf16.mxu0 0
    %2755 = vmatpush1.bf16.msra.mxu0 0
    %2756 = vmatprep.subr.bf16.mxu0 0
    %2757 = vmatpush1.bf16.msra.mxu0 0
    %2758 = vmatprep.subr.bf16.mxu0 0
    %2759 = vmatpush1.bf16.msra.mxu0 0
    %2760 = vmatprep.mubr.bf16.mxu0 0
    %2761 = vmatmul.mubr.bf16.gmra.mrb[0].mxu0 %v2726
    %v2762 = vpop.f32.mrb[0].mxu0
    %v2763 = vadd.f32 0.0, %v2762
    %v2764 = vpop.f32.mrb[0].mxu0
    %v2765 = vpop.f32.mrb[0].mxu0
    %v2766 = vpop.f32.mrb[0].mxu0
    %2767 = vdwg.mxu0
    %v2768 = vadd.f32 %v2525, %v2763
    %v2769 = vld [vmem:[#allocation10] sm:$0x1]
    %v2771 = vlaneseq
    %v2772 = vshrl.u32 %v2771, 7
    %v2773 = vsub.s32 0, %v2772
    %v2774 = vrot.slane %v2769, %v2773
    %v2776 = vadd.f32 %v2768, %v2774
    %v2777 = vmax.f32 %v2776, 0.0
    %v2778 = vpack.c.bf16 %v2777, %v2777
    %v2779 = vld [vmem:[#allocation11] sm:$0xff]
    %v2780 = vld [vmem:[#allocation11 + $0x8] sm:$0xff]
    %v2781 = vld [vmem:[#allocation11 + $0x10] sm:$0xff]
    %v2782 = vld [vmem:[#allocation11 + $0x18] sm:$0xff]
    %v2783 = vld [vmem:[#allocation11 + $0x20] sm:$0xff]
    %v2784 = vld [vmem:[#allocation11 + $0x28] sm:$0xff]
    %v2785 = vld [vmem:[#allocation11 + $0x30] sm:$0xff]
    %v2786 = vld [vmem:[#allocation11 + $0x38] sm:$0xff]
    %v2787 = vld [vmem:[#allocation11 + $0x40] sm:$0xff]
    %v2788 = vld [vmem:[#allocation11 + $0x48] sm:$0xff]
    %v2789 = vld [vmem:[#allocation11 + $0x50] sm:$0xff]
    %v2790 = vld [vmem:[#allocation11 + $0x58] sm:$0xff]
    %v2791 = vld [vmem:[#allocation11 + $0x60] sm:$0xff]
    %v2792 = vld [vmem:[#allocation11 + $0x68] sm:$0xff]
    %v2793 = vld [vmem:[#allocation11 + $0x70] sm:$0xff]
    %v2794 = vld [vmem:[#allocation11 + $0x78] sm:$0xff]
    %v2795 = vld [vmem:[#allocation11 + $0x80] sm:$0xff]
    %v2796 = vld [vmem:[#allocation11 + $0x88] sm:$0xff]
    %v2797 = vld [vmem:[#allocation11 + $0x90] sm:$0xff]
    %v2798 = vld [vmem:[#allocation11 + $0x98] sm:$0xff]
    %v2799 = vld [vmem:[#allocation11 + $0xa0] sm:$0xff]
    %v2800 = vld [vmem:[#allocation11 + $0xa8] sm:$0xff]
    %v2801 = vld [vmem:[#allocation11 + $0xb0] sm:$0xff]
    %v2802 = vld [vmem:[#allocation11 + $0xb8] sm:$0xff]
    %v2803 = vld [vmem:[#allocation11 + $0xc0] sm:$0xff]
    %v2804 = vld [vmem:[#allocation11 + $0xc8] sm:$0xff]
    %v2805 = vld [vmem:[#allocation11 + $0xd0] sm:$0xff]
    %v2806 = vld [vmem:[#allocation11 + $0xd8] sm:$0xff]
    %v2807 = vld [vmem:[#allocation11 + $0xe0] sm:$0xff]
    %v2808 = vld [vmem:[#allocation11 + $0xe8] sm:$0xff]
    %v2809 = vld [vmem:[#allocation11 + $0xf0] sm:$0xff]
    %v2810 = vld [vmem:[#allocation11 + $0xf8] sm:$0xff]
    %v2811 = vld [vmem:[#allocation13] sm:$0xff]
    %v2813 = vlaneseq
    %v2814 = vshrl.u32 %v2813, 7
    %v2815 = vsub.s32 0, %v2814
    %v2816 = vrot.slane %v2811, %v2815
    %v2817 = vlaneseq
    %v2818 = vshrl.u32 %v2817, 7
    %v2819 = vsub.s32 1, %v2818
    %v2820 = vrot.slane %v2811, %v2819
    %v2821 = vlaneseq
    %v2822 = vshrl.u32 %v2821, 7
    %v2823 = vsub.s32 2, %v2822
    %v2824 = vrot.slane %v2811, %v2823
    %v2825 = vlaneseq
    %v2826 = vshrl.u32 %v2825, 7
    %v2827 = vsub.s32 3, %v2826
    %v2828 = vrot.slane %v2811, %v2827
    %v2829 = vlaneseq
    %v2830 = vshrl.u32 %v2829, 7
    %v2831 = vsub.s32 4, %v2830
    %v2832 = vrot.slane %v2811, %v2831
    %v2833 = vlaneseq
    %v2834 = vshrl.u32 %v2833, 7
    %v2835 = vsub.s32 5, %v2834
    %v2836 = vrot.slane %v2811, %v2835
    %v2837 = vlaneseq
    %v2838 = vshrl.u32 %v2837, 7
    %v2839 = vsub.s32 6, %v2838
    %v2840 = vrot.slane %v2811, %v2839
    %v2841 = vlaneseq
    %v2842 = vshrl.u32 %v2841, 7
    %v2843 = vsub.s32 7, %v2842
    %v2844 = vrot.slane %v2811, %v2843
    %v2885 = vunpack.c.l.b16 %v2779
    %v2886 = vunpack.c.h.b16 %v2779
    %v2887 = vunpack.c.l.b16 %v2780
    %v2888 = vunpack.c.h.b16 %v2780
    %v2889 = vunpack.c.l.b16 %v2781
    %v2890 = vunpack.c.h.b16 %v2781
    %v2891 = vunpack.c.l.b16 %v2782
    %v2892 = vunpack.c.h.b16 %v2782
    %v2893 = vunpack.c.l.b16 %v2783
    %v2894 = vunpack.c.h.b16 %v2783
    %v2895 = vunpack.c.l.b16 %v2784
    %v2896 = vunpack.c.h.b16 %v2784
    %v2897 = vunpack.c.l.b16 %v2785
    %v2898 = vunpack.c.h.b16 %v2785
    %v2899 = vunpack.c.l.b16 %v2786
    %v2900 = vunpack.c.h.b16 %v2786
    %v2901 = vunpack.c.l.b16 %v2787
    %v2902 = vunpack.c.h.b16 %v2787
    %v2903 = vunpack.c.l.b16 %v2788
    %v2904 = vunpack.c.h.b16 %v2788
    %v2905 = vunpack.c.l.b16 %v2789
    %v2906 = vunpack.c.h.b16 %v2789
    %v2907 = vunpack.c.l.b16 %v2790
    %v2908 = vunpack.c.h.b16 %v2790
    %v2909 = vunpack.c.l.b16 %v2791
    %v2910 = vunpack.c.h.b16 %v2791
    %v2911 = vunpack.c.l.b16 %v2792
    %v2912 = vunpack.c.h.b16 %v2792
    %v2913 = vunpack.c.l.b16 %v2793
    %v2914 = vunpack.c.h.b16 %v2793
    %v2915 = vunpack.c.l.b16 %v2794
    %v2916 = vunpack.c.h.b16 %v2794
    %v2917 = vunpack.c.l.b16 %v2795
    %v2918 = vunpack.c.h.b16 %v2795
    %v2919 = vunpack.c.l.b16 %v2796
    %v2920 = vunpack.c.h.b16 %v2796
    %v2921 = vunpack.c.l.b16 %v2797
    %v2922 = vunpack.c.h.b16 %v2797
    %v2923 = vunpack.c.l.b16 %v2798
    %v2924 = vunpack.c.h.b16 %v2798
    %v2925 = vunpack.c.l.b16 %v2799
    %v2926 = vunpack.c.h.b16 %v2799
    %v2927 = vunpack.c.l.b16 %v2800
    %v2928 = vunpack.c.h.b16 %v2800
    %v2929 = vunpack.c.l.b16 %v2801
    %v2930 = vunpack.c.h.b16 %v2801
    %v2931 = vunpack.c.l.b16 %v2802
    %v2932 = vunpack.c.h.b16 %v2802
    %v2933 = vunpack.c.l.b16 %v2803
    %v2934 = vunpack.c.h.b16 %v2803
    %v2935 = vunpack.c.l.b16 %v2804
    %v2936 = vunpack.c.h.b16 %v2804
    %v2937 = vunpack.c.l.b16 %v2805
    %v2938 = vunpack.c.h.b16 %v2805
    %v2939 = vunpack.c.l.b16 %v2806
    %v2940 = vunpack.c.h.b16 %v2806
    %v2941 = vunpack.c.l.b16 %v2807
    %v2942 = vunpack.c.h.b16 %v2807
    %v2943 = vunpack.c.l.b16 %v2808
    %v2944 = vunpack.c.h.b16 %v2808
    %v2945 = vunpack.c.l.b16 %v2809
    %v2946 = vunpack.c.h.b16 %v2809
    %v2947 = vunpack.c.l.b16 %v2810
    %v2948 = vunpack.c.h.b16 %v2810
    %v2949 = vpack.c.b16 %v2893, %v2885
    %v2950 = vpack.c.b16 %v2894, %v2886
    %v2951 = vpack.c.b16 %v2895, %v2887
    %v2952 = vpack.c.b16 %v2896, %v2888
    %v2953 = vpack.c.b16 %v2897, %v2889
    %v2954 = vpack.c.b16 %v2898, %v2890
    %v2955 = vpack.c.b16 %v2899, %v2891
    %v2956 = vpack.c.b16 %v2900, %v2892
    %v2957 = vpack.c.b16 %v2909, %v2901
    %v2958 = vpack.c.b16 %v2910, %v2902
    %v2959 = vpack.c.b16 %v2911, %v2903
    %v2960 = vpack.c.b16 %v2912, %v2904
    %v2961 = vpack.c.b16 %v2913, %v2905
    %v2962 = vpack.c.b16 %v2914, %v2906
    %v2963 = vpack.c.b16 %v2915, %v2907
    %v2964 = vpack.c.b16 %v2916, %v2908
    %v2965 = vpack.c.b16 %v2925, %v2917
    %v2966 = vpack.c.b16 %v2926, %v2918
    %v2967 = vpack.c.b16 %v2927, %v2919
    %v2968 = vpack.c.b16 %v2928, %v2920
    %v2969 = vpack.c.b16 %v2929, %v2921
    %v2970 = vpack.c.b16 %v2930, %v2922
    %v2971 = vpack.c.b16 %v2931, %v2923
    %v2972 = vpack.c.b16 %v2932, %v2924
    %v2973 = vpack.c.b16 %v2941, %v2933
    %v2974 = vpack.c.b16 %v2942, %v2934
    %v2975 = vpack.c.b16 %v2943, %v2935
    %v2976 = vpack.c.b16 %v2944, %v2936
    %v2977 = vpack.c.b16 %v2945, %v2937
    %v2978 = vpack.c.b16 %v2946, %v2938
    %v2979 = vpack.c.b16 %v2947, %v2939
    %v2980 = vpack.c.b16 %v2948, %v2940
    %v3014 = vsel %vm875, %v2778, 0
    %3016 = vmatprep.subr.bf16.mxu0 %v2950
    %3017 = vmatpush1.bf16.msra.mxu0 %v2949
    %3018 = vmatprep.subr.bf16.mxu0 %v2958
    %3019 = vmatpush1.bf16.msra.mxu0 %v2957
    %3020 = vmatprep.subr.bf16.mxu0 %v2966
    %3021 = vmatpush1.bf16.msra.mxu0 %v2965
    %3022 = vmatprep.subr.bf16.mxu0 %v2974
    %3023 = vmatpush1.bf16.msra.mxu0 %v2973
    %3024 = vmatprep.subr.bf16.mxu0 0
    %3025 = vmatpush1.bf16.msra.mxu0 0
    %3026 = vmatprep.subr.bf16.mxu0 0
    %3027 = vmatpush1.bf16.msra.mxu0 0
    %3028 = vmatprep.subr.bf16.mxu0 0
    %3029 = vmatpush1.bf16.msra.mxu0 0
    %3030 = vmatprep.subr.bf16.mxu0 0
    %3031 = vmatpush1.bf16.msra.mxu0 0
    %3032 = vmatprep.subr.bf16.mxu0 0
    %3033 = vmatpush1.bf16.msra.mxu0 0
    %3034 = vmatprep.subr.bf16.mxu0 0
    %3035 = vmatpush1.bf16.msra.mxu0 0
    %3036 = vmatprep.subr.bf16.mxu0 0
    %3037 = vmatpush1.bf16.msra.mxu0 0
    %3038 = vmatprep.subr.bf16.mxu0 0
    %3039 = vmatpush1.bf16.msra.mxu0 0
    %3040 = vmatprep.subr.bf16.mxu0 0
    %3041 = vmatpush1.bf16.msra.mxu0 0
    %3042 = vmatprep.subr.bf16.mxu0 0
    %3043 = vmatpush1.bf16.msra.mxu0 0
    %3044 = vmatprep.subr.bf16.mxu0 0
    %3045 = vmatpush1.bf16.msra.mxu0 0
    %3046 = vmatprep.subr.bf16.mxu0 0
    %3047 = vmatpush1.bf16.msra.mxu0 0
    %3048 = vmatprep.mubr.bf16.mxu0 0
    %3049 = vmatmul.mubr.bf16.gmra.mrb[0].mxu0 %v3014
    %v3050 = vpop.f32.mrb[0].mxu0
    %v3051 = vadd.f32 %v2816, %v3050
    %v3052 = vpop.f32.mrb[0].mxu0
    %v3053 = vadd.f32 %v2820, %v3052
    %v3054 = vpop.f32.mrb[0].mxu0
    %v3055 = vpop.f32.mrb[0].mxu0
    %3056 = vdwg.mxu0
    %3057 = vmatprep.subr.bf16.mxu0 %v2952
    %3058 = vmatpush1.bf16.msra.mxu0 %v2951
    %3059 = vmatprep.subr.bf16.mxu0 %v2960
    %3060 = vmatpush1.bf16.msra.mxu0 %v2959
    %3061 = vmatprep.subr.bf16.mxu0 %v2968
    %3062 = vmatpush1.bf16.msra.mxu0 %v2967
    %3063 = vmatprep.subr.bf16.mxu0 %v2976
    %3064 = vmatpush1.bf16.msra.mxu0 %v2975
    %3065 = vmatprep.subr.bf16.mxu0 0
    %3066 = vmatpush1.bf16.msra.mxu0 0
    %3067 = vmatprep.subr.bf16.mxu0 0
    %3068 = vmatpush1.bf16.msra.mxu0 0
    %3069 = vmatprep.subr.bf16.mxu0 0
    %3070 = vmatpush1.bf16.msra.mxu0 0
    %3071 = vmatprep.subr.bf16.mxu0 0
    %3072 = vmatpush1.bf16.msra.mxu0 0
    %3073 = vmatprep.subr.bf16.mxu0 0
    %3074 = vmatpush1.bf16.msra.mxu0 0
    %3075 = vmatprep.subr.bf16.mxu0 0
    %3076 = vmatpush1.bf16.msra.mxu0 0
    %3077 = vmatprep.subr.bf16.mxu0 0
    %3078 = vmatpush1.bf16.msra.mxu0 0
    %3079 = vmatprep.subr.bf16.mxu0 0
    %3080 = vmatpush1.bf16.msra.mxu0 0
    %3081 = vmatprep.subr.bf16.mxu0 0
    %3082 = vmatpush1.bf16.msra.mxu0 0
    %3083 = vmatprep.subr.bf16.mxu0 0
    %3084 = vmatpush1.bf16.msra.mxu0 0
    %3085 = vmatprep.subr.bf16.mxu0 0
    %3086 = vmatpush1.bf16.msra.mxu0 0
    %3087 = vmatprep.subr.bf16.mxu0 0
    %3088 = vmatpush1.bf16.msra.mxu0 0
    %3089 = vmatprep.mubr.bf16.mxu0 0
    %3090 = vmatmul.mubr.bf16.gmra.mrb[0].mxu0 %v3014
    %v3091 = vpop.f32.mrb[0].mxu0
    %v3092 = vadd.f32 %v2824, %v3091
    %v3093 = vpop.f32.mrb[0].mxu0
    %v3094 = vadd.f32 %v2828, %v3093
    %v3095 = vpop.f32.mrb[0].mxu0
    %v3096 = vpop.f32.mrb[0].mxu0
    %3097 = vdwg.mxu0
    %3098 = vmatprep.subr.bf16.mxu0 %v2954
    %3099 = vmatpush1.bf16.msra.mxu0 %v2953
    %3100 = vmatprep.subr.bf16.mxu0 %v2962
    %3101 = vmatpush1.bf16.msra.mxu0 %v2961
    %3102 = vmatprep.subr.bf16.mxu0 %v2970
    %3103 = vmatpush1.bf16.msra.mxu0 %v2969
    %3104 = vmatprep.subr.bf16.mxu0 %v2978
    %3105 = vmatpush1.bf16.msra.mxu0 %v2977
    %3106 = vmatprep.subr.bf16.mxu0 0
    %3107 = vmatpush1.bf16.msra.mxu0 0
    %3108 = vmatprep.subr.bf16.mxu0 0
    %3109 = vmatpush1.bf16.msra.mxu0 0
    %3110 = vmatprep.subr.bf16.mxu0 0
    %3111 = vmatpush1.bf16.msra.mxu0 0
    %3112 = vmatprep.subr.bf16.mxu0 0
    %3113 = vmatpush1.bf16.msra.mxu0 0
    %3114 = vmatprep.subr.bf16.mxu0 0
    %3115 = vmatpush1.bf16.msra.mxu0 0
    %3116 = vmatprep.subr.bf16.mxu0 0
    %3117 = vmatpush1.bf16.msra.mxu0 0
    %3118 = vmatprep.subr.bf16.mxu0 0
    %3119 = vmatpush1.bf16.msra.mxu0 0
    %3120 = vmatprep.subr.bf16.mxu0 0
    %3121 = vmatpush1.bf16.msra.mxu0 0
    %3122 = vmatprep.subr.bf16.mxu0 0
    %3123 = vmatpush1.bf16.msra.mxu0 0
    %3124 = vmatprep.subr.bf16.mxu0 0
    %3125 = vmatpush1.bf16.msra.mxu0 0
    %3126 = vmatprep.subr.bf16.mxu0 0
    %3127 = vmatpush1.bf16.msra.mxu0 0
    %3128 = vmatprep.subr.bf16.mxu0 0
    %3129 = vmatpush1.bf16.msra.mxu0 0
    %3130 = vmatprep.mubr.bf16.mxu0 0
    %3131 = vmatmul.mubr.bf16.gmra.mrb[0].mxu0 %v3014
    %v3132 = vpop.f32.mrb[0].mxu0
    %v3133 = vadd.f32 %v2832, %v3132
    %v3134 = vpop.f32.mrb[0].mxu0
    %v3135 = vadd.f32 %v2836, %v3134
    %v3136 = vpop.f32.mrb[0].mxu0
    %v3137 = vpop.f32.mrb[0].mxu0
    %3138 = vdwg.mxu0
    %3139 = vmatprep.subr.bf16.mxu0 %v2956
    %3140 = vmatpush1.bf16.msra.mxu0 %v2955
    %3141 = vmatprep.subr.bf16.mxu0 %v2964
    %3142 = vmatpush1.bf16.msra.mxu0 %v2963
    %3143 = vmatprep.subr.bf16.mxu0 %v2972
    %3144 = vmatpush1.bf16.msra.mxu0 %v2971
    %3145 = vmatprep.subr.bf16.mxu0 %v2980
    %3146 = vmatpush1.bf16.msra.mxu0 %v2979
    %3147 = vmatprep.subr.bf16.mxu0 0
    %3148 = vmatpush1.bf16.msra.mxu0 0
    %3149 = vmatprep.subr.bf16.mxu0 0
    %3150 = vmatpush1.bf16.msra.mxu0 0
    %3151 = vmatprep.subr.bf16.mxu0 0
    %3152 = vmatpush1.bf16.msra.mxu0 0
    %3153 = vmatprep.subr.bf16.mxu0 0
    %3154 = vmatpush1.bf16.msra.mxu0 0
    %3155 = vmatprep.subr.bf16.mxu0 0
    %3156 = vmatpush1.bf16.msra.mxu0 0
    %3157 = vmatprep.subr.bf16.mxu0 0
    %3158 = vmatpush1.bf16.msra.mxu0 0
    %3159 = vmatprep.subr.bf16.mxu0 0
    %3160 = vmatpush1.bf16.msra.mxu0 0
    %3161 = vmatprep.subr.bf16.mxu0 0
    %3162 = vmatpush1.bf16.msra.mxu0 0
    %3163 = vmatprep.subr.bf16.mxu0 0
    %3164 = vmatpush1.bf16.msra.mxu0 0
    %3165 = vmatprep.subr.bf16.mxu0 0
    %3166 = vmatpush1.bf16.msra.mxu0 0
    %3167 = vmatprep.subr.bf16.mxu0 0
    %3168 = vmatpush1.bf16.msra.mxu0 0
    %3169 = vmatprep.subr.bf16.mxu0 0
    %3170 = vmatpush1.bf16.msra.mxu0 0
    %3171 = vmatprep.mubr.bf16.mxu0 0
    %3172 = vmatmul.mubr.bf16.gmra.mrb[0].mxu0 %v3014
    %v3173 = vpop.f32.mrb[0].mxu0
    %v3174 = vadd.f32 %v2840, %v3173
    %v3175 = vpop.f32.mrb[0].mxu0
    %v3176 = vadd.f32 %v2844, %v3175
    %v3177 = vpop.f32.mrb[0].mxu0
    %v3178 = vpop.f32.mrb[0].mxu0
    %3179 = vdwg.mxu0
    %v3180 = vmax.f32 %v3051, 0.0
    %v3181 = vmax.f32 %v3053, 0.0
    %v3182 = vmax.f32 %v3092, 0.0
    %v3183 = vmax.f32 %v3094, 0.0
    %v3184 = vmax.f32 %v3133, 0.0
    %v3185 = vmax.f32 %v3135, 0.0
    %v3186 = vmax.f32 %v3174, 0.0
    %v3187 = vmax.f32 %v3176, 0.0
    %v3188 = vpack.c.bf16 %v3180, %v3180
    %v3189 = vpack.c.bf16 %v3181, %v3181
    %v3190 = vpack.c.bf16 %v3182, %v3182
    %v3191 = vpack.c.bf16 %v3183, %v3183
    %v3192 = vpack.c.bf16 %v3184, %v3184
    %v3193 = vpack.c.bf16 %v3185, %v3185
    %v3194 = vpack.c.bf16 %v3186, %v3186
    %v3195 = vpack.c.bf16 %v3187, %v3187
    %v3196 = vld [vmem:[#allocation14] sm:$0xf]
    %v3197 = vld [vmem:[#allocation14 + $0x4] sm:$0xf]
    %v3198 = vld [vmem:[#allocation14 + $0x8] sm:$0xf]
    %v3199 = vld [vmem:[#allocation14 + $0xc] sm:$0xf]
    %v3200 = vld [vmem:[#allocation14 + $0x10] sm:$0xf]
    %v3201 = vld [vmem:[#allocation14 + $0x14] sm:$0xf]
    %v3202 = vld [vmem:[#allocation14 + $0x18] sm:$0xf]
    %v3203 = vld [vmem:[#allocation14 + $0x1c] sm:$0xf]
    %v3204 = vld [vmem:[#allocation14 + $0x20] sm:$0xf]
    %v3205 = vld [vmem:[#allocation14 + $0x24] sm:$0xf]
    %v3206 = vld [vmem:[#allocation14 + $0x28] sm:$0xf]
    %v3207 = vld [vmem:[#allocation14 + $0x2c] sm:$0xf]
    %v3208 = vld [vmem:[#allocation14 + $0x30] sm:$0xf]
    %v3209 = vld [vmem:[#allocation14 + $0x34] sm:$0xf]
    %v3210 = vld [vmem:[#allocation14 + $0x38] sm:$0xf]
    %v3211 = vld [vmem:[#allocation14 + $0x3c] sm:$0xf]
    %v3212 = vld [vmem:[#allocation14 + $0x40] sm:$0xf]
    %v3213 = vld [vmem:[#allocation14 + $0x44] sm:$0xf]
    %v3214 = vld [vmem:[#allocation14 + $0x48] sm:$0xf]
    %v3215 = vld [vmem:[#allocation14 + $0x4c] sm:$0xf]
    %v3216 = vld [vmem:[#allocation14 + $0x50] sm:$0xf]
    %v3217 = vld [vmem:[#allocation14 + $0x54] sm:$0xf]
    %v3218 = vld [vmem:[#allocation14 + $0x58] sm:$0xf]
    %v3219 = vld [vmem:[#allocation14 + $0x5c] sm:$0xf]
    %v3220 = vld [vmem:[#allocation14 + $0x60] sm:$0xf]
    %v3221 = vld [vmem:[#allocation14 + $0x64] sm:$0xf]
    %v3222 = vld [vmem:[#allocation14 + $0x68] sm:$0xf]
    %v3223 = vld [vmem:[#allocation14 + $0x6c] sm:$0xf]
    %v3224 = vld [vmem:[#allocation14 + $0x70] sm:$0xf]
    %v3225 = vld [vmem:[#allocation14 + $0x74] sm:$0xf]
    %v3226 = vld [vmem:[#allocation14 + $0x78] sm:$0xf]
    %v3227 = vld [vmem:[#allocation14 + $0x7c] sm:$0xf]
    %v3228 = vld [vmem:[#allocation14 + $0x80] sm:$0xf]
    %v3229 = vld [vmem:[#allocation14 + $0x84] sm:$0xf]
    %v3230 = vld [vmem:[#allocation14 + $0x88] sm:$0xf]
    %v3231 = vld [vmem:[#allocation14 + $0x8c] sm:$0xf]
    %v3232 = vld [vmem:[#allocation14 + $0x90] sm:$0xf]
    %v3233 = vld [vmem:[#allocation14 + $0x94] sm:$0xf]
    %v3234 = vld [vmem:[#allocation14 + $0x98] sm:$0xf]
    %v3235 = vld [vmem:[#allocation14 + $0x9c] sm:$0xf]
    %v3236 = vld [vmem:[#allocation14 + $0xa0] sm:$0xf]
    %v3237 = vld [vmem:[#allocation14 + $0xa4] sm:$0xf]
    %v3238 = vld [vmem:[#allocation14 + $0xa8] sm:$0xf]
    %v3239 = vld [vmem:[#allocation14 + $0xac] sm:$0xf]
    %v3240 = vld [vmem:[#allocation14 + $0xb0] sm:$0xf]
    %v3241 = vld [vmem:[#allocation14 + $0xb4] sm:$0xf]
    %v3242 = vld [vmem:[#allocation14 + $0xb8] sm:$0xf]
    %v3243 = vld [vmem:[#allocation14 + $0xbc] sm:$0xf]
    %v3244 = vld [vmem:[#allocation14 + $0xc0] sm:$0xf]
    %v3245 = vld [vmem:[#allocation14 + $0xc4] sm:$0xf]
    %v3246 = vld [vmem:[#allocation14 + $0xc8] sm:$0xf]
    %v3247 = vld [vmem:[#allocation14 + $0xcc] sm:$0xf]
    %v3248 = vld [vmem:[#allocation14 + $0xd0] sm:$0xf]
    %v3249 = vld [vmem:[#allocation14 + $0xd4] sm:$0xf]
    %v3250 = vld [vmem:[#allocation14 + $0xd8] sm:$0xf]
    %v3251 = vld [vmem:[#allocation14 + $0xdc] sm:$0xf]
    %v3252 = vld [vmem:[#allocation14 + $0xe0] sm:$0xf]
    %v3253 = vld [vmem:[#allocation14 + $0xe4] sm:$0xf]
    %v3254 = vld [vmem:[#allocation14 + $0xe8] sm:$0xf]
    %v3255 = vld [vmem:[#allocation14 + $0xec] sm:$0xf]
    %v3256 = vld [vmem:[#allocation14 + $0xf0] sm:$0xf]
    %v3257 = vld [vmem:[#allocation14 + $0xf4] sm:$0xf]
    %v3258 = vld [vmem:[#allocation14 + $0xf8] sm:$0xf]
    %v3259 = vld [vmem:[#allocation14 + $0xfc] sm:$0xf]
    %v3260 = vld [vmem:[#allocation14 + $0x100] sm:$0xf]
    %v3261 = vld [vmem:[#allocation14 + $0x104] sm:$0xf]
    %v3262 = vld [vmem:[#allocation14 + $0x108] sm:$0xf]
    %v3263 = vld [vmem:[#allocation14 + $0x10c] sm:$0xf]
    %v3264 = vld [vmem:[#allocation14 + $0x110] sm:$0xf]
    %v3265 = vld [vmem:[#allocation14 + $0x114] sm:$0xf]
    %v3266 = vld [vmem:[#allocation14 + $0x118] sm:$0xf]
    %v3267 = vld [vmem:[#allocation14 + $0x11c] sm:$0xf]
    %v3268 = vld [vmem:[#allocation14 + $0x120] sm:$0xf]
    %v3269 = vld [vmem:[#allocation14 + $0x124] sm:$0xf]
    %v3270 = vld [vmem:[#allocation14 + $0x128] sm:$0xf]
    %v3271 = vld [vmem:[#allocation14 + $0x12c] sm:$0xf]
    %v3272 = vld [vmem:[#allocation14 + $0x130] sm:$0xf]
    %v3273 = vld [vmem:[#allocation14 + $0x134] sm:$0xf]
    %v3274 = vld [vmem:[#allocation14 + $0x138] sm:$0xf]
    %v3275 = vld [vmem:[#allocation14 + $0x13c] sm:$0xf]
    %v3276 = vld [vmem:[#allocation14 + $0x140] sm:$0xf]
    %v3277 = vld [vmem:[#allocation14 + $0x144] sm:$0xf]
    %v3278 = vld [vmem:[#allocation14 + $0x148] sm:$0xf]
    %v3279 = vld [vmem:[#allocation14 + $0x14c] sm:$0xf]
    %v3280 = vld [vmem:[#allocation14 + $0x150] sm:$0xf]
    %v3281 = vld [vmem:[#allocation14 + $0x154] sm:$0xf]
    %v3282 = vld [vmem:[#allocation14 + $0x158] sm:$0xf]
    %v3283 = vld [vmem:[#allocation14 + $0x15c] sm:$0xf]
    %v3284 = vld [vmem:[#allocation14 + $0x160] sm:$0xf]
    %v3285 = vld [vmem:[#allocation14 + $0x164] sm:$0xf]
    %v3286 = vld [vmem:[#allocation14 + $0x168] sm:$0xf]
    %v3287 = vld [vmem:[#allocation14 + $0x16c] sm:$0xf]
    %v3288 = vld [vmem:[#allocation14 + $0x170] sm:$0xf]
    %v3289 = vld [vmem:[#allocation14 + $0x174] sm:$0xf]
    %v3290 = vld [vmem:[#allocation14 + $0x178] sm:$0xf]
    %v3291 = vld [vmem:[#allocation14 + $0x17c] sm:$0xf]
    %v3292 = vld [vmem:[#allocation14 + $0x180] sm:$0xf]
    %v3293 = vld [vmem:[#allocation14 + $0x184] sm:$0xf]
    %v3294 = vld [vmem:[#allocation14 + $0x188] sm:$0xf]
    %v3295 = vld [vmem:[#allocation14 + $0x18c] sm:$0xf]
    %v3296 = vld [vmem:[#allocation14 + $0x190] sm:$0xf]
    %v3297 = vld [vmem:[#allocation14 + $0x194] sm:$0xf]
    %v3298 = vld [vmem:[#allocation14 + $0x198] sm:$0xf]
    %v3299 = vld [vmem:[#allocation14 + $0x19c] sm:$0xf]
    %v3300 = vld [vmem:[#allocation14 + $0x1a0] sm:$0xf]
    %v3301 = vld [vmem:[#allocation14 + $0x1a4] sm:$0xf]
    %v3302 = vld [vmem:[#allocation14 + $0x1a8] sm:$0xf]
    %v3303 = vld [vmem:[#allocation14 + $0x1ac] sm:$0xf]
    %v3304 = vld [vmem:[#allocation14 + $0x1b0] sm:$0xf]
    %v3305 = vld [vmem:[#allocation14 + $0x1b4] sm:$0xf]
    %v3306 = vld [vmem:[#allocation14 + $0x1b8] sm:$0xf]
    %v3307 = vld [vmem:[#allocation14 + $0x1bc] sm:$0xf]
    %v3308 = vld [vmem:[#allocation14 + $0x1c0] sm:$0xf]
    %v3309 = vld [vmem:[#allocation14 + $0x1c4] sm:$0xf]
    %v3310 = vld [vmem:[#allocation14 + $0x1c8] sm:$0xf]
    %v3311 = vld [vmem:[#allocation14 + $0x1cc] sm:$0xf]
    %v3312 = vld [vmem:[#allocation14 + $0x1d0] sm:$0xf]
    %v3313 = vld [vmem:[#allocation14 + $0x1d4] sm:$0xf]
    %v3314 = vld [vmem:[#allocation14 + $0x1d8] sm:$0xf]
    %v3315 = vld [vmem:[#allocation14 + $0x1dc] sm:$0xf]
    %v3316 = vld [vmem:[#allocation14 + $0x1e0] sm:$0xf]
    %v3317 = vld [vmem:[#allocation14 + $0x1e4] sm:$0xf]
    %v3318 = vld [vmem:[#allocation14 + $0x1e8] sm:$0xf]
    %v3319 = vld [vmem:[#allocation14 + $0x1ec] sm:$0xf]
    %v3320 = vld [vmem:[#allocation14 + $0x1f0] sm:$0xf]
    %v3321 = vld [vmem:[#allocation14 + $0x1f4] sm:$0xf]
    %v3322 = vld [vmem:[#allocation14 + $0x1f8] sm:$0xf]
    %v3323 = vld [vmem:[#allocation14 + $0x1fc] sm:$0xf]
    %v3324 = vld [vmem:[#allocation16] sm:$0x1]
    %v3326 = vlaneseq
    %v3327 = vshrl.u32 %v3326, 7
    %v3328 = vsub.s32 0, %v3327
    %v3329 = vrot.slane %v3324, %v3328
    %v3459 = vunpack.c.l.b16 %v3196
    %v3460 = vunpack.c.l.b16 %v3197
    %v3461 = vunpack.c.l.b16 %v3198
    %v3462 = vunpack.c.l.b16 %v3199
    %v3463 = vunpack.c.l.b16 %v3200
    %v3464 = vunpack.c.l.b16 %v3201
    %v3465 = vunpack.c.l.b16 %v3202
    %v3466 = vunpack.c.l.b16 %v3203
    %v3467 = vunpack.c.l.b16 %v3204
    %v3468 = vunpack.c.l.b16 %v3205
    %v3469 = vunpack.c.l.b16 %v3206
    %v3470 = vunpack.c.l.b16 %v3207
    %v3471 = vunpack.c.l.b16 %v3208
    %v3472 = vunpack.c.l.b16 %v3209
    %v3473 = vunpack.c.l.b16 %v3210
    %v3474 = vunpack.c.l.b16 %v3211
    %v3475 = vunpack.c.l.b16 %v3212
    %v3476 = vunpack.c.l.b16 %v3213
    %v3477 = vunpack.c.l.b16 %v3214
    %v3478 = vunpack.c.l.b16 %v3215
    %v3479 = vunpack.c.l.b16 %v3216
    %v3480 = vunpack.c.l.b16 %v3217
    %v3481 = vunpack.c.l.b16 %v3218
    %v3482 = vunpack.c.l.b16 %v3219
    %v3483 = vunpack.c.l.b16 %v3220
    %v3484 = vunpack.c.l.b16 %v3221
    %v3485 = vunpack.c.l.b16 %v3222
    %v3486 = vunpack.c.l.b16 %v3223
    %v3487 = vunpack.c.l.b16 %v3224
    %v3488 = vunpack.c.l.b16 %v3225
    %v3489 = vunpack.c.l.b16 %v3226
    %v3490 = vunpack.c.l.b16 %v3227
    %v3491 = vunpack.c.l.b16 %v3228
    %v3492 = vunpack.c.l.b16 %v3229
    %v3493 = vunpack.c.l.b16 %v3230
    %v3494 = vunpack.c.l.b16 %v3231
    %v3495 = vunpack.c.l.b16 %v3232
    %v3496 = vunpack.c.l.b16 %v3233
    %v3497 = vunpack.c.l.b16 %v3234
    %v3498 = vunpack.c.l.b16 %v3235
    %v3499 = vunpack.c.l.b16 %v3236
    %v3500 = vunpack.c.l.b16 %v3237
    %v3501 = vunpack.c.l.b16 %v3238
    %v3502 = vunpack.c.l.b16 %v3239
    %v3503 = vunpack.c.l.b16 %v3240
    %v3504 = vunpack.c.l.b16 %v3241
    %v3505 = vunpack.c.l.b16 %v3242
    %v3506 = vunpack.c.l.b16 %v3243
    %v3507 = vunpack.c.l.b16 %v3244
    %v3508 = vunpack.c.l.b16 %v3245
    %v3509 = vunpack.c.l.b16 %v3246
    %v3510 = vunpack.c.l.b16 %v3247
    %v3511 = vunpack.c.l.b16 %v3248
    %v3512 = vunpack.c.l.b16 %v3249
    %v3513 = vunpack.c.l.b16 %v3250
    %v3514 = vunpack.c.l.b16 %v3251
    %v3515 = vunpack.c.l.b16 %v3252
    %v3516 = vunpack.c.l.b16 %v3253
    %v3517 = vunpack.c.l.b16 %v3254
    %v3518 = vunpack.c.l.b16 %v3255
    %v3519 = vunpack.c.l.b16 %v3256
    %v3520 = vunpack.c.l.b16 %v3257
    %v3521 = vunpack.c.l.b16 %v3258
    %v3522 = vunpack.c.l.b16 %v3259
    %v3523 = vunpack.c.l.b16 %v3260
    %v3524 = vunpack.c.l.b16 %v3261
    %v3525 = vunpack.c.l.b16 %v3262
    %v3526 = vunpack.c.l.b16 %v3263
    %v3527 = vunpack.c.l.b16 %v3264
    %v3528 = vunpack.c.l.b16 %v3265
    %v3529 = vunpack.c.l.b16 %v3266
    %v3530 = vunpack.c.l.b16 %v3267
    %v3531 = vunpack.c.l.b16 %v3268
    %v3532 = vunpack.c.l.b16 %v3269
    %v3533 = vunpack.c.l.b16 %v3270
    %v3534 = vunpack.c.l.b16 %v3271
    %v3535 = vunpack.c.l.b16 %v3272
    %v3536 = vunpack.c.l.b16 %v3273
    %v3537 = vunpack.c.l.b16 %v3274
    %v3538 = vunpack.c.l.b16 %v3275
    %v3539 = vunpack.c.l.b16 %v3276
    %v3540 = vunpack.c.l.b16 %v3277
    %v3541 = vunpack.c.l.b16 %v3278
    %v3542 = vunpack.c.l.b16 %v3279
    %v3543 = vunpack.c.l.b16 %v3280
    %v3544 = vunpack.c.l.b16 %v3281
    %v3545 = vunpack.c.l.b16 %v3282
    %v3546 = vunpack.c.l.b16 %v3283
    %v3547 = vunpack.c.l.b16 %v3284
    %v3548 = vunpack.c.l.b16 %v3285
    %v3549 = vunpack.c.l.b16 %v3286
    %v3550 = vunpack.c.l.b16 %v3287
    %v3551 = vunpack.c.l.b16 %v3288
    %v3552 = vunpack.c.l.b16 %v3289
    %v3553 = vunpack.c.l.b16 %v3290
    %v3554 = vunpack.c.l.b16 %v3291
    %v3555 = vunpack.c.l.b16 %v3292
    %v3556 = vunpack.c.l.b16 %v3293
    %v3557 = vunpack.c.l.b16 %v3294
    %v3558 = vunpack.c.l.b16 %v3295
    %v3559 = vunpack.c.l.b16 %v3296
    %v3560 = vunpack.c.l.b16 %v3297
    %v3561 = vunpack.c.l.b16 %v3298
    %v3562 = vunpack.c.l.b16 %v3299
    %v3563 = vunpack.c.l.b16 %v3300
    %v3564 = vunpack.c.l.b16 %v3301
    %v3565 = vunpack.c.l.b16 %v3302
    %v3566 = vunpack.c.l.b16 %v3303
    %v3567 = vunpack.c.l.b16 %v3304
    %v3568 = vunpack.c.l.b16 %v3305
    %v3569 = vunpack.c.l.b16 %v3306
    %v3570 = vunpack.c.l.b16 %v3307
    %v3571 = vunpack.c.l.b16 %v3308
    %v3572 = vunpack.c.l.b16 %v3309
    %v3573 = vunpack.c.l.b16 %v3310
    %v3574 = vunpack.c.l.b16 %v3311
    %v3575 = vunpack.c.l.b16 %v3312
    %v3576 = vunpack.c.l.b16 %v3313
    %v3577 = vunpack.c.l.b16 %v3314
    %v3578 = vunpack.c.l.b16 %v3315
    %v3579 = vunpack.c.l.b16 %v3316
    %v3580 = vunpack.c.l.b16 %v3317
    %v3581 = vunpack.c.l.b16 %v3318
    %v3582 = vunpack.c.l.b16 %v3319
    %v3583 = vunpack.c.l.b16 %v3320
    %v3584 = vunpack.c.l.b16 %v3321
    %v3585 = vunpack.c.l.b16 %v3322
    %v3586 = vunpack.c.l.b16 %v3323
    %v3587 = vpack.c.b16 %v3460, %v3459
    %v3588 = vpack.c.b16 %v3462, %v3461
    %v3589 = vpack.c.b16 %v3464, %v3463
    %v3590 = vpack.c.b16 %v3466, %v3465
    %v3591 = vpack.c.b16 %v3468, %v3467
    %v3592 = vpack.c.b16 %v3470, %v3469
    %v3593 = vpack.c.b16 %v3472, %v3471
    %v3594 = vpack.c.b16 %v3474, %v3473
    %v3595 = vpack.c.b16 %v3476, %v3475
    %v3596 = vpack.c.b16 %v3478, %v3477
    %v3597 = vpack.c.b16 %v3480, %v3479
    %v3598 = vpack.c.b16 %v3482, %v3481
    %v3599 = vpack.c.b16 %v3484, %v3483
    %v3600 = vpack.c.b16 %v3486, %v3485
    %v3601 = vpack.c.b16 %v3488, %v3487
    %v3602 = vpack.c.b16 %v3490, %v3489
    %v3603 = vpack.c.b16 %v3492, %v3491
    %v3604 = vpack.c.b16 %v3494, %v3493
    %v3605 = vpack.c.b16 %v3496, %v3495
    %v3606 = vpack.c.b16 %v3498, %v3497
    %v3607 = vpack.c.b16 %v3500, %v3499
    %v3608 = vpack.c.b16 %v3502, %v3501
    %v3609 = vpack.c.b16 %v3504, %v3503
    %v3610 = vpack.c.b16 %v3506, %v3505
    %v3611 = vpack.c.b16 %v3508, %v3507
    %v3612 = vpack.c.b16 %v3510, %v3509
    %v3613 = vpack.c.b16 %v3512, %v3511
    %v3614 = vpack.c.b16 %v3514, %v3513
    %v3615 = vpack.c.b16 %v3516, %v3515
    %v3616 = vpack.c.b16 %v3518, %v3517
    %v3617 = vpack.c.b16 %v3520, %v3519
    %v3618 = vpack.c.b16 %v3522, %v3521
    %v3619 = vpack.c.b16 %v3524, %v3523
    %v3620 = vpack.c.b16 %v3526, %v3525
    %v3621 = vpack.c.b16 %v3528, %v3527
    %v3622 = vpack.c.b16 %v3530, %v3529
    %v3623 = vpack.c.b16 %v3532, %v3531
    %v3624 = vpack.c.b16 %v3534, %v3533
    %v3625 = vpack.c.b16 %v3536, %v3535
    %v3626 = vpack.c.b16 %v3538, %v3537
    %v3627 = vpack.c.b16 %v3540, %v3539
    %v3628 = vpack.c.b16 %v3542, %v3541
    %v3629 = vpack.c.b16 %v3544, %v3543
    %v3630 = vpack.c.b16 %v3546, %v3545
    %v3631 = vpack.c.b16 %v3548, %v3547
    %v3632 = vpack.c.b16 %v3550, %v3549
    %v3633 = vpack.c.b16 %v3552, %v3551
    %v3634 = vpack.c.b16 %v3554, %v3553
    %v3635 = vpack.c.b16 %v3556, %v3555
    %v3636 = vpack.c.b16 %v3558, %v3557
    %v3637 = vpack.c.b16 %v3560, %v3559
    %v3638 = vpack.c.b16 %v3562, %v3561
    %v3639 = vpack.c.b16 %v3564, %v3563
    %v3640 = vpack.c.b16 %v3566, %v3565
    %v3641 = vpack.c.b16 %v3568, %v3567
    %v3642 = vpack.c.b16 %v3570, %v3569
    %v3643 = vpack.c.b16 %v3572, %v3571
    %v3644 = vpack.c.b16 %v3574, %v3573
    %v3645 = vpack.c.b16 %v3576, %v3575
    %v3646 = vpack.c.b16 %v3578, %v3577
    %v3647 = vpack.c.b16 %v3580, %v3579
    %v3648 = vpack.c.b16 %v3582, %v3581
    %v3649 = vpack.c.b16 %v3584, %v3583
    %v3650 = vpack.c.b16 %v3586, %v3585
    %3715 = vmatprep.subr.bf16.mxu0 0
    %3716 = vmatpush1.bf16.msra.mxu0 %v3587
    %3717 = vmatprep.subr.bf16.mxu0 0
    %3718 = vmatpush1.bf16.msra.mxu0 %v3588
    %3719 = vmatprep.subr.bf16.mxu0 0
    %3720 = vmatpush1.bf16.msra.mxu0 %v3589
    %3721 = vmatprep.subr.bf16.mxu0 0
    %3722 = vmatpush1.bf16.msra.mxu0 %v3590
    %3723 = vmatprep.subr.bf16.mxu0 0
    %3724 = vmatpush1.bf16.msra.mxu0 %v3591
    %3725 = vmatprep.subr.bf16.mxu0 0
    %3726 = vmatpush1.bf16.msra.mxu0 %v3592
    %3727 = vmatprep.subr.bf16.mxu0 0
    %3728 = vmatpush1.bf16.msra.mxu0 %v3593
    %3729 = vmatprep.subr.bf16.mxu0 0
    %3730 = vmatpush1.bf16.msra.mxu0 %v3594
    %3731 = vmatprep.subr.bf16.mxu0 0
    %3732 = vmatpush1.bf16.msra.mxu0 %v3595
    %3733 = vmatprep.subr.bf16.mxu0 0
    %3734 = vmatpush1.bf16.msra.mxu0 %v3596
    %3735 = vmatprep.subr.bf16.mxu0 0
    %3736 = vmatpush1.bf16.msra.mxu0 %v3597
    %3737 = vmatprep.subr.bf16.mxu0 0
    %3738 = vmatpush1.bf16.msra.mxu0 %v3598
    %3739 = vmatprep.subr.bf16.mxu0 0
    %3740 = vmatpush1.bf16.msra.mxu0 %v3599
    %3741 = vmatprep.subr.bf16.mxu0 0
    %3742 = vmatpush1.bf16.msra.mxu0 %v3600
    %3743 = vmatprep.subr.bf16.mxu0 0
    %3744 = vmatpush1.bf16.msra.mxu0 %v3601
    %3745 = vmatprep.subr.bf16.mxu0 0
    %3746 = vmatpush1.bf16.msra.mxu0 %v3602
    %3747 = vmatprep.mubr.bf16.mxu0 %v3189
    %3748 = vmatmul.mubr.bf16.gmra.mrb[0].mxu0 %v3188
    %v3749 = vpop.f32.mrb[0].mxu0
    %v3750 = vadd.f32 %v3329, %v3749
    %v3751 = vpop.f32.mrb[0].mxu0
    %v3752 = vpop.f32.mrb[0].mxu0
    %v3753 = vpop.f32.mrb[0].mxu0
    %3754 = vdwg.mxu0
    %3755 = vmatprep.subr.bf16.mxu0 0
    %3756 = vmatpush1.bf16.msra.mxu0 %v3603
    %3757 = vmatprep.subr.bf16.mxu0 0
    %3758 = vmatpush1.bf16.msra.mxu0 %v3604
    %3759 = vmatprep.subr.bf16.mxu0 0
    %3760 = vmatpush1.bf16.msra.mxu0 %v3605
    %3761 = vmatprep.subr.bf16.mxu0 0
    %3762 = vmatpush1.bf16.msra.mxu0 %v3606
    %3763 = vmatprep.subr.bf16.mxu0 0
    %3764 = vmatpush1.bf16.msra.mxu0 %v3607
    %3765 = vmatprep.subr.bf16.mxu0 0
    %3766 = vmatpush1.bf16.msra.mxu0 %v3608
    %3767 = vmatprep.subr.bf16.mxu0 0
    %3768 = vmatpush1.bf16.msra.mxu0 %v3609
    %3769 = vmatprep.subr.bf16.mxu0 0
    %3770 = vmatpush1.bf16.msra.mxu0 %v3610
    %3771 = vmatprep.subr.bf16.mxu0 0
    %3772 = vmatpush1.bf16.msra.mxu0 %v3611
    %3773 = vmatprep.subr.bf16.mxu0 0
    %3774 = vmatpush1.bf16.msra.mxu0 %v3612
    %3775 = vmatprep.subr.bf16.mxu0 0
    %3776 = vmatpush1.bf16.msra.mxu0 %v3613
    %3777 = vmatprep.subr.bf16.mxu0 0
    %3778 = vmatpush1.bf16.msra.mxu0 %v3614
    %3779 = vmatprep.subr.bf16.mxu0 0
    %3780 = vmatpush1.bf16.msra.mxu0 %v3615
    %3781 = vmatprep.subr.bf16.mxu0 0
    %3782 = vmatpush1.bf16.msra.mxu0 %v3616
    %3783 = vmatprep.subr.bf16.mxu0 0
    %3784 = vmatpush1.bf16.msra.mxu0 %v3617
    %3785 = vmatprep.subr.bf16.mxu0 0
    %3786 = vmatpush1.bf16.msra.mxu0 %v3618
    %3787 = vmatprep.mubr.bf16.mxu0 %v3191
    %3788 = vmatmul.mubr.bf16.gmra.mrb[0].mxu0 %v3190
    %v3789 = vpop.f32.mrb[0].mxu0
    %v3790 = vadd.f32 %v3750, %v3789
    %v3791 = vpop.f32.mrb[0].mxu0
    %v3792 = vpop.f32.mrb[0].mxu0
    %v3793 = vpop.f32.mrb[0].mxu0
    %3794 = vdwg.mxu0
    %3795 = vmatprep.subr.bf16.mxu0 0
    %3796 = vmatpush1.bf16.msra.mxu0 %v3619
    %3797 = vmatprep.subr.bf16.mxu0 0
    %3798 = vmatpush1.bf16.msra.mxu0 %v3620
    %3799 = vmatprep.subr.bf16.mxu0 0
    %3800 = vmatpush1.bf16.msra.mxu0 %v3621
    %3801 = vmatprep.subr.bf16.mxu0 0
    %3802 = vmatpush1.bf16.msra.mxu0 %v3622
    %3803 = vmatprep.subr.bf16.mxu0 0
    %3804 = vmatpush1.bf16.msra.mxu0 %v3623
    %3805 = vmatprep.subr.bf16.mxu0 0
    %3806 = vmatpush1.bf16.msra.mxu0 %v3624
    %3807 = vmatprep.subr.bf16.mxu0 0
    %3808 = vmatpush1.bf16.msra.mxu0 %v3625
    %3809 = vmatprep.subr.bf16.mxu0 0
    %3810 = vmatpush1.bf16.msra.mxu0 %v3626
    %3811 = vmatprep.subr.bf16.mxu0 0
    %3812 = vmatpush1.bf16.msra.mxu0 %v3627
    %3813 = vmatprep.subr.bf16.mxu0 0
    %3814 = vmatpush1.bf16.msra.mxu0 %v3628
    %3815 = vmatprep.subr.bf16.mxu0 0
    %3816 = vmatpush1.bf16.msra.mxu0 %v3629
    %3817 = vmatprep.subr.bf16.mxu0 0
    %3818 = vmatpush1.bf16.msra.mxu0 %v3630
    %3819 = vmatprep.subr.bf16.mxu0 0
    %3820 = vmatpush1.bf16.msra.mxu0 %v3631
    %3821 = vmatprep.subr.bf16.mxu0 0
    %3822 = vmatpush1.bf16.msra.mxu0 %v3632
    %3823 = vmatprep.subr.bf16.mxu0 0
    %3824 = vmatpush1.bf16.msra.mxu0 %v3633
    %3825 = vmatprep.subr.bf16.mxu0 0
    %3826 = vmatpush1.bf16.msra.mxu0 %v3634
    %3827 = vmatprep.mubr.bf16.mxu0 %v3193
    %3828 = vmatmul.mubr.bf16.gmra.mrb[0].mxu0 %v3192
    %v3829 = vpop.f32.mrb[0].mxu0
    %v3830 = vadd.f32 %v3790, %v3829
    %v3831 = vpop.f32.mrb[0].mxu0
    %v3832 = vpop.f32.mrb[0].mxu0
    %v3833 = vpop.f32.mrb[0].mxu0
    %3834 = vdwg.mxu0
    %3835 = vmatprep.subr.bf16.mxu0 0
    %3836 = vmatpush1.bf16.msra.mxu0 %v3635
    %3837 = vmatprep.subr.bf16.mxu0 0
    %3838 = vmatpush1.bf16.msra.mxu0 %v3636
    %3839 = vmatprep.subr.bf16.mxu0 0
    %3840 = vmatpush1.bf16.msra.mxu0 %v3637
    %3841 = vmatprep.subr.bf16.mxu0 0
    %3842 = vmatpush1.bf16.msra.mxu0 %v3638
    %3843 = vmatprep.subr.bf16.mxu0 0
    %3844 = vmatpush1.bf16.msra.mxu0 %v3639
    %3845 = vmatprep.subr.bf16.mxu0 0
    %3846 = vmatpush1.bf16.msra.mxu0 %v3640
    %3847 = vmatprep.subr.bf16.mxu0 0
    %3848 = vmatpush1.bf16.msra.mxu0 %v3641
    %3849 = vmatprep.subr.bf16.mxu0 0
    %3850 = vmatpush1.bf16.msra.mxu0 %v3642
    %3851 = vmatprep.subr.bf16.mxu0 0
    %3852 = vmatpush1.bf16.msra.mxu0 %v3643
    %3853 = vmatprep.subr.bf16.mxu0 0
    %3854 = vmatpush1.bf16.msra.mxu0 %v3644
    %3855 = vmatprep.subr.bf16.mxu0 0
    %3856 = vmatpush1.bf16.msra.mxu0 %v3645
    %3857 = vmatprep.subr.bf16.mxu0 0
    %3858 = vmatpush1.bf16.msra.mxu0 %v3646
    %3859 = vmatprep.subr.bf16.mxu0 0
    %3860 = vmatpush1.bf16.msra.mxu0 %v3647
    %3861 = vmatprep.subr.bf16.mxu0 0
    %3862 = vmatpush1.bf16.msra.mxu0 %v3648
    %3863 = vmatprep.subr.bf16.mxu0 0
    %3864 = vmatpush1.bf16.msra.mxu0 %v3649
    %3865 = vmatprep.subr.bf16.mxu0 0
    %3866 = vmatpush1.bf16.msra.mxu0 %v3650
    %3867 = vmatprep.mubr.bf16.mxu0 %v3195
    %3868 = vmatmul.mubr.bf16.gmra.mrb[0].mxu0 %v3194
    %v3869 = vpop.f32.mrb[0].mxu0
    %v3870 = vadd.f32 %v3830, %v3869
    %v3871 = vpop.f32.mrb[0].mxu0
    %v3872 = vpop.f32.mrb[0].mxu0
    %v3873 = vpop.f32.mrb[0].mxu0
    %3874 = vdwg.mxu0
    %3875 = vst [vmem:[#allocation17] sm:$0x3] %v3870
    // Predicated region
    $region74: #{actor_critic_cnn_forward.3} parent=1 // pred_check
      _
    $region75: #{actor_critic_cnn_forward.3} parent=1 // pred_check_branch
      %3877 = sbr.rel (0) target = $region77
    $region76: #{actor_critic_cnn_forward.3} parent=1 // pred_region
      %s3879 = ssub.s32 32, 32
      %3880 = vsyncadd [#allocation4], %s3879
      %s3882 = sshll.u32 [#allocation17], 4
      %s3883 = int_to_ptr.vmem [resolvable:$true] %s3882
      %3885 = dma.vmem_to_hbm [thread:$0]  %s3883, 32, %s9, [#allocation4]
    $region77: #{actor_critic_cnn_forward.3} parent=1 // pred_fallthru
      _
    // Predicated region
    $region78: #{actor_critic_cnn_forward.3} parent=1 // pred_check
      _
    $region79: #{actor_critic_cnn_forward.3} parent=1 // pred_check_branch
      %3887 = sbr.rel (0) target = $region81
    $region80: #{actor_critic_cnn_forward.3} parent=1 // pred_region
      %3888 = dma.done [#allocation4], 32
    $region81: #{actor_critic_cnn_forward.3} parent=1 // pred_fallthru
      _
    %3889 = vsyncpa [#allocation3], 1
    %3890 = vsyncpa [#allocation6], 1
    %3891 = vsyncpa [#allocation9], 1
    %3892 = vsyncpa [#allocation12], 1
    %3893 = vsyncpa [#allocation15], 1
    %3894 = vsyncpa [#allocation4], 1

</llo_original>
